<compile_context>
chip_gen: v7x
topology: tpu7x:2x2x1
jax: 0.10.0
libtpu: 0.0.40
codegen_flags: <defaults>
</compile_context>

<pallas_src>
import functools

import jax
import jax.numpy as jnp
import numpy as np
from jax.experimental import pallas as pl
from jax.experimental.pallas import tpu as pltpu


# ----------------------------------------------------------------------------
# Pallas kernel: one ConvLSTM cell step per grid point (b, t).
# ----------------------------------------------------------------------------
def _clstm_cell_kernel(x_ref, wx_ref, wh_ref, b_ref, m_ref, h_out_ref,
                       hext_ref, c_ref, slab_ref, *, D, H, W, Ch, K, p, pad_l):
    # x_ref    : (1, 1, KcP, n)     bf16  im2col'd x_t (contraction on sublanes)
    # wx_ref   : (4*Ch, KcP)        bf16  input-path weights (gates on sublanes)
    # wh_ref   : (4*Ch, K3Ch_pad)   bf16  recurrent weights, (kd,kh,kw,c) folded
    # b_ref    : (4*Ch, 1)          f32   conv bias (broadcast over lanes)
    # m_ref    : (K*K, n)           bf16  0/1 masks for (kh,kw) boundary wrap
    # h_out_ref: (1, 1, Ch, n)      f32   hidden state output (channels-first)
    # hext_ref : (Ch, n + 2*pad_l)  bf16  scratch: h_{t-1}, lane-padded, persistent
    # c_ref    : (Ch, n)            f32   scratch: cell state, persistent
    # slab_ref : (K3Ch_pad, n)      bf16  scratch: shifted/masked im2col of h_{t-1}
    HW = H * W
    n = D * HW
    K3Ch = K * K * K * Ch
    K3Ch_pad = slab_ref.shape[0]
    t = pl.program_id(1)

    # Reset the recurrent state at the start of every sequence (new batch item).
    @pl.when(t == 0)
    def _init():
        hext_ref[...] = jnp.zeros_like(hext_ref)
        c_ref[...] = jnp.zeros_like(c_ref)
        if K3Ch_pad > K3Ch:
            # The padded contraction rows are never written by the tap loop;
            # keep them zero so the recurrent matmul sees exact zero padding.
            slab_ref[K3Ch:, :] = jnp.zeros((K3Ch_pad - K3Ch, n),
                                           dtype=slab_ref.dtype)

    # ---- recurrent im2col: K^3 shifted, masked, lane-dense copies of h ------
    # Each tap is a static lane-offset window of the zero-banded h_ext (the
    # bands handle the depth boundary for free), times a (kh,kw) wrap mask,
    # stored as an aligned full-width (Ch, n) block.  Nothing large is kept
    # live across this loop.
    for kd in range(K):
        for kh in range(K):
            for kw in range(K):
                tap = (kd * K + kh) * K + kw
                off = (kd - p) * HW + (kh - p) * W + (kw - p)
                src = hext_ref[:, pad_l + off:pad_l + off + n]   # (Ch, n) bf16
                if kh == p and kw == p:            # interior taps: no wrap
                    val = src
                else:
                    mrow = kh * K + kw
                    val = src * m_ref[mrow:mrow + 1, :]
                slab_ref[tap * Ch:(tap + 1) * Ch, :] = val

    # ---- gate pre-activations: two wide MXU matmuls, f32 accumulation -------
    acc = jnp.dot(wx_ref[...], x_ref[0, 0],
                  preferred_element_type=jnp.float32)            # (4Ch, n)
    acc = acc + jnp.dot(wh_ref[...], slab_ref[...],
                        preferred_element_type=jnp.float32)
    acc = acc + b_ref[...]                                       # lane broadcast

    # ---- gates + state update: every slice is a full-lane sublane block -----
    ifo = jax.nn.sigmoid(acc[:3 * Ch])                           # fused i,f,o
    i = ifo[0 * Ch:1 * Ch]
    f = ifo[1 * Ch:2 * Ch]
    o = ifo[2 * Ch:3 * Ch]
    g = jnp.tanh(acc[3 * Ch:4 * Ch])

    c_new = c_ref[...] * f + i * g
    h_new = o * jnp.tanh(c_new)

    c_ref[...] = c_new
    h_out_ref[...] = h_new.reshape(1, 1, Ch, n)                  # lane-dense out
    # Write h_t (bf16) into the interior of h_ext for step t+1; the zero side
    # bands written at t == 0 are never touched again.
    hext_ref[:, pad_l:pad_l + n] = h_new.astype(hext_ref.dtype)


# ----------------------------------------------------------------------------
# Wrapper: one fused pallas_call over the whole (B, T) sequence.
# ----------------------------------------------------------------------------
@functools.partial(jax.jit, static_argnames=("hidden_ch", "kernel_size"))
def _clstm_forward_impl(x, w, bias, *, hidden_ch, kernel_size):
    # x    : (B, T, Cin, D, H, W) f32   (PyTorch layout)
    # w    : (K, K, K, Cin+Ch, 4*Ch) f32 (DHWIO; input axis ordered [x, h])
    # bias : (4*Ch,) f32
    B, T, Cin, D, H, W = x.shape
    K = kernel_size
    Ch = hidden_ch
    p = (K - 1) // 2
    HW = H * W
    n = D * HW
    Kc = K * K * K * Cin
    KcP = ((Kc + 127) // 128) * 128
    K3Ch = K * K * K * Ch
    K3Ch_pad = ((K3Ch + 127) // 128) * 128
    max_off = p * (HW + W + 1)
    pad_l = ((max_off + 127) // 128) * 128

    # --- one-time layout prep (outside the time loop) -------------------------
    # im2col of x over (kd, kh, kw, cin): cast to bf16 FIRST, then stack.
    xb = x.astype(jnp.bfloat16)
    xp = jnp.pad(xb, ((0, 0), (0, 0), (0, 0), (p, p), (p, p), (p, p)))
    cols = [xp[:, :, :, kd:kd + D, kh:kh + H, kw:kw + W]
            for kd in range(K) for kh in range(K) for kw in range(K)]
    x_cols = jnp.stack(cols, axis=2).reshape(B, T, Kc, n)        # (B,T,Kc,n)
    x_cols = jnp.pad(x_cols, ((0, 0), (0, 0), (0, KcP - Kc), (0, 0)))

    # Weights, channels-first: gates on sublanes, contraction on lanes.
    wxT = jnp.transpose(w[:, :, :, :Cin, :], (4, 0, 1, 2, 3)).reshape(4 * Ch, Kc)
    wxT = jnp.pad(wxT, ((0, 0), (0, KcP - Kc))).astype(jnp.bfloat16)
    whT = jnp.transpose(w[:, :, :, Cin:, :], (4, 0, 1, 2, 3)).reshape(4 * Ch, K3Ch)
    whT = jnp.pad(whT.astype(jnp.bfloat16), ((0, 0), (0, K3Ch_pad - K3Ch)))
    b2 = bias.reshape(4 * Ch, 1).astype(jnp.float32)

    # (kh, kw) wrap masks over the flattened (d, h, w) lane axis (trace-time).
    pos = np.arange(n)
    hh = (pos // W) % H
    ww = pos % W
    m_np = np.zeros((K * K, n), np.float32)
    for kh in range(K):
        for kw in range(K):
            ok = ((hh + kh - p >= 0) & (hh + kh - p < H)
                  & (ww + kw - p >= 0) & (ww + kw - p < W))
            m_np[kh * K + kw] = ok
    masks = jnp.asarray(m_np, dtype=jnp.bfloat16)

    kernel = functools.partial(_clstm_cell_kernel, D=D, H=H, W=W, Ch=Ch,
                               K=K, p=p, pad_l=pad_l)

    flops = 2 * B * T * (4 * Ch) * n * (KcP + K3Ch_pad)
    transcendentals = B * T * n * Ch * 5
    bytes_accessed = (x_cols.size * 2 + wxT.size * 2 + whT.size * 2
                      + masks.size * 2 + b2.size * 4 + B * T * Ch * n * 4)

    h_flat = pl.pallas_call(
        kernel,
        out_shape=jax.ShapeDtypeStruct((B, T, Ch, n), jnp.float32),
        grid_spec=pltpu.PrefetchScalarGridSpec(
            num_scalar_prefetch=0,
            grid=(B, T),
            in_specs=[
                pl.BlockSpec((1, 1, KcP, n), lambda b, t: (b, t, 0, 0)),
                pl.BlockSpec((4 * Ch, KcP), lambda b, t: (0, 0)),
                pl.BlockSpec((4 * Ch, K3Ch_pad), lambda b, t: (0, 0)),
                pl.BlockSpec((4 * Ch, 1), lambda b, t: (0, 0)),
                pl.BlockSpec((K * K, n), lambda b, t: (0, 0)),
            ],
            out_specs=pl.BlockSpec((1, 1, Ch, n), lambda b, t: (b, t, 0, 0)),
            scratch_shapes=[
                pltpu.VMEM((Ch, n + 2 * pad_l), jnp.bfloat16),  # lane-padded h
                pltpu.VMEM((Ch, n), jnp.float32),               # cell state c
                pltpu.VMEM((K3Ch_pad, n), jnp.bfloat16),        # recurrent slab
            ],
        ),
        compiler_params=pltpu.CompilerParams(
            dimension_semantics=("parallel", "arbitrary")),
        cost_estimate=pl.CostEstimate(flops=flops,
                                      transcendentals=transcendentals,
                                      bytes_accessed=bytes_accessed),
    )(x_cols, wxT, whT, b2, masks)

    # Channels-first kernel output: pure reshape (no transpose) to PyTorch layout.
    return h_flat.reshape(B, T, Ch, D, H, W)


def clstm_forward(x, w, bias, *, hidden_ch, kernel_size):
    """Returns a list of T arrays of shape (B, Ch, D, H, W), like CLSTM.forward."""
    h_all = _clstm_forward_impl(x, w, bias, hidden_ch=hidden_ch,
                                kernel_size=kernel_size)
    return [h_all[:, t] for t in range(h_all.shape[1])]


# ----------------------------------------------------------------------------
# Pure-JAX f32 reference (correctness check only).
# ----------------------------------------------------------------------------
def clstm_reference(x, w, bias, hidden_ch, kernel_size):
    B, T, Cin, D, H, W = x.shape
    K = kernel_size
    Ch = hidden_ch
    p = (K - 1) // 2

    h = jnp.zeros((B, D, H, W, Ch), jnp.float32)
    c = jnp.zeros_like(h)
    outs = []
    for t in range(T):
        xt = jnp.transpose(x[:, t], (0, 2, 3, 4, 1))
        comb = jnp.concatenate([xt, h], axis=-1)
        A = jax.lax.conv_general_dilated(
            comb, w, (1, 1, 1), [(p, p)] * 3,
            dimension_numbers=("NDHWC", "DHWIO", "NDHWC"),
            precision=jax.lax.Precision.HIGHEST) + bias
        i = jax.nn.sigmoid(A[..., 0 * Ch:1 * Ch])
        f = jax.nn.sigmoid(A[..., 1 * Ch:2 * Ch])
        o = jax.nn.sigmoid(A[..., 2 * Ch:3 * Ch])
        g = jnp.tanh(A[..., 3 * Ch:4 * Ch])
        c = c * f + i * g
        h = o * jnp.tanh(c)
        outs.append(jnp.transpose(h, (0, 4, 1, 2, 3)))
    return outs


if __name__ == "__main__":
    # Small shapes consistent with CLSTM: x is (B, T, C_in, D, H, W).
    B, T = 2, 4
    Cin = 4
    Ch = 32          # hidden_channels[0]; must be even
    K = 3            # kernel_size
    D, H, W = 4, 8, 8
    Cc = Cin + Ch

    key = jax.random.PRNGKey(0)
    kx, kwt, kb = jax.random.split(key, 3)

    x = jax.random.normal(kx, (B, T, Cin, D, H, W), dtype=jnp.float32)
    # Conv3d weight in DHWIO layout (equivalent to PyTorch's (4*Ch, Cc, K, K, K)).
    w = jax.random.normal(kwt, (K, K, K, Cc, 4 * Ch), dtype=jnp.float32) * 0.05
    bias = jax.random.normal(kb, (4 * Ch,), dtype=jnp.float32) * 0.1

    outs = clstm_forward(x, w, bias, hidden_ch=Ch, kernel_size=K)
    outs = [jax.block_until_ready(o) for o in outs]

    refs = clstm_reference(x, w, bias, Ch, K)
    for o, r in zip(outs, refs):
        # bf16 matmul operands / bf16-carried h (f32 accumulation & f32 c)
        # -> slightly relaxed tolerance.
        np.testing.assert_allclose(np.asarray(o), np.asarray(r),
                                   rtol=2e-2, atol=2e-2)

    print("KERNEL_OK")
</pallas_src>

<mosaic_0001>
module attributes {stable_mosaic.version = 11 : i64} {
  func.func @_clstm_cell_kernel(%arg0: i32, %arg1: i32, %arg2: memref<1x1x128x256xbf16, #tpu.memory_space<vmem>>, %arg3: memref<128x128xbf16, #tpu.memory_space<vmem>>, %arg4: memref<128x896xbf16, #tpu.memory_space<vmem>>, %arg5: memref<128x1xf32, #tpu.memory_space<vmem>>, %arg6: memref<9x256xbf16, #tpu.memory_space<vmem>>, %arg7: memref<1x1x32x256xf32, #tpu.memory_space<vmem>>, %arg8: memref<32x512xbf16, #tpu.memory_space<vmem>>, %arg9: memref<32x256xf32, #tpu.memory_space<vmem>>, %arg10: memref<896x256xbf16, #tpu.memory_space<vmem>>) attributes {dimension_semantics = [#tpu.dimension_semantics<parallel>, #tpu.dimension_semantics<arbitrary>], iteration_bounds = array<i64: 2, 4>, scalar_prefetch = 0 : i64, scratch_operands = 3 : i64, tpu.core_type = #tpu.core_type<tc>, window_params = [{transform_indices = @transform_0, window_bounds = array<i64: 1, 1, 128, 256>}, {pipeline_mode = #tpu.pipeline_mode<synchronous>, transform_indices = @transform_1, window_bounds = array<i64: 128, 128>}, {pipeline_mode = #tpu.pipeline_mode<synchronous>, transform_indices = @transform_2, window_bounds = array<i64: 128, 896>}, {pipeline_mode = #tpu.pipeline_mode<synchronous>, transform_indices = @transform_3, window_bounds = array<i64: 128, 1>}, {pipeline_mode = #tpu.pipeline_mode<synchronous>, transform_indices = @transform_4, window_bounds = array<i64: 9, 256>}, {transform_indices = @transform_5, window_bounds = array<i64: 1, 1, 32, 256>}]} {
    %c0_i32 = arith.constant 0 : i32
    %0 = arith.cmpi eq, %arg1, %c0_i32 : i32
    %1 = arith.extui %0 : i1 to i32
    %c0_i32_0 = arith.constant 0 : i32
    %2 = arith.cmpi ne, %1, %c0_i32_0 : i32
    scf.if %2 {
      %cst_123 = arith.constant 0.000000e+00 : bf16
      %162 = vector.broadcast %cst_123 : bf16 to vector<32x512xbf16>
      %c0_124 = arith.constant 0 : index
      %c0_125 = arith.constant 0 : index
      %163 = vector.load %arg8[%c0_124, %c0_125] : memref<32x512xbf16, #tpu.memory_space<vmem>>, vector<32x512xbf16>
      tpu.vector_store %arg8[%c0_124, %c0_125], %162 {strides = array<i32>} : memref<32x512xbf16, #tpu.memory_space<vmem>>, vector<32x512xbf16>,
      %cst_126 = arith.constant 0.000000e+00 : f32
      %164 = vector.broadcast %cst_126 : f32 to vector<32x256xf32>
      %c0_127 = arith.constant 0 : index
      %c0_128 = arith.constant 0 : index
      %165 = vector.load %arg9[%c0_127, %c0_128] : memref<32x256xf32, #tpu.memory_space<vmem>>, vector<32x256xf32>
      tpu.vector_store %arg9[%c0_127, %c0_128], %164 {strides = array<i32>} : memref<32x256xf32, #tpu.memory_space<vmem>>, vector<32x256xf32>,
      %cst_129 = arith.constant 0.000000e+00 : bf16
      %166 = vector.broadcast %cst_129 : bf16 to vector<32x256xbf16>
      %c864 = arith.constant 864 : index
      %c0_130 = arith.constant 0 : index
      %167 = vector.load %arg10[%c864, %c0_130] : memref<896x256xbf16, #tpu.memory_space<vmem>>, vector<32x256xbf16>
      tpu.vector_store %arg10[%c864, %c0_130], %166 {strides = array<i32>} : memref<896x256xbf16, #tpu.memory_space<vmem>>, vector<32x256xbf16>,
    } else {
    }
    %c0 = arith.constant 0 : index
    %c55 = arith.constant 55 : index
    %3 = vector.load %arg8[%c0, %c55] : memref<32x512xbf16, #tpu.memory_space<vmem>>, vector<32x256xbf16>
    %c0_1 = arith.constant 0 : index
    %c0_2 = arith.constant 0 : index
    %4 = vector.load %arg6[%c0_1, %c0_2] : memref<9x256xbf16, #tpu.memory_space<vmem>>, vector<1x256xbf16>
    %5 = vector.broadcast %4 : vector<1x256xbf16> to vector<32x256xbf16>
    %6 = arith.mulf %3, %5 : vector<32x256xbf16>
    %c0_3 = arith.constant 0 : index
    %c0_4 = arith.constant 0 : index
    %7 = vector.load %arg10[%c0_3, %c0_4] : memref<896x256xbf16, #tpu.memory_space<vmem>>, vector<32x256xbf16>
    tpu.vector_store %arg10[%c0_3, %c0_4], %6 {strides = array<i32>} : memref<896x256xbf16, #tpu.memory_space<vmem>>, vector<32x256xbf16>,
    %c0_5 = arith.constant 0 : index
    %c56 = arith.constant 56 : index
    %8 = vector.load %arg8[%c0_5, %c56] : memref<32x512xbf16, #tpu.memory_space<vmem>>, vector<32x256xbf16>
    %c1 = arith.constant 1 : index
    %c0_6 = arith.constant 0 : index
    %9 = vector.load %arg6[%c1, %c0_6] : memref<9x256xbf16, #tpu.memory_space<vmem>>, vector<1x256xbf16>
    %10 = vector.broadcast %9 : vector<1x256xbf16> to vector<32x256xbf16>
    %11 = arith.mulf %8, %10 : vector<32x256xbf16>
    %c32 = arith.constant 32 : index
    %c0_7 = arith.constant 0 : index
    %12 = vector.load %arg10[%c32, %c0_7] : memref<896x256xbf16, #tpu.memory_space<vmem>>, vector<32x256xbf16>
    tpu.vector_store %arg10[%c32, %c0_7], %11 {strides = array<i32>} : memref<896x256xbf16, #tpu.memory_space<vmem>>, vector<32x256xbf16>,
    %c0_8 = arith.constant 0 : index
    %c57 = arith.constant 57 : index
    %13 = vector.load %arg8[%c0_8, %c57] : memref<32x512xbf16, #tpu.memory_space<vmem>>, vector<32x256xbf16>
    %c2 = arith.constant 2 : index
    %c0_9 = arith.constant 0 : index
    %14 = vector.load %arg6[%c2, %c0_9] : memref<9x256xbf16, #tpu.memory_space<vmem>>, vector<1x256xbf16>
    %15 = vector.broadcast %14 : vector<1x256xbf16> to vector<32x256xbf16>
    %16 = arith.mulf %13, %15 : vector<32x256xbf16>
    %c64 = arith.constant 64 : index
    %c0_10 = arith.constant 0 : index
    %17 = vector.load %arg10[%c64, %c0_10] : memref<896x256xbf16, #tpu.memory_space<vmem>>, vector<32x256xbf16>
    tpu.vector_store %arg10[%c64, %c0_10], %16 {strides = array<i32>} : memref<896x256xbf16, #tpu.memory_space<vmem>>, vector<32x256xbf16>,
    %c0_11 = arith.constant 0 : index
    %c63 = arith.constant 63 : index
    %18 = vector.load %arg8[%c0_11, %c63] : memref<32x512xbf16, #tpu.memory_space<vmem>>, vector<32x256xbf16>
    %c3 = arith.constant 3 : index
    %c0_12 = arith.constant 0 : index
    %19 = vector.load %arg6[%c3, %c0_12] : memref<9x256xbf16, #tpu.memory_space<vmem>>, vector<1x256xbf16>
    %20 = vector.broadcast %19 : vector<1x256xbf16> to vector<32x256xbf16>
    %21 = arith.mulf %18, %20 : vector<32x256xbf16>
    %c96 = arith.constant 96 : index
    %c0_13 = arith.constant 0 : index
    %22 = vector.load %arg10[%c96, %c0_13] : memref<896x256xbf16, #tpu.memory_space<vmem>>, vector<32x256xbf16>
    tpu.vector_store %arg10[%c96, %c0_13], %21 {strides = array<i32>} : memref<896x256xbf16, #tpu.memory_space<vmem>>, vector<32x256xbf16>,
    %c0_14 = arith.constant 0 : index
    %c64_15 = arith.constant 64 : index
    %23 = vector.load %arg8[%c0_14, %c64_15] : memref<32x512xbf16, #tpu.memory_space<vmem>>, vector<32x256xbf16>
    %c128 = arith.constant 128 : index
    %c0_16 = arith.constant 0 : index
    %24 = vector.load %arg10[%c128, %c0_16] : memref<896x256xbf16, #tpu.memory_space<vmem>>, vector<32x256xbf16>
    tpu.vector_store %arg10[%c128, %c0_16], %23 {strides = array<i32>} : memref<896x256xbf16, #tpu.memory_space<vmem>>, vector<32x256xbf16>,
    %c0_17 = arith.constant 0 : index
    %c65 = arith.constant 65 : index
    %25 = vector.load %arg8[%c0_17, %c65] : memref<32x512xbf16, #tpu.memory_space<vmem>>, vector<32x256xbf16>
    %c5 = arith.constant 5 : index
    %c0_18 = arith.constant 0 : index
    %26 = vector.load %arg6[%c5, %c0_18] : memref<9x256xbf16, #tpu.memory_space<vmem>>, vector<1x256xbf16>
    %27 = vector.broadcast %26 : vector<1x256xbf16> to vector<32x256xbf16>
    %28 = arith.mulf %25, %27 : vector<32x256xbf16>
    %c160 = arith.constant 160 : index
    %c0_19 = arith.constant 0 : index
    %29 = vector.load %arg10[%c160, %c0_19] : memref<896x256xbf16, #tpu.memory_space<vmem>>, vector<32x256xbf16>
    tpu.vector_store %arg10[%c160, %c0_19], %28 {strides = array<i32>} : memref<896x256xbf16, #tpu.memory_space<vmem>>, vector<32x256xbf16>,
    %c0_20 = arith.constant 0 : index
    %c71 = arith.constant 71 : index
    %30 = vector.load %arg8[%c0_20, %c71] : memref<32x512xbf16, #tpu.memory_space<vmem>>, vector<32x256xbf16>
    %c6 = arith.constant 6 : index
    %c0_21 = arith.constant 0 : index
    %31 = vector.load %arg6[%c6, %c0_21] : memref<9x256xbf16, #tpu.memory_space<vmem>>, vector<1x256xbf16>
    %32 = vector.broadcast %31 : vector<1x256xbf16> to vector<32x256xbf16>
    %33 = arith.mulf %30, %32 : vector<32x256xbf16>
    %c192 = arith.constant 192 : index
    %c0_22 = arith.constant 0 : index
    %34 = vector.load %arg10[%c192, %c0_22] : memref<896x256xbf16, #tpu.memory_space<vmem>>, vector<32x256xbf16>
    tpu.vector_store %arg10[%c192, %c0_22], %33 {strides = array<i32>} : memref<896x256xbf16, #tpu.memory_space<vmem>>, vector<32x256xbf16>,
    %c0_23 = arith.constant 0 : index
    %c72 = arith.constant 72 : index
    %35 = vector.load %arg8[%c0_23, %c72] : memref<32x512xbf16, #tpu.memory_space<vmem>>, vector<32x256xbf16>
    %c7 = arith.constant 7 : index
    %c0_24 = arith.constant 0 : index
    %36 = vector.load %arg6[%c7, %c0_24] : memref<9x256xbf16, #tpu.memory_space<vmem>>, vector<1x256xbf16>
    %37 = vector.broadcast %36 : vector<1x256xbf16> to vector<32x256xbf16>
    %38 = arith.mulf %35, %37 : vector<32x256xbf16>
    %c224 = arith.constant 224 : index
    %c0_25 = arith.constant 0 : index
    %39 = vector.load %arg10[%c224, %c0_25] : memref<896x256xbf16, #tpu.memory_space<vmem>>, vector<32x256xbf16>
    tpu.vector_store %arg10[%c224, %c0_25], %38 {strides = array<i32>} : memref<896x256xbf16, #tpu.memory_space<vmem>>, vector<32x256xbf16>,
    %c0_26 = arith.constant 0 : index
    %c73 = arith.constant 73 : index
    %40 = vector.load %arg8[%c0_26, %c73] : memref<32x512xbf16, #tpu.memory_space<vmem>>, vector<32x256xbf16>
    %c8 = arith.constant 8 : index
    %c0_27 = arith.constant 0 : index
    %41 = vector.load %arg6[%c8, %c0_27] : memref<9x256xbf16, #tpu.memory_space<vmem>>, vector<1x256xbf16>
    %42 = vector.broadcast %41 : vector<1x256xbf16> to vector<32x256xbf16>
    %43 = arith.mulf %40, %42 : vector<32x256xbf16>
    %c256 = arith.constant 256 : index
    %c0_28 = arith.constant 0 : index
    %44 = vector.load %arg10[%c256, %c0_28] : memref<896x256xbf16, #tpu.memory_space<vmem>>, vector<32x256xbf16>
    tpu.vector_store %arg10[%c256, %c0_28], %43 {strides = array<i32>} : memref<896x256xbf16, #tpu.memory_space<vmem>>, vector<32x256xbf16>,
    %c0_29 = arith.constant 0 : index
    %c119 = arith.constant 119 : index
    %45 = vector.load %arg8[%c0_29, %c119] : memref<32x512xbf16, #tpu.memory_space<vmem>>, vector<32x256xbf16>
    %c0_30 = arith.constant 0 : index
    %c0_31 = arith.constant 0 : index
    %46 = vector.load %arg6[%c0_30, %c0_31] : memref<9x256xbf16, #tpu.memory_space<vmem>>, vector<1x256xbf16>
    %47 = vector.broadcast %46 : vector<1x256xbf16> to vector<32x256xbf16>
    %48 = arith.mulf %45, %47 : vector<32x256xbf16>
    %c288 = arith.constant 288 : index
    %c0_32 = arith.constant 0 : index
    %49 = vector.load %arg10[%c288, %c0_32] : memref<896x256xbf16, #tpu.memory_space<vmem>>, vector<32x256xbf16>
    tpu.vector_store %arg10[%c288, %c0_32], %48 {strides = array<i32>} : memref<896x256xbf16, #tpu.memory_space<vmem>>, vector<32x256xbf16>,
    %c0_33 = arith.constant 0 : index
    %c120 = arith.constant 120 : index
    %50 = vector.load %arg8[%c0_33, %c120] : memref<32x512xbf16, #tpu.memory_space<vmem>>, vector<32x256xbf16>
    %c1_34 = arith.constant 1 : index
    %c0_35 = arith.constant 0 : index
    %51 = vector.load %arg6[%c1_34, %c0_35] : memref<9x256xbf16, #tpu.memory_space<vmem>>, vector<1x256xbf16>
    %52 = vector.broadcast %51 : vector<1x256xbf16> to vector<32x256xbf16>
    %53 = arith.mulf %50, %52 : vector<32x256xbf16>
    %c320 = arith.constant 320 : index
    %c0_36 = arith.constant 0 : index
    %54 = vector.load %arg10[%c320, %c0_36] : memref<896x256xbf16, #tpu.memory_space<vmem>>, vector<32x256xbf16>
    tpu.vector_store %arg10[%c320, %c0_36], %53 {strides = array<i32>} : memref<896x256xbf16, #tpu.memory_space<vmem>>, vector<32x256xbf16>,
    %c0_37 = arith.constant 0 : index
    %c121 = arith.constant 121 : index
    %55 = vector.load %arg8[%c0_37, %c121] : memref<32x512xbf16, #tpu.memory_space<vmem>>, vector<32x256xbf16>
    %c2_38 = arith.constant 2 : index
    %c0_39 = arith.constant 0 : index
    %56 = vector.load %arg6[%c2_38, %c0_39] : memref<9x256xbf16, #tpu.memory_space<vmem>>, vector<1x256xbf16>
    %57 = vector.broadcast %56 : vector<1x256xbf16> to vector<32x256xbf16>
    %58 = arith.mulf %55, %57 : vector<32x256xbf16>
    %c352 = arith.constant 352 : index
    %c0_40 = arith.constant 0 : index
    %59 = vector.load %arg10[%c352, %c0_40] : memref<896x256xbf16, #tpu.memory_space<vmem>>, vector<32x256xbf16>
    tpu.vector_store %arg10[%c352, %c0_40], %58 {strides = array<i32>} : memref<896x256xbf16, #tpu.memory_space<vmem>>, vector<32x256xbf16>,
    %c0_41 = arith.constant 0 : index
    %c127 = arith.constant 127 : index
    %60 = vector.load %arg8[%c0_41, %c127] : memref<32x512xbf16, #tpu.memory_space<vmem>>, vector<32x256xbf16>
    %c3_42 = arith.constant 3 : index
    %c0_43 = arith.constant 0 : index
    %61 = vector.load %arg6[%c3_42, %c0_43] : memref<9x256xbf16, #tpu.memory_space<vmem>>, vector<1x256xbf16>
    %62 = vector.broadcast %61 : vector<1x256xbf16> to vector<32x256xbf16>
    %63 = arith.mulf %60, %62 : vector<32x256xbf16>
    %c384 = arith.constant 384 : index
    %c0_44 = arith.constant 0 : index
    %64 = vector.load %arg10[%c384, %c0_44] : memref<896x256xbf16, #tpu.memory_space<vmem>>, vector<32x256xbf16>
    tpu.vector_store %arg10[%c384, %c0_44], %63 {strides = array<i32>} : memref<896x256xbf16, #tpu.memory_space<vmem>>, vector<32x256xbf16>,
    %c0_45 = arith.constant 0 : index
    %c128_46 = arith.constant 128 : index
    %65 = vector.load %arg8[%c0_45, %c128_46] : memref<32x512xbf16, #tpu.memory_space<vmem>>, vector<32x256xbf16>
    %c416 = arith.constant 416 : index
    %c0_47 = arith.constant 0 : index
    %66 = vector.load %arg10[%c416, %c0_47] : memref<896x256xbf16, #tpu.memory_space<vmem>>, vector<32x256xbf16>
    tpu.vector_store %arg10[%c416, %c0_47], %65 {strides = array<i32>} : memref<896x256xbf16, #tpu.memory_space<vmem>>, vector<32x256xbf16>,
    %c0_48 = arith.constant 0 : index
    %c129 = arith.constant 129 : index
    %67 = vector.load %arg8[%c0_48, %c129] : memref<32x512xbf16, #tpu.memory_space<vmem>>, vector<32x256xbf16>
    %c5_49 = arith.constant 5 : index
    %c0_50 = arith.constant 0 : index
    %68 = vector.load %arg6[%c5_49, %c0_50] : memref<9x256xbf16, #tpu.memory_space<vmem>>, vector<1x256xbf16>
    %69 = vector.broadcast %68 : vector<1x256xbf16> to vector<32x256xbf16>
    %70 = arith.mulf %67, %69 : vector<32x256xbf16>
    %c448 = arith.constant 448 : index
    %c0_51 = arith.constant 0 : index
    %71 = vector.load %arg10[%c448, %c0_51] : memref<896x256xbf16, #tpu.memory_space<vmem>>, vector<32x256xbf16>
    tpu.vector_store %arg10[%c448, %c0_51], %70 {strides = array<i32>} : memref<896x256xbf16, #tpu.memory_space<vmem>>, vector<32x256xbf16>,
    %c0_52 = arith.constant 0 : index
    %c135 = arith.constant 135 : index
    %72 = vector.load %arg8[%c0_52, %c135] : memref<32x512xbf16, #tpu.memory_space<vmem>>, vector<32x256xbf16>
    %c6_53 = arith.constant 6 : index
    %c0_54 = arith.constant 0 : index
    %73 = vector.load %arg6[%c6_53, %c0_54] : memref<9x256xbf16, #tpu.memory_space<vmem>>, vector<1x256xbf16>
    %74 = vector.broadcast %73 : vector<1x256xbf16> to vector<32x256xbf16>
    %75 = arith.mulf %72, %74 : vector<32x256xbf16>
    %c480 = arith.constant 480 : index
    %c0_55 = arith.constant 0 : index
    %76 = vector.load %arg10[%c480, %c0_55] : memref<896x256xbf16, #tpu.memory_space<vmem>>, vector<32x256xbf16>
    tpu.vector_store %arg10[%c480, %c0_55], %75 {strides = array<i32>} : memref<896x256xbf16, #tpu.memory_space<vmem>>, vector<32x256xbf16>,
    %c0_56 = arith.constant 0 : index
    %c136 = arith.constant 136 : index
    %77 = vector.load %arg8[%c0_56, %c136] : memref<32x512xbf16, #tpu.memory_space<vmem>>, vector<32x256xbf16>
    %c7_57 = arith.constant 7 : index
    %c0_58 = arith.constant 0 : index
    %78 = vector.load %arg6[%c7_57, %c0_58] : memref<9x256xbf16, #tpu.memory_space<vmem>>, vector<1x256xbf16>
    %79 = vector.broadcast %78 : vector<1x256xbf16> to vector<32x256xbf16>
    %80 = arith.mulf %77, %79 : vector<32x256xbf16>
    %c512 = arith.constant 512 : index
    %c0_59 = arith.constant 0 : index
    %81 = vector.load %arg10[%c512, %c0_59] : memref<896x256xbf16, #tpu.memory_space<vmem>>, vector<32x256xbf16>
    tpu.vector_store %arg10[%c512, %c0_59], %80 {strides = array<i32>} : memref<896x256xbf16, #tpu.memory_space<vmem>>, vector<32x256xbf16>,
    %c0_60 = arith.constant 0 : index
    %c137 = arith.constant 137 : index
    %82 = vector.load %arg8[%c0_60, %c137] : memref<32x512xbf16, #tpu.memory_space<vmem>>, vector<32x256xbf16>
    %c8_61 = arith.constant 8 : index
    %c0_62 = arith.constant 0 : index
    %83 = vector.load %arg6[%c8_61, %c0_62] : memref<9x256xbf16, #tpu.memory_space<vmem>>, vector<1x256xbf16>
    %84 = vector.broadcast %83 : vector<1x256xbf16> to vector<32x256xbf16>
    %85 = arith.mulf %82, %84 : vector<32x256xbf16>
    %c544 = arith.constant 544 : index
    %c0_63 = arith.constant 0 : index
    %86 = vector.load %arg10[%c544, %c0_63] : memref<896x256xbf16, #tpu.memory_space<vmem>>, vector<32x256xbf16>
    tpu.vector_store %arg10[%c544, %c0_63], %85 {strides = array<i32>} : memref<896x256xbf16, #tpu.memory_space<vmem>>, vector<32x256xbf16>,
    %c0_64 = arith.constant 0 : index
    %c183 = arith.constant 183 : index
    %87 = vector.load %arg8[%c0_64, %c183] : memref<32x512xbf16, #tpu.memory_space<vmem>>, vector<32x256xbf16>
    %c0_65 = arith.constant 0 : index
    %c0_66 = arith.constant 0 : index
    %88 = vector.load %arg6[%c0_65, %c0_66] : memref<9x256xbf16, #tpu.memory_space<vmem>>, vector<1x256xbf16>
    %89 = vector.broadcast %88 : vector<1x256xbf16> to vector<32x256xbf16>
    %90 = arith.mulf %87, %89 : vector<32x256xbf16>
    %c576 = arith.constant 576 : index
    %c0_67 = arith.constant 0 : index
    %91 = vector.load %arg10[%c576, %c0_67] : memref<896x256xbf16, #tpu.memory_space<vmem>>, vector<32x256xbf16>
    tpu.vector_store %arg10[%c576, %c0_67], %90 {strides = array<i32>} : memref<896x256xbf16, #tpu.memory_space<vmem>>, vector<32x256xbf16>,
    %c0_68 = arith.constant 0 : index
    %c184 = arith.constant 184 : index
    %92 = vector.load %arg8[%c0_68, %c184] : memref<32x512xbf16, #tpu.memory_space<vmem>>, vector<32x256xbf16>
    %c1_69 = arith.constant 1 : index
    %c0_70 = arith.constant 0 : index
    %93 = vector.load %arg6[%c1_69, %c0_70] : memref<9x256xbf16, #tpu.memory_space<vmem>>, vector<1x256xbf16>
    %94 = vector.broadcast %93 : vector<1x256xbf16> to vector<32x256xbf16>
    %95 = arith.mulf %92, %94 : vector<32x256xbf16>
    %c608 = arith.constant 608 : index
    %c0_71 = arith.constant 0 : index
    %96 = vector.load %arg10[%c608, %c0_71] : memref<896x256xbf16, #tpu.memory_space<vmem>>, vector<32x256xbf16>
    tpu.vector_store %arg10[%c608, %c0_71], %95 {strides = array<i32>} : memref<896x256xbf16, #tpu.memory_space<vmem>>, vector<32x256xbf16>,
    %c0_72 = arith.constant 0 : index
    %c185 = arith.constant 185 : index
    %97 = vector.load %arg8[%c0_72, %c185] : memref<32x512xbf16, #tpu.memory_space<vmem>>, vector<32x256xbf16>
    %c2_73 = arith.constant 2 : index
    %c0_74 = arith.constant 0 : index
    %98 = vector.load %arg6[%c2_73, %c0_74] : memref<9x256xbf16, #tpu.memory_space<vmem>>, vector<1x256xbf16>
    %99 = vector.broadcast %98 : vector<1x256xbf16> to vector<32x256xbf16>
    %100 = arith.mulf %97, %99 : vector<32x256xbf16>
    %c640 = arith.constant 640 : index
    %c0_75 = arith.constant 0 : index
    %101 = vector.load %arg10[%c640, %c0_75] : memref<896x256xbf16, #tpu.memory_space<vmem>>, vector<32x256xbf16>
    tpu.vector_store %arg10[%c640, %c0_75], %100 {strides = array<i32>} : memref<896x256xbf16, #tpu.memory_space<vmem>>, vector<32x256xbf16>,
    %c0_76 = arith.constant 0 : index
    %c191 = arith.constant 191 : index
    %102 = vector.load %arg8[%c0_76, %c191] : memref<32x512xbf16, #tpu.memory_space<vmem>>, vector<32x256xbf16>
    %c3_77 = arith.constant 3 : index
    %c0_78 = arith.constant 0 : index
    %103 = vector.load %arg6[%c3_77, %c0_78] : memref<9x256xbf16, #tpu.memory_space<vmem>>, vector<1x256xbf16>
    %104 = vector.broadcast %103 : vector<1x256xbf16> to vector<32x256xbf16>
    %105 = arith.mulf %102, %104 : vector<32x256xbf16>
    %c672 = arith.constant 672 : index
    %c0_79 = arith.constant 0 : index
    %106 = vector.load %arg10[%c672, %c0_79] : memref<896x256xbf16, #tpu.memory_space<vmem>>, vector<32x256xbf16>
    tpu.vector_store %arg10[%c672, %c0_79], %105 {strides = array<i32>} : memref<896x256xbf16, #tpu.memory_space<vmem>>, vector<32x256xbf16>,
    %c0_80 = arith.constant 0 : index
    %c192_81 = arith.constant 192 : index
    %107 = vector.load %arg8[%c0_80, %c192_81] : memref<32x512xbf16, #tpu.memory_space<vmem>>, vector<32x256xbf16>
    %c704 = arith.constant 704 : index
    %c0_82 = arith.constant 0 : index
    %108 = vector.load %arg10[%c704, %c0_82] : memref<896x256xbf16, #tpu.memory_space<vmem>>, vector<32x256xbf16>
    tpu.vector_store %arg10[%c704, %c0_82], %107 {strides = array<i32>} : memref<896x256xbf16, #tpu.memory_space<vmem>>, vector<32x256xbf16>,
    %c0_83 = arith.constant 0 : index
    %c193 = arith.constant 193 : index
    %109 = vector.load %arg8[%c0_83, %c193] : memref<32x512xbf16, #tpu.memory_space<vmem>>, vector<32x256xbf16>
    %c5_84 = arith.constant 5 : index
    %c0_85 = arith.constant 0 : index
    %110 = vector.load %arg6[%c5_84, %c0_85] : memref<9x256xbf16, #tpu.memory_space<vmem>>, vector<1x256xbf16>
    %111 = vector.broadcast %110 : vector<1x256xbf16> to vector<32x256xbf16>
    %112 = arith.mulf %109, %111 : vector<32x256xbf16>
    %c736 = arith.constant 736 : index
    %c0_86 = arith.constant 0 : index
    %113 = vector.load %arg10[%c736, %c0_86] : memref<896x256xbf16, #tpu.memory_space<vmem>>, vector<32x256xbf16>
    tpu.vector_store %arg10[%c736, %c0_86], %112 {strides = array<i32>} : memref<896x256xbf16, #tpu.memory_space<vmem>>, vector<32x256xbf16>,
    %c0_87 = arith.constant 0 : index
    %c199 = arith.constant 199 : index
    %114 = vector.load %arg8[%c0_87, %c199] : memref<32x512xbf16, #tpu.memory_space<vmem>>, vector<32x256xbf16>
    %c6_88 = arith.constant 6 : index
    %c0_89 = arith.constant 0 : index
    %115 = vector.load %arg6[%c6_88, %c0_89] : memref<9x256xbf16, #tpu.memory_space<vmem>>, vector<1x256xbf16>
    %116 = vector.broadcast %115 : vector<1x256xbf16> to vector<32x256xbf16>
    %117 = arith.mulf %114, %116 : vector<32x256xbf16>
    %c768 = arith.constant 768 : index
    %c0_90 = arith.constant 0 : index
    %118 = vector.load %arg10[%c768, %c0_90] : memref<896x256xbf16, #tpu.memory_space<vmem>>, vector<32x256xbf16>
    tpu.vector_store %arg10[%c768, %c0_90], %117 {strides = array<i32>} : memref<896x256xbf16, #tpu.memory_space<vmem>>, vector<32x256xbf16>,
    %c0_91 = arith.constant 0 : index
    %c200 = arith.constant 200 : index
    %119 = vector.load %arg8[%c0_91, %c200] : memref<32x512xbf16, #tpu.memory_space<vmem>>, vector<32x256xbf16>
    %c7_92 = arith.constant 7 : index
    %c0_93 = arith.constant 0 : index
    %120 = vector.load %arg6[%c7_92, %c0_93] : memref<9x256xbf16, #tpu.memory_space<vmem>>, vector<1x256xbf16>
    %121 = vector.broadcast %120 : vector<1x256xbf16> to vector<32x256xbf16>
    %122 = arith.mulf %119, %121 : vector<32x256xbf16>
    %c800 = arith.constant 800 : index
    %c0_94 = arith.constant 0 : index
    %123 = vector.load %arg10[%c800, %c0_94] : memref<896x256xbf16, #tpu.memory_space<vmem>>, vector<32x256xbf16>
    tpu.vector_store %arg10[%c800, %c0_94], %122 {strides = array<i32>} : memref<896x256xbf16, #tpu.memory_space<vmem>>, vector<32x256xbf16>,
    %c0_95 = arith.constant 0 : index
    %c201 = arith.constant 201 : index
    %124 = vector.load %arg8[%c0_95, %c201] : memref<32x512xbf16, #tpu.memory_space<vmem>>, vector<32x256xbf16>
    %c8_96 = arith.constant 8 : index
    %c0_97 = arith.constant 0 : index
    %125 = vector.load %arg6[%c8_96, %c0_97] : memref<9x256xbf16, #tpu.memory_space<vmem>>, vector<1x256xbf16>
    %126 = vector.broadcast %125 : vector<1x256xbf16> to vector<32x256xbf16>
    %127 = arith.mulf %124, %126 : vector<32x256xbf16>
    %c832 = arith.constant 832 : index
    %c0_98 = arith.constant 0 : index
    %128 = vector.load %arg10[%c832, %c0_98] : memref<896x256xbf16, #tpu.memory_space<vmem>>, vector<32x256xbf16>
    tpu.vector_store %arg10[%c832, %c0_98], %127 {strides = array<i32>} : memref<896x256xbf16, #tpu.memory_space<vmem>>, vector<32x256xbf16>,
    %c0_99 = arith.constant 0 : index
    %c0_100 = arith.constant 0 : index
    %129 = vector.load %arg3[%c0_99, %c0_100] : memref<128x128xbf16, #tpu.memory_space<vmem>>, vector<128x128xbf16>
    %c0_101 = arith.constant 0 : index
    %c0_102 = arith.constant 0 : index
    %c0_103 = arith.constant 0 : index
    %c0_104 = arith.constant 0 : index
    %130 = vector.load %arg2[%c0_101, %c0_102, %c0_103, %c0_104] : memref<1x1x128x256xbf16, #tpu.memory_space<vmem>>, vector<1x1x128x256xbf16>
    %131 = vector.shape_cast %130 : vector<1x1x128x256xbf16> to vector<128x256xbf16>
    %cst = arith.constant dense<0.000000e+00> : vector<128x256xf32>
    %132 = tpu.matmul %129, %131, %cst {dimension_numbers = #tpu.dot_dimension_numbers<[1], [0], [0], [1], [0, 0, 1, 1], [], []>} : vector<128x128xbf16>, vector<128x256xbf16>, vector<128x256xf32> -> vector<128x256xf32>
    %c0_105 = arith.constant 0 : index
    %c0_106 = arith.constant 0 : index
    %133 = vector.load %arg4[%c0_105, %c0_106] : memref<128x896xbf16, #tpu.memory_space<vmem>>, vector<128x896xbf16>
    %c0_107 = arith.constant 0 : index
    %c0_108 = arith.constant 0 : index
    %134 = vector.load %arg10[%c0_107, %c0_108] : memref<896x256xbf16, #tpu.memory_space<vmem>>, vector<896x256xbf16>
    %cst_109 = arith.constant dense<0.000000e+00> : vector<128x256xf32>
    %135 = tpu.matmul %133, %134, %cst_109 {dimension_numbers = #tpu.dot_dimension_numbers<[1], [0], [0], [1], [0, 0, 1, 1], [], []>} : vector<128x896xbf16>, vector<896x256xbf16>, vector<128x256xf32> -> vector<128x256xf32>
    %136 = arith.addf %132, %135 : vector<128x256xf32>
    %c0_110 = arith.constant 0 : index
    %c0_111 = arith.constant 0 : index
    %137 = vector.load %arg5[%c0_110, %c0_111] : memref<128x1xf32, #tpu.memory_space<vmem>>, vector<128x1xf32>
    %138 = vector.broadcast %137 : vector<128x1xf32> to vector<128x256xf32>
    %139 = arith.addf %136, %138 : vector<128x256xf32>
    %140 = vector.extract_strided_slice %139 {offsets = [0, 0], sizes = [96, 256], strides = [1, 1]} : vector<128x256xf32> to vector<96x256xf32>
    %141 = arith.negf %140 : vector<96x256xf32>
    %142 = math.exp %141 : vector<96x256xf32>
    %cst_112 = arith.constant 1.000000e+00 : f32
    %143 = vector.broadcast %cst_112 : f32 to vector<96x256xf32>
    %144 = arith.addf %143, %142 : vector<96x256xf32>
    %145 = arith.divf %143, %144 : vector<96x256xf32>
    %146 = vector.extract_strided_slice %145 {offsets = [0, 0], sizes = [32, 256], strides = [1, 1]} : vector<96x256xf32> to vector<32x256xf32>
    %147 = vector.extract_strided_slice %145 {offsets = [32, 0], sizes = [32, 256], strides = [1, 1]} : vector<96x256xf32> to vector<32x256xf32>
    %148 = vector.extract_strided_slice %145 {offsets = [64, 0], sizes = [32, 256], strides = [1, 1]} : vector<96x256xf32> to vector<32x256xf32>
    %149 = vector.extract_strided_slice %139 {offsets = [96, 0], sizes = [32, 256], strides = [1, 1]} : vector<128x256xf32> to vector<32x256xf32>
    %150 = math.tanh %149 : vector<32x256xf32>
    %c0_113 = arith.constant 0 : index
    %c0_114 = arith.constant 0 : index
    %151 = vector.load %arg9[%c0_113, %c0_114] : memref<32x256xf32, #tpu.memory_space<vmem>>, vector<32x256xf32>
    %152 = arith.mulf %151, %147 : vector<32x256xf32>
    %153 = arith.mulf %146, %150 : vector<32x256xf32>
    %154 = arith.addf %152, %153 : vector<32x256xf32>
    %155 = math.tanh %154 : vector<32x256xf32>
    %156 = arith.mulf %148, %155 : vector<32x256xf32>
    %c0_115 = arith.constant 0 : index
    %c0_116 = arith.constant 0 : index
    %157 = vector.load %arg9[%c0_115, %c0_116] : memref<32x256xf32, #tpu.memory_space<vmem>>, vector<32x256xf32>
    tpu.vector_store %arg9[%c0_115, %c0_116], %154 {strides = array<i32>} : memref<32x256xf32, #tpu.memory_space<vmem>>, vector<32x256xf32>,
    %158 = vector.shape_cast %156 : vector<32x256xf32> to vector<1x1x32x256xf32>
    %c0_117 = arith.constant 0 : index
    %c0_118 = arith.constant 0 : index
    %c0_119 = arith.constant 0 : index
    %c0_120 = arith.constant 0 : index
    %159 = vector.load %arg7[%c0_117, %c0_118, %c0_119, %c0_120] : memref<1x1x32x256xf32, #tpu.memory_space<vmem>>, vector<1x1x32x256xf32>
    tpu.vector_store %arg7[%c0_117, %c0_118, %c0_119, %c0_120], %158 {strides = array<i32>} : memref<1x1x32x256xf32, #tpu.memory_space<vmem>>, vector<1x1x32x256xf32>,
    %160 = arith.truncf %156 : vector<32x256xf32> to vector<32x256xbf16>
    %c0_121 = arith.constant 0 : index
    %c128_122 = arith.constant 128 : index
    %161 = vector.load %arg8[%c0_121, %c128_122] : memref<32x512xbf16, #tpu.memory_space<vmem>>, vector<32x256xbf16>
    tpu.vector_store %arg8[%c0_121, %c128_122], %160 {strides = array<i32>} : memref<32x512xbf16, #tpu.memory_space<vmem>>, vector<32x256xbf16>,
    return
  }
  func.func @transform_0(%arg0: i32, %arg1: i32) -> (i32, i32, i32, i32) {
    %c0_i32 = arith.constant 0 : i32
    %c0_i32_0 = arith.constant 0 : i32
    %c0_i32_1 = arith.constant 0 : i32
    return %arg0, %arg1, %c0_i32, %c0_i32_0 : i32, i32, i32, i32
  }
  func.func @transform_1(%arg0: i32, %arg1: i32) -> (i32, i32) {
    %c0_i32 = arith.constant 0 : i32
    %c0_i32_0 = arith.constant 0 : i32
    %c0_i32_1 = arith.constant 0 : i32
    return %c0_i32, %c0_i32_0 : i32, i32
  }
  func.func @transform_2(%arg0: i32, %arg1: i32) -> (i32, i32) {
    %c0_i32 = arith.constant 0 : i32
    %c0_i32_0 = arith.constant 0 : i32
    %c0_i32_1 = arith.constant 0 : i32
    return %c0_i32, %c0_i32_0 : i32, i32
  }
  func.func @transform_3(%arg0: i32, %arg1: i32) -> (i32, i32) {
    %c0_i32 = arith.constant 0 : i32
    %c0_i32_0 = arith.constant 0 : i32
    %c0_i32_1 = arith.constant 0 : i32
    return %c0_i32, %c0_i32_0 : i32, i32
  }
  func.func @transform_4(%arg0: i32, %arg1: i32) -> (i32, i32) {
    %c0_i32 = arith.constant 0 : i32
    %c0_i32_0 = arith.constant 0 : i32
    %c0_i32_1 = arith.constant 0 : i32
    return %c0_i32, %c0_i32_0 : i32, i32
  }
  func.func @transform_5(%arg0: i32, %arg1: i32) -> (i32, i32, i32, i32) {
    %c0_i32 = arith.constant 0 : i32
    %c0_i32_0 = arith.constant 0 : i32
    %c0_i32_1 = arith.constant 0 : i32
    return %arg0, %arg1, %c0_i32, %c0_i32_0 : i32, i32, i32, i32
  }
}

</mosaic_0001>

<llo_original>
// kernel: _clstm_forward_impl.1
$region0: #{_clstm_forward_impl.1}
  #allocation0 [shape = 'u32[]', space=smem, size = 0x4, offset = 0x4, fixed_abs, tag = 'smem constant byte address 0x4 - core index']
  #allocation1 [shape = 'u32[144,128]{1,0:T(1,128)}', space=vmem, size = 0x12000, scoped, tag = 'internal scratch']
  #allocation2 [shape = 'bf16[32,512]{1,0:T(16,128)(2,1)}', space=vmem, size = 0x8000, scoped, tag = 'scratch operand']
  #allocation3 [shape = 'f32[32,256]{1,0:T(8,128)}', space=vmem, size = 0x8000, scoped, tag = 'scratch operand']
  #allocation4 [shape = 'bf16[896,256]{1,0:T(16,128)(2,1)}', space=vmem, size = 0x70000, scoped, tag = 'scratch operand']
  %s0 = inlined_call_operand.vmem [shape: bf16[2,4,128,256], index: 0, kind: input, shape index: {}]
  %s1 = inlined_call_operand.vmem [shape: bf16[128,128], index: 1, kind: input, shape index: {}]
  %s2 = inlined_call_operand.vmem [shape: bf16[128,896], index: 2, kind: input, shape index: {}]
  %s3 = inlined_call_operand.vmem [shape: f32[128,1], index: 3, kind: input, shape index: {}]
  %s4 = inlined_call_operand.vmem [shape: bf16[9,256], index: 4, kind: input, shape index: {}]
  %s5 = inlined_call_operand.vmem [shape: f32[2,4,32,256], index: 5, kind: output, shape index: {}]
  %s6 = sld [smem:[#allocation0]]
  $region57: #{_clstm_forward_impl.1} parent=0
    _
  %s8 = ssub.s32 1, %s6
  %s9 = scalar_select 0, %s8, %s6
  loop: start=0, step=1, limit=10
  $region2: #{_clstm_forward_impl.1} parent=0 // loop_pre_header
    _
  $region3: #{_clstm_forward_impl.1} parent=0 // loop_header
    %s11 = sphi 0, %s15
    %p12 = scmp.ge.s32.totalorder %s11, 10
    %s18 = sphi 0, %s30
    %s19 = sphi 0, %s26
    %s20 = sphi 0, %s18
    %s21 = sphi 0, %s19
    %s22 = sphi 0, %s20
    %s23 = sphi 0, %s21
    %s35 = sphi 0, %s37
    %s38 = sphi 0, %s35
    %s39 = sphi 0, %s38
    %s55 = sphi 0, %s39
    %s59 = sphi 0, %s59
    %s61 = sphi 0, %s59
    %s62 = sphi 0, %s61
    %s76 = sphi 0, %s62
    %s80 = sphi 0, %s80
    %s82 = sphi 0, %s80
    %s83 = sphi 0, %s82
    %s97 = sphi 0, %s83
    %s101 = sphi 0, %s101
    %s103 = sphi 0, %s101
    %s104 = sphi 0, %s103
    %s118 = sphi 0, %s104
    %s122 = sphi 0, %s122
    %s124 = sphi 0, %s122
    %s125 = sphi 0, %s124
    %s139 = sphi 0, %s125
    %s147 = sphi 0, %s149
    %s150 = sphi 0, %s147
    %s151 = sphi 0, %s150
    %s167 = sphi 0, %s151
  $region4: #{_clstm_forward_impl.1} parent=0 // loop_header_branch
    %14 = sbr.rel (%p12) target = $region8
  $region5: #{_clstm_forward_impl.1} parent=0 // loop_body
    %s16 = ssub.s32 %s11, 1
    %s17 = ssub.s32 %s11, 2
    %s24 = sadd.s32 1, %s19
    %p25 = scmp.ge.s32.totalorder %s24, 4
    %s26 = scalar_select %p25, 0, %s24
    %s27 = sadd.s32 1, %s18
    %s28 = scalar_select %p25, %s27, %s18
    %p29 = scmp.ge.s32.totalorder %s28, 2
    %s30 = scalar_select %p29, 0, %s28
    %s31 = ssub.s32 %s18, %s30
    %s32 = ssub.s32 %s19, %s26
    %s33 = sor.u32 %s31, %s32
    %p34 = scmp.eq.s32.totalorder %s33, 0
    %s36 = sadd.s32 %s35, 1
    %s37 = scalar_select %p34, %s35, %s36
    %p40 = pneg %p34
    %p41 = scmp.eq.s32.totalorder %s11, 7
    %p42 = por %p40, %p41
    %p43 = scmp.ne.s32.totalorder %s35, %s38
    %p44 = scmp.eq.s32.totalorder %s11, 0
    %p45 = por %p43, %p44
    %p46 = scmp.ne.s32.totalorder %s35, %s38
    %p47 = scmp.eq.s32.totalorder %s16, 7
    %p48 = por %p46, %p47
    %p49 = scmp.ne.s32.totalorder %s38, %s39
    %p50 = scmp.eq.s32.totalorder %s16, 0
    %p51 = por %p49, %p50
    %p52 = scmp.ne.s32.totalorder %s38, %s39
    %p53 = scmp.eq.s32.totalorder %s17, 7
    %p54 = por %p52, %p53
    %p56 = scmp.ne.s32.totalorder %s39, %s55
    %p57 = scmp.eq.s32.totalorder %s17, 0
    %p58 = por %p56, %p57
    %s60 = sadd.s32 %s59, 1
    %p63 = scmp.eq.s32.totalorder %s11, 7
    %p64 = scmp.ne.s32.totalorder %s59, %s61
    %p65 = scmp.eq.s32.totalorder %s11, 0
    %p66 = por %p64, %p65
    %p67 = scmp.ne.s32.totalorder %s59, %s61
    %p68 = scmp.eq.s32.totalorder %s16, 7
    %p69 = por %p67, %p68
    %p70 = scmp.ne.s32.totalorder %s61, %s62
    %p71 = scmp.eq.s32.totalorder %s16, 0
    %p72 = por %p70, %p71
    %p73 = scmp.ne.s32.totalorder %s61, %s62
    %p74 = scmp.eq.s32.totalorder %s17, 7
    %p75 = por %p73, %p74
    %p77 = scmp.ne.s32.totalorder %s62, %s76
    %p78 = scmp.eq.s32.totalorder %s17, 0
    %p79 = por %p77, %p78
    %s81 = sadd.s32 %s80, 1
    %p84 = scmp.eq.s32.totalorder %s11, 7
    %p85 = scmp.ne.s32.totalorder %s80, %s82
    %p86 = scmp.eq.s32.totalorder %s11, 0
    %p87 = por %p85, %p86
    %p88 = scmp.ne.s32.totalorder %s80, %s82
    %p89 = scmp.eq.s32.totalorder %s16, 7
    %p90 = por %p88, %p89
    %p91 = scmp.ne.s32.totalorder %s82, %s83
    %p92 = scmp.eq.s32.totalorder %s16, 0
    %p93 = por %p91, %p92
    %p94 = scmp.ne.s32.totalorder %s82, %s83
    %p95 = scmp.eq.s32.totalorder %s17, 7
    %p96 = por %p94, %p95
    %p98 = scmp.ne.s32.totalorder %s83, %s97
    %p99 = scmp.eq.s32.totalorder %s17, 0
    %p100 = por %p98, %p99
    %s102 = sadd.s32 %s101, 1
    %p105 = scmp.eq.s32.totalorder %s11, 7
    %p106 = scmp.ne.s32.totalorder %s101, %s103
    %p107 = scmp.eq.s32.totalorder %s11, 0
    %p108 = por %p106, %p107
    %p109 = scmp.ne.s32.totalorder %s101, %s103
    %p110 = scmp.eq.s32.totalorder %s16, 7
    %p111 = por %p109, %p110
    %p112 = scmp.ne.s32.totalorder %s103, %s104
    %p113 = scmp.eq.s32.totalorder %s16, 0
    %p114 = por %p112, %p113
    %p115 = scmp.ne.s32.totalorder %s103, %s104
    %p116 = scmp.eq.s32.totalorder %s17, 7
    %p117 = por %p115, %p116
    %p119 = scmp.ne.s32.totalorder %s104, %s118
    %p120 = scmp.eq.s32.totalorder %s17, 0
    %p121 = por %p119, %p120
    %s123 = sadd.s32 %s122, 1
    %p126 = scmp.eq.s32.totalorder %s11, 7
    %p127 = scmp.ne.s32.totalorder %s122, %s124
    %p128 = scmp.eq.s32.totalorder %s11, 0
    %p129 = por %p127, %p128
    %p130 = scmp.ne.s32.totalorder %s122, %s124
    %p131 = scmp.eq.s32.totalorder %s16, 7
    %p132 = por %p130, %p131
    %p133 = scmp.ne.s32.totalorder %s124, %s125
    %p134 = scmp.eq.s32.totalorder %s16, 0
    %p135 = por %p133, %p134
    %p136 = scmp.ne.s32.totalorder %s124, %s125
    %p137 = scmp.eq.s32.totalorder %s17, 7
    %p138 = por %p136, %p137
    %p140 = scmp.ne.s32.totalorder %s125, %s139
    %p141 = scmp.eq.s32.totalorder %s17, 0
    %p142 = por %p140, %p141
    %s143 = ssub.s32 %s18, %s30
    %s144 = ssub.s32 %s19, %s26
    %s145 = sor.u32 %s143, %s144
    %p146 = scmp.eq.s32.totalorder %s145, 0
    %s148 = sadd.s32 %s147, 1
    %s149 = scalar_select %p146, %s147, %s148
    %p152 = pneg %p146
    %p153 = scmp.eq.s32.totalorder %s11, 7
    %p154 = por %p152, %p153
    %p155 = scmp.ne.s32.totalorder %s147, %s150
    %p156 = scmp.eq.s32.totalorder %s11, 0
    %p157 = por %p155, %p156
    %p158 = scmp.ne.s32.totalorder %s147, %s150
    %p159 = scmp.eq.s32.totalorder %s16, 7
    %p160 = por %p158, %p159
    %p161 = scmp.ne.s32.totalorder %s150, %s151
    %p162 = scmp.eq.s32.totalorder %s16, 0
    %p163 = por %p161, %p162
    %p164 = scmp.ne.s32.totalorder %s150, %s151
    %p165 = scmp.eq.s32.totalorder %s17, 7
    %p166 = por %p164, %p165
    %p168 = scmp.ne.s32.totalorder %s151, %s167
    %p169 = scmp.eq.s32.totalorder %s17, 0
    %p170 = por %p168, %p169
    %p171 = scmp.le.s32.totalorder 1, %s11
    %p172 = scmp.lt.s32.totalorder %s11, 9
    %p173 = pnand %p171, %p172
    %p174 = pneg %p173
    // Predicated region
    $region9: #{_clstm_forward_impl.1} parent=5 // pred_check
      _
    $region10: #{_clstm_forward_impl.1} parent=5 // pred_check_branch
      %176 = sbr.rel (%p173) target = $region12
    $region11: #{_clstm_forward_impl.1} parent=5 // pred_region
      %s177 = ssub.s32 %s11, 1
      // Predicated region
      $region13: #{_clstm_forward_impl.1} parent=11 // pred_check
        %p178 = pneg %p72
      $region14: #{_clstm_forward_impl.1} parent=11 // pred_check_branch
        %180 = sbr.rel (%p178) target = $region16
      $region15: #{_clstm_forward_impl.1} parent=11 // pred_region
        _
      $region16: #{_clstm_forward_impl.1} parent=11 // pred_fallthru
        _
      // Predicated region
      $region17: #{_clstm_forward_impl.1} parent=11 // pred_check
        %p181 = pneg %p93
      $region18: #{_clstm_forward_impl.1} parent=11 // pred_check_branch
        %183 = sbr.rel (%p181) target = $region20
      $region19: #{_clstm_forward_impl.1} parent=11 // pred_region
        _
      $region20: #{_clstm_forward_impl.1} parent=11 // pred_fallthru
        _
      // Predicated region
      $region21: #{_clstm_forward_impl.1} parent=11 // pred_check
        %p184 = pneg %p114
      $region22: #{_clstm_forward_impl.1} parent=11 // pred_check_branch
        %186 = sbr.rel (%p184) target = $region24
      $region23: #{_clstm_forward_impl.1} parent=11 // pred_region
        _
      $region24: #{_clstm_forward_impl.1} parent=11 // pred_fallthru
        _
      // Predicated region
      $region25: #{_clstm_forward_impl.1} parent=11 // pred_check
        %p187 = pneg %p135
      $region26: #{_clstm_forward_impl.1} parent=11 // pred_check_branch
        %189 = sbr.rel (%p187) target = $region28
      $region27: #{_clstm_forward_impl.1} parent=11 // pred_region
        _
      $region28: #{_clstm_forward_impl.1} parent=11 // pred_fallthru
        _
    $region12: #{_clstm_forward_impl.1} parent=5 // pred_fallthru
      _
    %p190 = scmp.lt.s32.totalorder %s11, 8
    // Predicated region
    $region29: #{_clstm_forward_impl.1} parent=5 // pred_check
      %p191 = pneg %p190
    $region30: #{_clstm_forward_impl.1} parent=5 // pred_check_branch
      %193 = sbr.rel (%p191) target = $region32
    $region31: #{_clstm_forward_impl.1} parent=5 // pred_region
      // Predicated region
      $region33: #{_clstm_forward_impl.1} parent=31 // pred_check
        %p194 = pneg %p45
      $region34: #{_clstm_forward_impl.1} parent=31 // pred_check_branch
        %196 = sbr.rel (%p194) target = $region36
      $region35: #{_clstm_forward_impl.1} parent=31 // pred_region
        %p197 = scmp.lt.s32.totalorder %s18, 1
        %s198 = scalar_select %p197, %s18, 1
        %p199 = scmp.lt.s32.totalorder %s19, 3
        %s200 = scalar_select %p199, %s19, 3
        %s201 = smul.addr %s200, 32
        %s202 = smul.addr %s198, 128
        %s203 = sadd.s32 %s201, %s202
        %s204 = smul.addr %s203, 4
        %s205 = scalar_lea.vmem %s0, %s204
      $region36: #{_clstm_forward_impl.1} parent=31 // pred_fallthru
        _
    $region32: #{_clstm_forward_impl.1} parent=5 // pred_fallthru
      _
    %p206 = scmp.le.s32.totalorder 1, %s11
    %p207 = scmp.lt.s32.totalorder %s11, 9
    %p208 = pnand %p206, %p207
    %p209 = pneg %p208
    // Predicated region
    $region37: #{_clstm_forward_impl.1} parent=5 // pred_check
      _
    $region38: #{_clstm_forward_impl.1} parent=5 // pred_check_branch
      %211 = sbr.rel (%p208) target = $region40
    $region39: #{_clstm_forward_impl.1} parent=5 // pred_region
      %s212 = ssub.s32 %s11, 1
      %p213 = scmp.lt.s32.totalorder %s20, 1
      %s214 = scalar_select %p213, %s20, 1
      %p215 = scmp.lt.s32.totalorder %s21, 3
      %s216 = scalar_select %p215, %s21, 3
      %s217 = smul.addr %s216, 32
      %s218 = smul.addr %s214, 128
      %s219 = sadd.s32 %s217, %s218
      %s220 = smul.addr %s219, 4
      %s221 = scalar_lea.vmem %s0, %s220
      %p222 = pneg %p51
      %p223 = pneg %p48
      %p224 = pneg %p72
      %p225 = pneg %p69
      %p226 = pneg %p93
      %p227 = pneg %p90
      %p228 = pneg %p114
      %p229 = pneg %p111
      %p230 = pneg %p135
      %p231 = pneg %p132
      %p232 = pneg %p163
      %p233 = pneg %p160
      %p234 = scmp.lt.s32.totalorder %s20, 1
      %s235 = scalar_select %p234, %s20, 1
      %p236 = scmp.lt.s32.totalorder %s21, 3
      %s237 = scalar_select %p236, %s21, 3
      %s238 = smul.addr %s237, 8
      %s239 = smul.addr %s235, 32
      %s240 = sadd.s32 %s238, %s239
      %s241 = smul.addr %s240, 8
      %s242 = scalar_lea.vmem %s5, %s241
      %p243 = scmp.lt.s32.totalorder %s20, 1
      %s244 = scalar_select %p243, %s20, 1
      %p245 = scmp.lt.s32.totalorder %s21, 3
      %s246 = scalar_select %p245, %s21, 3
      %s247 = smul.addr %s246, 32
      %s248 = smul.addr %s244, 128
      %s249 = sadd.s32 %s247, %s248
      %s250 = smul.addr %s249, 4
      %s251 = scalar_lea.vmem %s0, %s250
      %p252 = scmp.lt.s32.totalorder %s20, 1
      %s253 = scalar_select %p252, %s20, 1
      %p254 = scmp.lt.s32.totalorder %s21, 3
      %s255 = scalar_select %p254, %s21, 3
      %s256 = smul.addr %s255, 8
      %s257 = smul.addr %s253, 32
      %s258 = sadd.s32 %s256, %s257
      %s259 = smul.addr %s258, 8
      %s260 = scalar_lea.vmem %s5, %s259
      %p262 = scmp.eq.s32.totalorder %s21, 0
      // Predicated region
      $region41: #{_clstm_forward_impl.1} parent=39 // pred_check
        %p263 = pneg %p262
      $region42: #{_clstm_forward_impl.1} parent=39 // pred_check_branch
        %265 = sbr.rel (%p263) target = $region44
      $region43: #{_clstm_forward_impl.1} parent=39 // pred_region
        %266 = vst [vmem:[#allocation2] sm:$0xff] 0
        %267 = vst [vmem:[#allocation2 + $0x8] sm:$0xff] 0
        %268 = vst [vmem:[#allocation2 + $0x10] sm:$0xff] 0
        %269 = vst [vmem:[#allocation2 + $0x18] sm:$0xff] 0
        %270 = vst [vmem:[#allocation2 + $0x20] sm:$0xff] 0
        %271 = vst [vmem:[#allocation2 + $0x28] sm:$0xff] 0
        %272 = vst [vmem:[#allocation2 + $0x30] sm:$0xff] 0
        %273 = vst [vmem:[#allocation2 + $0x38] sm:$0xff] 0
        %274 = vst [vmem:[#allocation3] sm:$0xff] 0.0
        %275 = vst [vmem:[#allocation3 + $0x8] sm:$0xff] 0.0
        %276 = vst [vmem:[#allocation3 + $0x10] sm:$0xff] 0.0
        %277 = vst [vmem:[#allocation3 + $0x18] sm:$0xff] 0.0
        %278 = vst [vmem:[#allocation3 + $0x20] sm:$0xff] 0.0
        %279 = vst [vmem:[#allocation3 + $0x28] sm:$0xff] 0.0
        %280 = vst [vmem:[#allocation3 + $0x30] sm:$0xff] 0.0
        %281 = vst [vmem:[#allocation3 + $0x38] sm:$0xff] 0.0
        %282 = vst [vmem:[#allocation4 + $0x360] sm:$0xff] 0
        %283 = vst [vmem:[#allocation4 + $0x368] sm:$0xff] 0
        %284 = vst [vmem:[#allocation4 + $0x370] sm:$0xff] 0
        %285 = vst [vmem:[#allocation4 + $0x378] sm:$0xff] 0
      $region44: #{_clstm_forward_impl.1} parent=39 // pred_fallthru
        _
      %v286 = vld [vmem:[#allocation2] sm:$0xff]
      %v287 = vld [vmem:[#allocation2 + $0x8] sm:$0xff]
      %v288 = vld [vmem:[#allocation2 + $0x10] sm:$0xff]
      %v289 = vld [vmem:[#allocation2 + $0x20] sm:$0xff]
      %v290 = vld [vmem:[#allocation2 + $0x28] sm:$0xff]
      %v291 = vld [vmem:[#allocation2 + $0x30] sm:$0xff]
      %v292 = vld [vmem:[%s4] sm:$0x11]
      %v294 = vunpack.c.l.b16 %v292
      %v295 = vunpack.c.h.b16 %v292
      %v296 = vpack.c.b16 %v294, %v294
      %v297 = vpack.c.b16 %v295, %v295
      %v299 = vpack.i.b16 %v296, %v296
      %v301 = vlaneseq
      %v302 = vshrl.u32 %v301, 7
      %v303 = vsub.s32 0, %v302
      %v304 = vrot.slane %v299, %v303
      %v306 = vpack.i.b16 %v297, %v297
      %v308 = vlaneseq
      %v309 = vshrl.u32 %v308, 7
      %v310 = vsub.s32 0, %v309
      %v311 = vrot.slane %v306, %v310
      %314 = vrot.lane.b32.xlu0 %v304, 55
      %v315 = vpop.permute.xlu0 %314
      %316 = vrot.lane.b32.xlu0 %v311, 55
      %v317 = vpop.permute.xlu0 %316
      %vm318 = vcmask 449536
      %v319 = vsel %vm318, %v315, %v317
      %v323 = vmul.bf16 %v286, %v315
      %v324 = vmul.bf16 %v287, %v319
      %v325 = vmul.bf16 %v288, %v317
      %v326 = vmul.bf16 %v289, %v315
      %v327 = vmul.bf16 %v290, %v319
      %v328 = vmul.bf16 %v291, %v317
      %335 = vrot.lane.b32.xlu0 %v323, 73
      %v336 = vpop.permute.xlu0 %335
      %337 = vrot.lane.b32.xlu0 %v324, 73
      %v338 = vpop.permute.xlu0 %337
      %339 = vrot.lane.b32.xlu0 %v325, 73
      %v340 = vpop.permute.xlu0 %339
      %341 = vrot.lane.b32.xlu0 %v326, 73
      %v342 = vpop.permute.xlu0 %341
      %343 = vrot.lane.b32.xlu0 %v327, 73
      %v344 = vpop.permute.xlu0 %343
      %345 = vrot.lane.b32.xlu0 %v328, 73
      %v346 = vpop.permute.xlu0 %345
      %vm347 = vcmask 596992
      %v348 = vsel %vm347, %v336, %v338
      %v349 = vsel %vm347, %v338, %v340
      %v350 = vsel %vm347, %v342, %v344
      %v351 = vsel %vm347, %v344, %v346
      %356 = vst [vmem:[#allocation4] sm:$0xff] %v348
      %357 = vst [vmem:[#allocation4 + $0x8] sm:$0xff] %v349
      %358 = vst [vmem:[#allocation4 + $0x10] sm:$0xff] %v350
      %359 = vst [vmem:[#allocation4 + $0x18] sm:$0xff] %v351
      %v360 = vld [vmem:[#allocation2] sm:$0xff]
      %v361 = vld [vmem:[#allocation2 + $0x8] sm:$0xff]
      %v362 = vld [vmem:[#allocation2 + $0x10] sm:$0xff]
      %v363 = vld [vmem:[#allocation2 + $0x20] sm:$0xff]
      %v364 = vld [vmem:[#allocation2 + $0x28] sm:$0xff]
      %v365 = vld [vmem:[#allocation2 + $0x30] sm:$0xff]
      %v366 = vld [vmem:[%s4] sm:$0x11]
      %v368 = vunpack.c.l.b16 %v366
      %v369 = vunpack.c.h.b16 %v366
      %v370 = vpack.c.b16 %v368, %v368
      %v371 = vpack.c.b16 %v369, %v369
      %v373 = vshrl.u32 %v370, 16
      %v374 = vpack.i.b16 %v373, %v373
      %v376 = vlaneseq
      %v377 = vshrl.u32 %v376, 7
      %v378 = vsub.s32 0, %v377
      %v379 = vrot.slane %v374, %v378
      %v381 = vshrl.u32 %v371, 16
      %v382 = vpack.i.b16 %v381, %v381
      %v384 = vlaneseq
      %v385 = vshrl.u32 %v384, 7
      %v386 = vsub.s32 0, %v385
      %v387 = vrot.slane %v382, %v386
      %390 = vrot.lane.b32.xlu0 %v379, 56
      %v391 = vpop.permute.xlu0 %390
      %392 = vrot.lane.b32.xlu0 %v387, 56
      %v393 = vpop.permute.xlu0 %392
      %vm394 = vcmask 457728
      %v395 = vsel %vm394, %v391, %v393
      %v399 = vmul.bf16 %v360, %v391
      %v400 = vmul.bf16 %v361, %v395
      %v401 = vmul.bf16 %v362, %v393
      %v402 = vmul.bf16 %v363, %v391
      %v403 = vmul.bf16 %v364, %v395
      %v404 = vmul.bf16 %v365, %v393
      %411 = vrot.lane.b32.xlu0 %v399, 72
      %v412 = vpop.permute.xlu0 %411
      %413 = vrot.lane.b32.xlu0 %v400, 72
      %v414 = vpop.permute.xlu0 %413
      %415 = vrot.lane.b32.xlu0 %v401, 72
      %v416 = vpop.permute.xlu0 %415
      %417 = vrot.lane.b32.xlu0 %v402, 72
      %v418 = vpop.permute.xlu0 %417
      %419 = vrot.lane.b32.xlu0 %v403, 72
      %v420 = vpop.permute.xlu0 %419
      %421 = vrot.lane.b32.xlu0 %v404, 72
      %v422 = vpop.permute.xlu0 %421
      %vm423 = vcmask 588800
      %v424 = vsel %vm423, %v412, %v414
      %v425 = vsel %vm423, %v414, %v416
      %v426 = vsel %vm423, %v418, %v420
      %v427 = vsel %vm423, %v420, %v422
      %432 = vst [vmem:[#allocation4 + $0x20] sm:$0xff] %v424
      %433 = vst [vmem:[#allocation4 + $0x28] sm:$0xff] %v425
      %434 = vst [vmem:[#allocation4 + $0x30] sm:$0xff] %v426
      %435 = vst [vmem:[#allocation4 + $0x38] sm:$0xff] %v427
      %v436 = vld [vmem:[#allocation2] sm:$0xff]
      %v437 = vld [vmem:[#allocation2 + $0x8] sm:$0xff]
      %v438 = vld [vmem:[#allocation2 + $0x10] sm:$0xff]
      %v439 = vld [vmem:[#allocation2 + $0x20] sm:$0xff]
      %v440 = vld [vmem:[#allocation2 + $0x28] sm:$0xff]
      %v441 = vld [vmem:[#allocation2 + $0x30] sm:$0xff]
      %v442 = vld [vmem:[%s4] sm:$0x22]
      %v444 = vunpack.c.l.b16 %v442
      %v445 = vunpack.c.h.b16 %v442
      %v446 = vpack.c.b16 %v444, %v444
      %v447 = vpack.c.b16 %v445, %v445
      %v449 = vpack.i.b16 %v446, %v446
      %v451 = vlaneseq
      %v452 = vshrl.u32 %v451, 7
      %v453 = vsub.s32 1, %v452
      %v454 = vrot.slane %v449, %v453
      %v456 = vpack.i.b16 %v447, %v447
      %v458 = vlaneseq
      %v459 = vshrl.u32 %v458, 7
      %v460 = vsub.s32 1, %v459
      %v461 = vrot.slane %v456, %v460
      %464 = vrot.lane.b32.xlu0 %v454, 57
      %v465 = vpop.permute.xlu0 %464
      %466 = vrot.lane.b32.xlu0 %v461, 57
      %v467 = vpop.permute.xlu0 %466
      %vm468 = vcmask 465920
      %v469 = vsel %vm468, %v465, %v467
      %v473 = vmul.bf16 %v436, %v465
      %v474 = vmul.bf16 %v437, %v469
      %v475 = vmul.bf16 %v438, %v467
      %v476 = vmul.bf16 %v439, %v465
      %v477 = vmul.bf16 %v440, %v469
      %v478 = vmul.bf16 %v441, %v467
      %485 = vrot.lane.b32.xlu0 %v473, 71
      %v486 = vpop.permute.xlu0 %485
      %487 = vrot.lane.b32.xlu0 %v474, 71
      %v488 = vpop.permute.xlu0 %487
      %489 = vrot.lane.b32.xlu0 %v475, 71
      %v490 = vpop.permute.xlu0 %489
      %491 = vrot.lane.b32.xlu0 %v476, 71
      %v492 = vpop.permute.xlu0 %491
      %493 = vrot.lane.b32.xlu0 %v477, 71
      %v494 = vpop.permute.xlu0 %493
      %495 = vrot.lane.b32.xlu0 %v478, 71
      %v496 = vpop.permute.xlu0 %495
      %vm497 = vcmask 580608
      %v498 = vsel %vm497, %v486, %v488
      %v499 = vsel %vm497, %v488, %v490
      %v500 = vsel %vm497, %v492, %v494
      %v501 = vsel %vm497, %v494, %v496
      %506 = vst [vmem:[#allocation4 + $0x40] sm:$0xff] %v498
      %507 = vst [vmem:[#allocation4 + $0x48] sm:$0xff] %v499
      %508 = vst [vmem:[#allocation4 + $0x50] sm:$0xff] %v500
      %509 = vst [vmem:[#allocation4 + $0x58] sm:$0xff] %v501
      %v510 = vld [vmem:[#allocation2] sm:$0xff]
      %v511 = vld [vmem:[#allocation2 + $0x8] sm:$0xff]
      %v512 = vld [vmem:[#allocation2 + $0x10] sm:$0xff]
      %v513 = vld [vmem:[#allocation2 + $0x20] sm:$0xff]
      %v514 = vld [vmem:[#allocation2 + $0x28] sm:$0xff]
      %v515 = vld [vmem:[#allocation2 + $0x30] sm:$0xff]
      %v516 = vld [vmem:[%s4] sm:$0x22]
      %v518 = vunpack.c.l.b16 %v516
      %v519 = vunpack.c.h.b16 %v516
      %v520 = vpack.c.b16 %v518, %v518
      %v521 = vpack.c.b16 %v519, %v519
      %v523 = vshrl.u32 %v520, 16
      %v524 = vpack.i.b16 %v523, %v523
      %v526 = vlaneseq
      %v527 = vshrl.u32 %v526, 7
      %v528 = vsub.s32 1, %v527
      %v529 = vrot.slane %v524, %v528
      %v531 = vshrl.u32 %v521, 16
      %v532 = vpack.i.b16 %v531, %v531
      %v534 = vlaneseq
      %v535 = vshrl.u32 %v534, 7
      %v536 = vsub.s32 1, %v535
      %v537 = vrot.slane %v532, %v536
      %540 = vrot.lane.b32.xlu0 %v529, 63
      %v541 = vpop.permute.xlu0 %540
      %542 = vrot.lane.b32.xlu0 %v537, 63
      %v543 = vpop.permute.xlu0 %542
      %vm544 = vcmask 515072
      %v545 = vsel %vm544, %v541, %v543
      %v549 = vmul.bf16 %v510, %v541
      %v550 = vmul.bf16 %v511, %v545
      %v551 = vmul.bf16 %v512, %v543
      %v552 = vmul.bf16 %v513, %v541
      %v553 = vmul.bf16 %v514, %v545
      %v554 = vmul.bf16 %v515, %v543
      %561 = vrot.lane.b32.xlu0 %v549, 65
      %v562 = vpop.permute.xlu0 %561
      %563 = vrot.lane.b32.xlu0 %v550, 65
      %v564 = vpop.permute.xlu0 %563
      %565 = vrot.lane.b32.xlu0 %v551, 65
      %v566 = vpop.permute.xlu0 %565
      %567 = vrot.lane.b32.xlu0 %v552, 65
      %v568 = vpop.permute.xlu0 %567
      %569 = vrot.lane.b32.xlu0 %v553, 65
      %v570 = vpop.permute.xlu0 %569
      %571 = vrot.lane.b32.xlu0 %v554, 65
      %v572 = vpop.permute.xlu0 %571
      %vm573 = vcmask 531456
      %v574 = vsel %vm573, %v562, %v564
      %v575 = vsel %vm573, %v564, %v566
      %v576 = vsel %vm573, %v568, %v570
      %v577 = vsel %vm573, %v570, %v572
      %582 = vst [vmem:[#allocation4 + $0x60] sm:$0xff] %v574
      %583 = vst [vmem:[#allocation4 + $0x68] sm:$0xff] %v575
      %584 = vst [vmem:[#allocation4 + $0x70] sm:$0xff] %v576
      %585 = vst [vmem:[#allocation4 + $0x78] sm:$0xff] %v577
      %v586 = vld [vmem:[#allocation2] sm:$0xff]
      %v587 = vld [vmem:[#allocation2 + $0x8] sm:$0xff]
      %v588 = vld [vmem:[#allocation2 + $0x10] sm:$0xff]
      %v589 = vld [vmem:[#allocation2 + $0x20] sm:$0xff]
      %v590 = vld [vmem:[#allocation2 + $0x28] sm:$0xff]
      %v591 = vld [vmem:[#allocation2 + $0x30] sm:$0xff]
      %598 = vrot.lane.b32.xlu0 %v586, 64
      %v599 = vpop.permute.xlu0 %598
      %600 = vrot.lane.b32.xlu0 %v587, 64
      %v601 = vpop.permute.xlu0 %600
      %602 = vrot.lane.b32.xlu0 %v588, 64
      %v603 = vpop.permute.xlu0 %602
      %604 = vrot.lane.b32.xlu0 %v589, 64
      %v605 = vpop.permute.xlu0 %604
      %606 = vrot.lane.b32.xlu0 %v590, 64
      %v607 = vpop.permute.xlu0 %606
      %608 = vrot.lane.b32.xlu0 %v591, 64
      %v609 = vpop.permute.xlu0 %608
      %vm610 = vcmask 523264
      %v611 = vsel %vm610, %v599, %v601
      %v612 = vsel %vm610, %v601, %v603
      %v613 = vsel %vm610, %v605, %v607
      %v614 = vsel %vm610, %v607, %v609
      %619 = vst [vmem:[#allocation4 + $0x80] sm:$0xff] %v611
      %620 = vst [vmem:[#allocation4 + $0x88] sm:$0xff] %v612
      %621 = vst [vmem:[#allocation4 + $0x90] sm:$0xff] %v613
      %622 = vst [vmem:[#allocation4 + $0x98] sm:$0xff] %v614
      %v623 = vld [vmem:[#allocation2] sm:$0xff]
      %v624 = vld [vmem:[#allocation2 + $0x8] sm:$0xff]
      %v625 = vld [vmem:[#allocation2 + $0x10] sm:$0xff]
      %v626 = vld [vmem:[#allocation2 + $0x20] sm:$0xff]
      %v627 = vld [vmem:[#allocation2 + $0x28] sm:$0xff]
      %v628 = vld [vmem:[#allocation2 + $0x30] sm:$0xff]
      %v629 = vld [vmem:[%s4] sm:$0x44]
      %v631 = vunpack.c.l.b16 %v629
      %v632 = vunpack.c.h.b16 %v629
      %v633 = vpack.c.b16 %v631, %v631
      %v634 = vpack.c.b16 %v632, %v632
      %v636 = vshrl.u32 %v633, 16
      %v637 = vpack.i.b16 %v636, %v636
      %v639 = vlaneseq
      %v640 = vshrl.u32 %v639, 7
      %v641 = vsub.s32 2, %v640
      %v642 = vrot.slane %v637, %v641
      %v644 = vshrl.u32 %v634, 16
      %v645 = vpack.i.b16 %v644, %v644
      %v647 = vlaneseq
      %v648 = vshrl.u32 %v647, 7
      %v649 = vsub.s32 2, %v648
      %v650 = vrot.slane %v645, %v649
      %653 = vrot.lane.b32.xlu0 %v642, 65
      %v654 = vpop.permute.xlu0 %653
      %655 = vrot.lane.b32.xlu0 %v650, 65
      %v656 = vpop.permute.xlu0 %655
      %v657 = vsel %vm573, %v654, %v656
      %v661 = vmul.bf16 %v623, %v654
      %v662 = vmul.bf16 %v624, %v657
      %v663 = vmul.bf16 %v625, %v656
      %v664 = vmul.bf16 %v626, %v654
      %v665 = vmul.bf16 %v627, %v657
      %v666 = vmul.bf16 %v628, %v656
      %673 = vrot.lane.b32.xlu0 %v661, 63
      %v674 = vpop.permute.xlu0 %673
      %675 = vrot.lane.b32.xlu0 %v662, 63
      %v676 = vpop.permute.xlu0 %675
      %677 = vrot.lane.b32.xlu0 %v663, 63
      %v678 = vpop.permute.xlu0 %677
      %679 = vrot.lane.b32.xlu0 %v664, 63
      %v680 = vpop.permute.xlu0 %679
      %681 = vrot.lane.b32.xlu0 %v665, 63
      %v682 = vpop.permute.xlu0 %681
      %683 = vrot.lane.b32.xlu0 %v666, 63
      %v684 = vpop.permute.xlu0 %683
      %v685 = vsel %vm544, %v674, %v676
      %v686 = vsel %vm544, %v676, %v678
      %v687 = vsel %vm544, %v680, %v682
      %v688 = vsel %vm544, %v682, %v684
      %693 = vst [vmem:[#allocation4 + $0xa0] sm:$0xff] %v685
      %694 = vst [vmem:[#allocation4 + $0xa8] sm:$0xff] %v686
      %695 = vst [vmem:[#allocation4 + $0xb0] sm:$0xff] %v687
      %696 = vst [vmem:[#allocation4 + $0xb8] sm:$0xff] %v688
      %v697 = vld [vmem:[#allocation2] sm:$0xff]
      %v698 = vld [vmem:[#allocation2 + $0x8] sm:$0xff]
      %v699 = vld [vmem:[#allocation2 + $0x10] sm:$0xff]
      %v700 = vld [vmem:[#allocation2 + $0x20] sm:$0xff]
      %v701 = vld [vmem:[#allocation2 + $0x28] sm:$0xff]
      %v702 = vld [vmem:[#allocation2 + $0x30] sm:$0xff]
      %v703 = vld [vmem:[%s4] sm:$0x88]
      %v705 = vunpack.c.l.b16 %v703
      %v706 = vunpack.c.h.b16 %v703
      %v707 = vpack.c.b16 %v705, %v705
      %v708 = vpack.c.b16 %v706, %v706
      %v710 = vpack.i.b16 %v707, %v707
      %v712 = vlaneseq
      %v713 = vshrl.u32 %v712, 7
      %v714 = vsub.s32 3, %v713
      %v715 = vrot.slane %v710, %v714
      %v717 = vpack.i.b16 %v708, %v708
      %v719 = vlaneseq
      %v720 = vshrl.u32 %v719, 7
      %v721 = vsub.s32 3, %v720
      %v722 = vrot.slane %v717, %v721
      %725 = vrot.lane.b32.xlu0 %v715, 71
      %v726 = vpop.permute.xlu0 %725
      %727 = vrot.lane.b32.xlu0 %v722, 71
      %v728 = vpop.permute.xlu0 %727
      %v729 = vsel %vm497, %v726, %v728
      %v733 = vmul.bf16 %v697, %v726
      %v734 = vmul.bf16 %v698, %v729
      %v735 = vmul.bf16 %v699, %v728
      %v736 = vmul.bf16 %v700, %v726
      %v737 = vmul.bf16 %v701, %v729
      %v738 = vmul.bf16 %v702, %v728
      %745 = vrot.lane.b32.xlu0 %v733, 57
      %v746 = vpop.permute.xlu0 %745
      %747 = vrot.lane.b32.xlu0 %v734, 57
      %v748 = vpop.permute.xlu0 %747
      %749 = vrot.lane.b32.xlu0 %v735, 57
      %v750 = vpop.permute.xlu0 %749
      %751 = vrot.lane.b32.xlu0 %v736, 57
      %v752 = vpop.permute.xlu0 %751
      %753 = vrot.lane.b32.xlu0 %v737, 57
      %v754 = vpop.permute.xlu0 %753
      %755 = vrot.lane.b32.xlu0 %v738, 57
      %v756 = vpop.permute.xlu0 %755
      %v757 = vsel %vm468, %v746, %v748
      %v758 = vsel %vm468, %v748, %v750
      %v759 = vsel %vm468, %v752, %v754
      %v760 = vsel %vm468, %v754, %v756
      %765 = vst [vmem:[#allocation4 + $0xc0] sm:$0xff] %v757
      %766 = vst [vmem:[#allocation4 + $0xc8] sm:$0xff] %v758
      %767 = vst [vmem:[#allocation4 + $0xd0] sm:$0xff] %v759
      %768 = vst [vmem:[#allocation4 + $0xd8] sm:$0xff] %v760
      %v769 = vld [vmem:[#allocation2] sm:$0xff]
      %v770 = vld [vmem:[#allocation2 + $0x8] sm:$0xff]
      %v771 = vld [vmem:[#allocation2 + $0x10] sm:$0xff]
      %v772 = vld [vmem:[#allocation2 + $0x20] sm:$0xff]
      %v773 = vld [vmem:[#allocation2 + $0x28] sm:$0xff]
      %v774 = vld [vmem:[#allocation2 + $0x30] sm:$0xff]
      %v775 = vld [vmem:[%s4] sm:$0x88]
      %v777 = vunpack.c.l.b16 %v775
      %v778 = vunpack.c.h.b16 %v775
      %v779 = vpack.c.b16 %v777, %v777
      %v780 = vpack.c.b16 %v778, %v778
      %v782 = vshrl.u32 %v779, 16
      %v783 = vpack.i.b16 %v782, %v782
      %v785 = vlaneseq
      %v786 = vshrl.u32 %v785, 7
      %v787 = vsub.s32 3, %v786
      %v788 = vrot.slane %v783, %v787
      %v790 = vshrl.u32 %v780, 16
      %v791 = vpack.i.b16 %v790, %v790
      %v793 = vlaneseq
      %v794 = vshrl.u32 %v793, 7
      %v795 = vsub.s32 3, %v794
      %v796 = vrot.slane %v791, %v795
      %799 = vrot.lane.b32.xlu0 %v788, 72
      %v800 = vpop.permute.xlu0 %799
      %801 = vrot.lane.b32.xlu0 %v796, 72
      %v802 = vpop.permute.xlu0 %801
      %v803 = vsel %vm423, %v800, %v802
      %v807 = vmul.bf16 %v769, %v800
      %v808 = vmul.bf16 %v770, %v803
      %v809 = vmul.bf16 %v771, %v802
      %v810 = vmul.bf16 %v772, %v800
      %v811 = vmul.bf16 %v773, %v803
      %v812 = vmul.bf16 %v774, %v802
      %819 = vrot.lane.b32.xlu0 %v807, 56
      %v820 = vpop.permute.xlu0 %819
      %821 = vrot.lane.b32.xlu0 %v808, 56
      %v822 = vpop.permute.xlu0 %821
      %823 = vrot.lane.b32.xlu0 %v809, 56
      %v824 = vpop.permute.xlu0 %823
      %825 = vrot.lane.b32.xlu0 %v810, 56
      %v826 = vpop.permute.xlu0 %825
      %827 = vrot.lane.b32.xlu0 %v811, 56
      %v828 = vpop.permute.xlu0 %827
      %829 = vrot.lane.b32.xlu0 %v812, 56
      %v830 = vpop.permute.xlu0 %829
      %v831 = vsel %vm394, %v820, %v822
      %v832 = vsel %vm394, %v822, %v824
      %v833 = vsel %vm394, %v826, %v828
      %v834 = vsel %vm394, %v828, %v830
      %839 = vst [vmem:[#allocation4 + $0xe0] sm:$0xff] %v831
      %840 = vst [vmem:[#allocation4 + $0xe8] sm:$0xff] %v832
      %841 = vst [vmem:[#allocation4 + $0xf0] sm:$0xff] %v833
      %842 = vst [vmem:[#allocation4 + $0xf8] sm:$0xff] %v834
      %v843 = vld [vmem:[#allocation2] sm:$0xff]
      %v844 = vld [vmem:[#allocation2 + $0x8] sm:$0xff]
      %v845 = vld [vmem:[#allocation2 + $0x10] sm:$0xff]
      %v846 = vld [vmem:[#allocation2 + $0x20] sm:$0xff]
      %v847 = vld [vmem:[#allocation2 + $0x28] sm:$0xff]
      %v848 = vld [vmem:[#allocation2 + $0x30] sm:$0xff]
      %v849 = vld [vmem:[%s4 + $0x8] sm:$0x11]
      %v851 = vunpack.c.l.b16 %v849
      %v852 = vunpack.c.h.b16 %v849
      %v853 = vpack.c.b16 %v851, %v851
      %v854 = vpack.c.b16 %v852, %v852
      %v856 = vpack.i.b16 %v853, %v853
      %v858 = vlaneseq
      %v859 = vshrl.u32 %v858, 7
      %v860 = vsub.s32 0, %v859
      %v861 = vrot.slane %v856, %v860
      %v863 = vpack.i.b16 %v854, %v854
      %v865 = vlaneseq
      %v866 = vshrl.u32 %v865, 7
      %v867 = vsub.s32 0, %v866
      %v868 = vrot.slane %v863, %v867
      %871 = vrot.lane.b32.xlu0 %v861, 73
      %v872 = vpop.permute.xlu0 %871
      %873 = vrot.lane.b32.xlu0 %v868, 73
      %v874 = vpop.permute.xlu0 %873
      %v875 = vsel %vm347, %v872, %v874
      %v879 = vmul.bf16 %v843, %v872
      %v880 = vmul.bf16 %v844, %v875
      %v881 = vmul.bf16 %v845, %v874
      %v882 = vmul.bf16 %v846, %v872
      %v883 = vmul.bf16 %v847, %v875
      %v884 = vmul.bf16 %v848, %v874
      %891 = vrot.lane.b32.xlu0 %v879, 55
      %v892 = vpop.permute.xlu0 %891
      %893 = vrot.lane.b32.xlu0 %v880, 55
      %v894 = vpop.permute.xlu0 %893
      %895 = vrot.lane.b32.xlu0 %v881, 55
      %v896 = vpop.permute.xlu0 %895
      %897 = vrot.lane.b32.xlu0 %v882, 55
      %v898 = vpop.permute.xlu0 %897
      %899 = vrot.lane.b32.xlu0 %v883, 55
      %v900 = vpop.permute.xlu0 %899
      %901 = vrot.lane.b32.xlu0 %v884, 55
      %v902 = vpop.permute.xlu0 %901
      %v903 = vsel %vm318, %v892, %v894
      %v904 = vsel %vm318, %v894, %v896
      %v905 = vsel %vm318, %v898, %v900
      %v906 = vsel %vm318, %v900, %v902
      %911 = vst [vmem:[#allocation4 + $0x100] sm:$0xff] %v903
      %912 = vst [vmem:[#allocation4 + $0x108] sm:$0xff] %v904
      %913 = vst [vmem:[#allocation4 + $0x110] sm:$0xff] %v905
      %914 = vst [vmem:[#allocation4 + $0x118] sm:$0xff] %v906
      %v915 = vld [vmem:[#allocation2] sm:$0xff]
      %v916 = vld [vmem:[#allocation2 + $0x8] sm:$0xff]
      %v917 = vld [vmem:[#allocation2 + $0x10] sm:$0xff]
      %v918 = vld [vmem:[#allocation2 + $0x20] sm:$0xff]
      %v919 = vld [vmem:[#allocation2 + $0x28] sm:$0xff]
      %v920 = vld [vmem:[#allocation2 + $0x30] sm:$0xff]
      %v921 = vld [vmem:[%s4] sm:$0x11]
      %v923 = vunpack.c.l.b16 %v921
      %v924 = vunpack.c.h.b16 %v921
      %v925 = vpack.c.b16 %v923, %v923
      %v926 = vpack.c.b16 %v924, %v924
      %v928 = vpack.i.b16 %v925, %v925
      %v930 = vlaneseq
      %v931 = vshrl.u32 %v930, 7
      %v932 = vsub.s32 0, %v931
      %v933 = vrot.slane %v928, %v932
      %v935 = vpack.i.b16 %v926, %v926
      %v937 = vlaneseq
      %v938 = vshrl.u32 %v937, 7
      %v939 = vsub.s32 0, %v938
      %v940 = vrot.slane %v935, %v939
      %943 = vrot.lane.b32.xlu0 %v933, 119
      %v944 = vpop.permute.xlu0 %943
      %945 = vrot.lane.b32.xlu0 %v940, 119
      %v946 = vpop.permute.xlu0 %945
      %vm947 = vcmask 973824
      %v948 = vsel %vm947, %v944, %v946
      %v952 = vmul.bf16 %v915, %v944
      %v953 = vmul.bf16 %v916, %v948
      %v954 = vmul.bf16 %v917, %v946
      %v955 = vmul.bf16 %v918, %v944
      %v956 = vmul.bf16 %v919, %v948
      %v957 = vmul.bf16 %v920, %v946
      %964 = vrot.lane.b32.xlu0 %v952, 9
      %v965 = vpop.permute.xlu0 %964
      %966 = vrot.lane.b32.xlu0 %v953, 9
      %v967 = vpop.permute.xlu0 %966
      %968 = vrot.lane.b32.xlu0 %v954, 9
      %v969 = vpop.permute.xlu0 %968
      %970 = vrot.lane.b32.xlu0 %v955, 9
      %v971 = vpop.permute.xlu0 %970
      %972 = vrot.lane.b32.xlu0 %v956, 9
      %v973 = vpop.permute.xlu0 %972
      %974 = vrot.lane.b32.xlu0 %v957, 9
      %v975 = vpop.permute.xlu0 %974
      %vm976 = vcmask 72704
      %v977 = vsel %vm976, %v965, %v967
      %v978 = vsel %vm976, %v967, %v969
      %v979 = vsel %vm976, %v971, %v973
      %v980 = vsel %vm976, %v973, %v975
      %985 = vst [vmem:[#allocation4 + $0x120] sm:$0xff] %v977
      %986 = vst [vmem:[#allocation4 + $0x128] sm:$0xff] %v978
      %987 = vst [vmem:[#allocation4 + $0x130] sm:$0xff] %v979
      %988 = vst [vmem:[#allocation4 + $0x138] sm:$0xff] %v980
      %v989 = vld [vmem:[#allocation2] sm:$0xff]
      %v990 = vld [vmem:[#allocation2 + $0x8] sm:$0xff]
      %v991 = vld [vmem:[#allocation2 + $0x10] sm:$0xff]
      %v992 = vld [vmem:[#allocation2 + $0x20] sm:$0xff]
      %v993 = vld [vmem:[#allocation2 + $0x28] sm:$0xff]
      %v994 = vld [vmem:[#allocation2 + $0x30] sm:$0xff]
      %v995 = vld [vmem:[%s4] sm:$0x11]
      %v997 = vunpack.c.l.b16 %v995
      %v998 = vunpack.c.h.b16 %v995
      %v999 = vpack.c.b16 %v997, %v997
      %v1000 = vpack.c.b16 %v998, %v998
      %v1002 = vshrl.u32 %v999, 16
      %v1003 = vpack.i.b16 %v1002, %v1002
      %v1005 = vlaneseq
      %v1006 = vshrl.u32 %v1005, 7
      %v1007 = vsub.s32 0, %v1006
      %v1008 = vrot.slane %v1003, %v1007
      %v1010 = vshrl.u32 %v1000, 16
      %v1011 = vpack.i.b16 %v1010, %v1010
      %v1013 = vlaneseq
      %v1014 = vshrl.u32 %v1013, 7
      %v1015 = vsub.s32 0, %v1014
      %v1016 = vrot.slane %v1011, %v1015
      %1019 = vrot.lane.b32.xlu0 %v1008, 120
      %v1020 = vpop.permute.xlu0 %1019
      %1021 = vrot.lane.b32.xlu0 %v1016, 120
      %v1022 = vpop.permute.xlu0 %1021
      %vm1023 = vcmask 982016
      %v1024 = vsel %vm1023, %v1020, %v1022
      %v1028 = vmul.bf16 %v989, %v1020
      %v1029 = vmul.bf16 %v990, %v1024
      %v1030 = vmul.bf16 %v991, %v1022
      %v1031 = vmul.bf16 %v992, %v1020
      %v1032 = vmul.bf16 %v993, %v1024
      %v1033 = vmul.bf16 %v994, %v1022
      %1040 = vrot.lane.b32.xlu0 %v1028, 8
      %v1041 = vpop.permute.xlu0 %1040
      %1042 = vrot.lane.b32.xlu0 %v1029, 8
      %v1043 = vpop.permute.xlu0 %1042
      %1044 = vrot.lane.b32.xlu0 %v1030, 8
      %v1045 = vpop.permute.xlu0 %1044
      %1046 = vrot.lane.b32.xlu0 %v1031, 8
      %v1047 = vpop.permute.xlu0 %1046
      %1048 = vrot.lane.b32.xlu0 %v1032, 8
      %v1049 = vpop.permute.xlu0 %1048
      %1050 = vrot.lane.b32.xlu0 %v1033, 8
      %v1051 = vpop.permute.xlu0 %1050
      %vm1052 = vcmask 64512
      %v1053 = vsel %vm1052, %v1041, %v1043
      %v1054 = vsel %vm1052, %v1043, %v1045
      %v1055 = vsel %vm1052, %v1047, %v1049
      %v1056 = vsel %vm1052, %v1049, %v1051
      %1061 = vst [vmem:[#allocation4 + $0x140] sm:$0xff] %v1053
      %1062 = vst [vmem:[#allocation4 + $0x148] sm:$0xff] %v1054
      %1063 = vst [vmem:[#allocation4 + $0x150] sm:$0xff] %v1055
      %1064 = vst [vmem:[#allocation4 + $0x158] sm:$0xff] %v1056
      %v1065 = vld [vmem:[#allocation2] sm:$0xff]
      %v1066 = vld [vmem:[#allocation2 + $0x8] sm:$0xff]
      %v1067 = vld [vmem:[#allocation2 + $0x10] sm:$0xff]
      %v1068 = vld [vmem:[#allocation2 + $0x20] sm:$0xff]
      %v1069 = vld [vmem:[#allocation2 + $0x28] sm:$0xff]
      %v1070 = vld [vmem:[#allocation2 + $0x30] sm:$0xff]
      %v1071 = vld [vmem:[%s4] sm:$0x22]
      %v1073 = vunpack.c.l.b16 %v1071
      %v1074 = vunpack.c.h.b16 %v1071
      %v1075 = vpack.c.b16 %v1073, %v1073
      %v1076 = vpack.c.b16 %v1074, %v1074
      %v1078 = vpack.i.b16 %v1075, %v1075
      %v1080 = vlaneseq
      %v1081 = vshrl.u32 %v1080, 7
      %v1082 = vsub.s32 1, %v1081
      %v1083 = vrot.slane %v1078, %v1082
      %v1085 = vpack.i.b16 %v1076, %v1076
      %v1087 = vlaneseq
      %v1088 = vshrl.u32 %v1087, 7
      %v1089 = vsub.s32 1, %v1088
      %v1090 = vrot.slane %v1085, %v1089
      %1093 = vrot.lane.b32.xlu0 %v1083, 121
      %v1094 = vpop.permute.xlu0 %1093
      %1095 = vrot.lane.b32.xlu0 %v1090, 121
      %v1096 = vpop.permute.xlu0 %1095
      %vm1097 = vcmask 990208
      %v1098 = vsel %vm1097, %v1094, %v1096
      %v1102 = vmul.bf16 %v1065, %v1094
      %v1103 = vmul.bf16 %v1066, %v1098
      %v1104 = vmul.bf16 %v1067, %v1096
      %v1105 = vmul.bf16 %v1068, %v1094
      %v1106 = vmul.bf16 %v1069, %v1098
      %v1107 = vmul.bf16 %v1070, %v1096
      %1114 = vrot.lane.b32.xlu0 %v1102, 7
      %v1115 = vpop.permute.xlu0 %1114
      %1116 = vrot.lane.b32.xlu0 %v1103, 7
      %v1117 = vpop.permute.xlu0 %1116
      %1118 = vrot.lane.b32.xlu0 %v1104, 7
      %v1119 = vpop.permute.xlu0 %1118
      %1120 = vrot.lane.b32.xlu0 %v1105, 7
      %v1121 = vpop.permute.xlu0 %1120
      %1122 = vrot.lane.b32.xlu0 %v1106, 7
      %v1123 = vpop.permute.xlu0 %1122
      %1124 = vrot.lane.b32.xlu0 %v1107, 7
      %v1125 = vpop.permute.xlu0 %1124
      %vm1126 = vcmask 56320
      %v1127 = vsel %vm1126, %v1115, %v1117
      %v1128 = vsel %vm1126, %v1117, %v1119
      %v1129 = vsel %vm1126, %v1121, %v1123
      %v1130 = vsel %vm1126, %v1123, %v1125
      %1135 = vst [vmem:[#allocation4 + $0x160] sm:$0xff] %v1127
      %1136 = vst [vmem:[#allocation4 + $0x168] sm:$0xff] %v1128
      %1137 = vst [vmem:[#allocation4 + $0x170] sm:$0xff] %v1129
      %1138 = vst [vmem:[#allocation4 + $0x178] sm:$0xff] %v1130
      %v1139 = vld [vmem:[#allocation2] sm:$0xff]
      %v1140 = vld [vmem:[#allocation2 + $0x8] sm:$0xff]
      %v1141 = vld [vmem:[#allocation2 + $0x10] sm:$0xff]
      %v1142 = vld [vmem:[#allocation2 + $0x20] sm:$0xff]
      %v1143 = vld [vmem:[#allocation2 + $0x28] sm:$0xff]
      %v1144 = vld [vmem:[#allocation2 + $0x30] sm:$0xff]
      %v1145 = vld [vmem:[%s4] sm:$0x22]
      %v1147 = vunpack.c.l.b16 %v1145
      %v1148 = vunpack.c.h.b16 %v1145
      %v1149 = vpack.c.b16 %v1147, %v1147
      %v1150 = vpack.c.b16 %v1148, %v1148
      %v1152 = vshrl.u32 %v1149, 16
      %v1153 = vpack.i.b16 %v1152, %v1152
      %v1155 = vlaneseq
      %v1156 = vshrl.u32 %v1155, 7
      %v1157 = vsub.s32 1, %v1156
      %v1158 = vrot.slane %v1153, %v1157
      %v1160 = vshrl.u32 %v1150, 16
      %v1161 = vpack.i.b16 %v1160, %v1160
      %v1163 = vlaneseq
      %v1164 = vshrl.u32 %v1163, 7
      %v1165 = vsub.s32 1, %v1164
      %v1166 = vrot.slane %v1161, %v1165
      %1169 = vrot.lane.b32.xlu0 %v1158, 127
      %v1170 = vpop.permute.xlu0 %1169
      %1171 = vrot.lane.b32.xlu0 %v1166, 127
      %v1172 = vpop.permute.xlu0 %1171
      %vm1173 = vcmask 1039360
      %v1174 = vsel %vm1173, %v1170, %v1172
      %v1178 = vmul.bf16 %v1139, %v1170
      %v1179 = vmul.bf16 %v1140, %v1174
      %v1180 = vmul.bf16 %v1141, %v1172
      %v1181 = vmul.bf16 %v1142, %v1170
      %v1182 = vmul.bf16 %v1143, %v1174
      %v1183 = vmul.bf16 %v1144, %v1172
      %1190 = vrot.lane.b32.xlu0 %v1178, 1
      %v1191 = vpop.permute.xlu0 %1190
      %1192 = vrot.lane.b32.xlu0 %v1179, 1
      %v1193 = vpop.permute.xlu0 %1192
      %1194 = vrot.lane.b32.xlu0 %v1180, 1
      %v1195 = vpop.permute.xlu0 %1194
      %1196 = vrot.lane.b32.xlu0 %v1181, 1
      %v1197 = vpop.permute.xlu0 %1196
      %1198 = vrot.lane.b32.xlu0 %v1182, 1
      %v1199 = vpop.permute.xlu0 %1198
      %1200 = vrot.lane.b32.xlu0 %v1183, 1
      %v1201 = vpop.permute.xlu0 %1200
      %vm1202 = vcmask 7168
      %v1203 = vsel %vm1202, %v1191, %v1193
      %v1204 = vsel %vm1202, %v1193, %v1195
      %v1205 = vsel %vm1202, %v1197, %v1199
      %v1206 = vsel %vm1202, %v1199, %v1201
      %1211 = vst [vmem:[#allocation4 + $0x180] sm:$0xff] %v1203
      %1212 = vst [vmem:[#allocation4 + $0x188] sm:$0xff] %v1204
      %1213 = vst [vmem:[#allocation4 + $0x190] sm:$0xff] %v1205
      %1214 = vst [vmem:[#allocation4 + $0x198] sm:$0xff] %v1206
      %v1215 = vld [vmem:[#allocation2 + $0x8] sm:$0xff]
      %v1216 = vld [vmem:[#allocation2 + $0x10] sm:$0xff]
      %v1217 = vld [vmem:[#allocation2 + $0x28] sm:$0xff]
      %v1218 = vld [vmem:[#allocation2 + $0x30] sm:$0xff]
      %1219 = vst [vmem:[#allocation4 + $0x1a0] sm:$0xff] %v1215
      %1220 = vst [vmem:[#allocation4 + $0x1a8] sm:$0xff] %v1216
      %1221 = vst [vmem:[#allocation4 + $0x1b0] sm:$0xff] %v1217
      %1222 = vst [vmem:[#allocation4 + $0x1b8] sm:$0xff] %v1218
      %v1223 = vld [vmem:[#allocation2 + $0x8] sm:$0xff]
      %v1224 = vld [vmem:[#allocation2 + $0x10] sm:$0xff]
      %v1225 = vld [vmem:[#allocation2 + $0x18] sm:$0xff]
      %v1226 = vld [vmem:[#allocation2 + $0x28] sm:$0xff]
      %v1227 = vld [vmem:[#allocation2 + $0x30] sm:$0xff]
      %v1228 = vld [vmem:[#allocation2 + $0x38] sm:$0xff]
      %v1229 = vld [vmem:[%s4] sm:$0x44]
      %v1231 = vunpack.c.l.b16 %v1229
      %v1232 = vunpack.c.h.b16 %v1229
      %v1233 = vpack.c.b16 %v1231, %v1231
      %v1234 = vpack.c.b16 %v1232, %v1232
      %v1236 = vshrl.u32 %v1233, 16
      %v1237 = vpack.i.b16 %v1236, %v1236
      %v1239 = vlaneseq
      %v1240 = vshrl.u32 %v1239, 7
      %v1241 = vsub.s32 2, %v1240
      %v1242 = vrot.slane %v1237, %v1241
      %v1244 = vshrl.u32 %v1234, 16
      %v1245 = vpack.i.b16 %v1244, %v1244
      %v1247 = vlaneseq
      %v1248 = vshrl.u32 %v1247, 7
      %v1249 = vsub.s32 2, %v1248
      %v1250 = vrot.slane %v1245, %v1249
      %1253 = vrot.lane.b32.xlu0 %v1242, 1
      %v1254 = vpop.permute.xlu0 %1253
      %1255 = vrot.lane.b32.xlu0 %v1250, 1
      %v1256 = vpop.permute.xlu0 %1255
      %v1257 = vsel %vm1202, %v1254, %v1256
      %v1261 = vmul.bf16 %v1223, %v1254
      %v1262 = vmul.bf16 %v1224, %v1257
      %v1263 = vmul.bf16 %v1225, %v1256
      %v1264 = vmul.bf16 %v1226, %v1254
      %v1265 = vmul.bf16 %v1227, %v1257
      %v1266 = vmul.bf16 %v1228, %v1256
      %1273 = vrot.lane.b32.xlu0 %v1261, 127
      %v1274 = vpop.permute.xlu0 %1273
      %1275 = vrot.lane.b32.xlu0 %v1262, 127
      %v1276 = vpop.permute.xlu0 %1275
      %1277 = vrot.lane.b32.xlu0 %v1263, 127
      %v1278 = vpop.permute.xlu0 %1277
      %1279 = vrot.lane.b32.xlu0 %v1264, 127
      %v1280 = vpop.permute.xlu0 %1279
      %1281 = vrot.lane.b32.xlu0 %v1265, 127
      %v1282 = vpop.permute.xlu0 %1281
      %1283 = vrot.lane.b32.xlu0 %v1266, 127
      %v1284 = vpop.permute.xlu0 %1283
      %v1285 = vsel %vm1173, %v1274, %v1276
      %v1286 = vsel %vm1173, %v1276, %v1278
      %v1287 = vsel %vm1173, %v1280, %v1282
      %v1288 = vsel %vm1173, %v1282, %v1284
      %1293 = vst [vmem:[#allocation4 + $0x1c0] sm:$0xff] %v1285
      %1294 = vst [vmem:[#allocation4 + $0x1c8] sm:$0xff] %v1286
      %1295 = vst [vmem:[#allocation4 + $0x1d0] sm:$0xff] %v1287
      %1296 = vst [vmem:[#allocation4 + $0x1d8] sm:$0xff] %v1288
      %v1297 = vld [vmem:[#allocation2 + $0x8] sm:$0xff]
      %v1298 = vld [vmem:[#allocation2 + $0x10] sm:$0xff]
      %v1299 = vld [vmem:[#allocation2 + $0x18] sm:$0xff]
      %v1300 = vld [vmem:[#allocation2 + $0x28] sm:$0xff]
      %v1301 = vld [vmem:[#allocation2 + $0x30] sm:$0xff]
      %v1302 = vld [vmem:[#allocation2 + $0x38] sm:$0xff]
      %v1303 = vld [vmem:[%s4] sm:$0x88]
      %v1305 = vunpack.c.l.b16 %v1303
      %v1306 = vunpack.c.h.b16 %v1303
      %v1307 = vpack.c.b16 %v1305, %v1305
      %v1308 = vpack.c.b16 %v1306, %v1306
      %v1310 = vpack.i.b16 %v1307, %v1307
      %v1312 = vlaneseq
      %v1313 = vshrl.u32 %v1312, 7
      %v1314 = vsub.s32 3, %v1313
      %v1315 = vrot.slane %v1310, %v1314
      %v1317 = vpack.i.b16 %v1308, %v1308
      %v1319 = vlaneseq
      %v1320 = vshrl.u32 %v1319, 7
      %v1321 = vsub.s32 3, %v1320
      %v1322 = vrot.slane %v1317, %v1321
      %1325 = vrot.lane.b32.xlu0 %v1315, 7
      %v1326 = vpop.permute.xlu0 %1325
      %1327 = vrot.lane.b32.xlu0 %v1322, 7
      %v1328 = vpop.permute.xlu0 %1327
      %v1329 = vsel %vm1126, %v1326, %v1328
      %v1333 = vmul.bf16 %v1297, %v1326
      %v1334 = vmul.bf16 %v1298, %v1329
      %v1335 = vmul.bf16 %v1299, %v1328
      %v1336 = vmul.bf16 %v1300, %v1326
      %v1337 = vmul.bf16 %v1301, %v1329
      %v1338 = vmul.bf16 %v1302, %v1328
      %1345 = vrot.lane.b32.xlu0 %v1333, 121
      %v1346 = vpop.permute.xlu0 %1345
      %1347 = vrot.lane.b32.xlu0 %v1334, 121
      %v1348 = vpop.permute.xlu0 %1347
      %1349 = vrot.lane.b32.xlu0 %v1335, 121
      %v1350 = vpop.permute.xlu0 %1349
      %1351 = vrot.lane.b32.xlu0 %v1336, 121
      %v1352 = vpop.permute.xlu0 %1351
      %1353 = vrot.lane.b32.xlu0 %v1337, 121
      %v1354 = vpop.permute.xlu0 %1353
      %1355 = vrot.lane.b32.xlu0 %v1338, 121
      %v1356 = vpop.permute.xlu0 %1355
      %v1357 = vsel %vm1097, %v1346, %v1348
      %v1358 = vsel %vm1097, %v1348, %v1350
      %v1359 = vsel %vm1097, %v1352, %v1354
      %v1360 = vsel %vm1097, %v1354, %v1356
      %1365 = vst [vmem:[#allocation4 + $0x1e0] sm:$0xff] %v1357
      %1366 = vst [vmem:[#allocation4 + $0x1e8] sm:$0xff] %v1358
      %1367 = vst [vmem:[#allocation4 + $0x1f0] sm:$0xff] %v1359
      %1368 = vst [vmem:[#allocation4 + $0x1f8] sm:$0xff] %v1360
      %v1369 = vld [vmem:[#allocation2 + $0x8] sm:$0xff]
      %v1370 = vld [vmem:[#allocation2 + $0x10] sm:$0xff]
      %v1371 = vld [vmem:[#allocation2 + $0x18] sm:$0xff]
      %v1372 = vld [vmem:[#allocation2 + $0x28] sm:$0xff]
      %v1373 = vld [vmem:[#allocation2 + $0x30] sm:$0xff]
      %v1374 = vld [vmem:[#allocation2 + $0x38] sm:$0xff]
      %v1375 = vld [vmem:[%s4] sm:$0x88]
      %v1377 = vunpack.c.l.b16 %v1375
      %v1378 = vunpack.c.h.b16 %v1375
      %v1379 = vpack.c.b16 %v1377, %v1377
      %v1380 = vpack.c.b16 %v1378, %v1378
      %v1382 = vshrl.u32 %v1379, 16
      %v1383 = vpack.i.b16 %v1382, %v1382
      %v1385 = vlaneseq
      %v1386 = vshrl.u32 %v1385, 7
      %v1387 = vsub.s32 3, %v1386
      %v1388 = vrot.slane %v1383, %v1387
      %v1390 = vshrl.u32 %v1380, 16
      %v1391 = vpack.i.b16 %v1390, %v1390
      %v1393 = vlaneseq
      %v1394 = vshrl.u32 %v1393, 7
      %v1395 = vsub.s32 3, %v1394
      %v1396 = vrot.slane %v1391, %v1395
      %1399 = vrot.lane.b32.xlu0 %v1388, 8
      %v1400 = vpop.permute.xlu0 %1399
      %1401 = vrot.lane.b32.xlu0 %v1396, 8
      %v1402 = vpop.permute.xlu0 %1401
      %v1403 = vsel %vm1052, %v1400, %v1402
      %v1407 = vmul.bf16 %v1369, %v1400
      %v1408 = vmul.bf16 %v1370, %v1403
      %v1409 = vmul.bf16 %v1371, %v1402
      %v1410 = vmul.bf16 %v1372, %v1400
      %v1411 = vmul.bf16 %v1373, %v1403
      %v1412 = vmul.bf16 %v1374, %v1402
      %1419 = vrot.lane.b32.xlu0 %v1407, 120
      %v1420 = vpop.permute.xlu0 %1419
      %1421 = vrot.lane.b32.xlu0 %v1408, 120
      %v1422 = vpop.permute.xlu0 %1421
      %1423 = vrot.lane.b32.xlu0 %v1409, 120
      %v1424 = vpop.permute.xlu0 %1423
      %1425 = vrot.lane.b32.xlu0 %v1410, 120
      %v1426 = vpop.permute.xlu0 %1425
      %1427 = vrot.lane.b32.xlu0 %v1411, 120
      %v1428 = vpop.permute.xlu0 %1427
      %1429 = vrot.lane.b32.xlu0 %v1412, 120
      %v1430 = vpop.permute.xlu0 %1429
      %v1431 = vsel %vm1023, %v1420, %v1422
      %v1432 = vsel %vm1023, %v1422, %v1424
      %v1433 = vsel %vm1023, %v1426, %v1428
      %v1434 = vsel %vm1023, %v1428, %v1430
      %1439 = vst [vmem:[#allocation4 + $0x200] sm:$0xff] %v1431
      %1440 = vst [vmem:[#allocation4 + $0x208] sm:$0xff] %v1432
      %1441 = vst [vmem:[#allocation4 + $0x210] sm:$0xff] %v1433
      %1442 = vst [vmem:[#allocation4 + $0x218] sm:$0xff] %v1434
      %v1443 = vld [vmem:[#allocation2 + $0x8] sm:$0xff]
      %v1444 = vld [vmem:[#allocation2 + $0x10] sm:$0xff]
      %v1445 = vld [vmem:[#allocation2 + $0x18] sm:$0xff]
      %v1446 = vld [vmem:[#allocation2 + $0x28] sm:$0xff]
      %v1447 = vld [vmem:[#allocation2 + $0x30] sm:$0xff]
      %v1448 = vld [vmem:[#allocation2 + $0x38] sm:$0xff]
      %v1449 = vld [vmem:[%s4 + $0x8] sm:$0x11]
      %v1451 = vunpack.c.l.b16 %v1449
      %v1452 = vunpack.c.h.b16 %v1449
      %v1453 = vpack.c.b16 %v1451, %v1451
      %v1454 = vpack.c.b16 %v1452, %v1452
      %v1456 = vpack.i.b16 %v1453, %v1453
      %v1458 = vlaneseq
      %v1459 = vshrl.u32 %v1458, 7
      %v1460 = vsub.s32 0, %v1459
      %v1461 = vrot.slane %v1456, %v1460
      %v1463 = vpack.i.b16 %v1454, %v1454
      %v1465 = vlaneseq
      %v1466 = vshrl.u32 %v1465, 7
      %v1467 = vsub.s32 0, %v1466
      %v1468 = vrot.slane %v1463, %v1467
      %1471 = vrot.lane.b32.xlu0 %v1461, 9
      %v1472 = vpop.permute.xlu0 %1471
      %1473 = vrot.lane.b32.xlu0 %v1468, 9
      %v1474 = vpop.permute.xlu0 %1473
      %v1475 = vsel %vm976, %v1472, %v1474
      %v1479 = vmul.bf16 %v1443, %v1472
      %v1480 = vmul.bf16 %v1444, %v1475
      %v1481 = vmul.bf16 %v1445, %v1474
      %v1482 = vmul.bf16 %v1446, %v1472
      %v1483 = vmul.bf16 %v1447, %v1475
      %v1484 = vmul.bf16 %v1448, %v1474
      %1491 = vrot.lane.b32.xlu0 %v1479, 119
      %v1492 = vpop.permute.xlu0 %1491
      %1493 = vrot.lane.b32.xlu0 %v1480, 119
      %v1494 = vpop.permute.xlu0 %1493
      %1495 = vrot.lane.b32.xlu0 %v1481, 119
      %v1496 = vpop.permute.xlu0 %1495
      %1497 = vrot.lane.b32.xlu0 %v1482, 119
      %v1498 = vpop.permute.xlu0 %1497
      %1499 = vrot.lane.b32.xlu0 %v1483, 119
      %v1500 = vpop.permute.xlu0 %1499
      %1501 = vrot.lane.b32.xlu0 %v1484, 119
      %v1502 = vpop.permute.xlu0 %1501
      %v1503 = vsel %vm947, %v1492, %v1494
      %v1504 = vsel %vm947, %v1494, %v1496
      %v1505 = vsel %vm947, %v1498, %v1500
      %v1506 = vsel %vm947, %v1500, %v1502
      %1511 = vst [vmem:[#allocation4 + $0x220] sm:$0xff] %v1503
      %1512 = vst [vmem:[#allocation4 + $0x228] sm:$0xff] %v1504
      %1513 = vst [vmem:[#allocation4 + $0x230] sm:$0xff] %v1505
      %1514 = vst [vmem:[#allocation4 + $0x238] sm:$0xff] %v1506
      %v1515 = vld [vmem:[#allocation2 + $0x8] sm:$0xff]
      %v1516 = vld [vmem:[#allocation2 + $0x10] sm:$0xff]
      %v1517 = vld [vmem:[#allocation2 + $0x18] sm:$0xff]
      %v1518 = vld [vmem:[#allocation2 + $0x28] sm:$0xff]
      %v1519 = vld [vmem:[#allocation2 + $0x30] sm:$0xff]
      %v1520 = vld [vmem:[#allocation2 + $0x38] sm:$0xff]
      %v1521 = vld [vmem:[%s4] sm:$0x11]
      %v1523 = vunpack.c.l.b16 %v1521
      %v1524 = vunpack.c.h.b16 %v1521
      %v1525 = vpack.c.b16 %v1523, %v1523
      %v1526 = vpack.c.b16 %v1524, %v1524
      %v1528 = vpack.i.b16 %v1525, %v1525
      %v1530 = vlaneseq
      %v1531 = vshrl.u32 %v1530, 7
      %v1532 = vsub.s32 0, %v1531
      %v1533 = vrot.slane %v1528, %v1532
      %v1535 = vpack.i.b16 %v1526, %v1526
      %v1537 = vlaneseq
      %v1538 = vshrl.u32 %v1537, 7
      %v1539 = vsub.s32 0, %v1538
      %v1540 = vrot.slane %v1535, %v1539
      %1543 = vrot.lane.b32.xlu0 %v1533, 55
      %v1544 = vpop.permute.xlu0 %1543
      %1545 = vrot.lane.b32.xlu0 %v1540, 55
      %v1546 = vpop.permute.xlu0 %1545
      %v1547 = vsel %vm318, %v1544, %v1546
      %v1551 = vmul.bf16 %v1515, %v1544
      %v1552 = vmul.bf16 %v1516, %v1547
      %v1553 = vmul.bf16 %v1517, %v1546
      %v1554 = vmul.bf16 %v1518, %v1544
      %v1555 = vmul.bf16 %v1519, %v1547
      %v1556 = vmul.bf16 %v1520, %v1546
      %1563 = vrot.lane.b32.xlu0 %v1551, 73
      %v1564 = vpop.permute.xlu0 %1563
      %1565 = vrot.lane.b32.xlu0 %v1552, 73
      %v1566 = vpop.permute.xlu0 %1565
      %1567 = vrot.lane.b32.xlu0 %v1553, 73
      %v1568 = vpop.permute.xlu0 %1567
      %1569 = vrot.lane.b32.xlu0 %v1554, 73
      %v1570 = vpop.permute.xlu0 %1569
      %1571 = vrot.lane.b32.xlu0 %v1555, 73
      %v1572 = vpop.permute.xlu0 %1571
      %1573 = vrot.lane.b32.xlu0 %v1556, 73
      %v1574 = vpop.permute.xlu0 %1573
      %v1575 = vsel %vm347, %v1564, %v1566
      %v1576 = vsel %vm347, %v1566, %v1568
      %v1577 = vsel %vm347, %v1570, %v1572
      %v1578 = vsel %vm347, %v1572, %v1574
      %1583 = vst [vmem:[#allocation4 + $0x240] sm:$0xff] %v1575
      %1584 = vst [vmem:[#allocation4 + $0x248] sm:$0xff] %v1576
      %1585 = vst [vmem:[#allocation4 + $0x250] sm:$0xff] %v1577
      %1586 = vst [vmem:[#allocation4 + $0x258] sm:$0xff] %v1578
      %v1587 = vld [vmem:[#allocation2 + $0x8] sm:$0xff]
      %v1588 = vld [vmem:[#allocation2 + $0x10] sm:$0xff]
      %v1589 = vld [vmem:[#allocation2 + $0x18] sm:$0xff]
      %v1590 = vld [vmem:[#allocation2 + $0x28] sm:$0xff]
      %v1591 = vld [vmem:[#allocation2 + $0x30] sm:$0xff]
      %v1592 = vld [vmem:[#allocation2 + $0x38] sm:$0xff]
      %v1593 = vld [vmem:[%s4] sm:$0x11]
      %v1595 = vunpack.c.l.b16 %v1593
      %v1596 = vunpack.c.h.b16 %v1593
      %v1597 = vpack.c.b16 %v1595, %v1595
      %v1598 = vpack.c.b16 %v1596, %v1596
      %v1600 = vshrl.u32 %v1597, 16
      %v1601 = vpack.i.b16 %v1600, %v1600
      %v1603 = vlaneseq
      %v1604 = vshrl.u32 %v1603, 7
      %v1605 = vsub.s32 0, %v1604
      %v1606 = vrot.slane %v1601, %v1605
      %v1608 = vshrl.u32 %v1598, 16
      %v1609 = vpack.i.b16 %v1608, %v1608
      %v1611 = vlaneseq
      %v1612 = vshrl.u32 %v1611, 7
      %v1613 = vsub.s32 0, %v1612
      %v1614 = vrot.slane %v1609, %v1613
      %1617 = vrot.lane.b32.xlu0 %v1606, 56
      %v1618 = vpop.permute.xlu0 %1617
      %1619 = vrot.lane.b32.xlu0 %v1614, 56
      %v1620 = vpop.permute.xlu0 %1619
      %v1621 = vsel %vm394, %v1618, %v1620
      %v1625 = vmul.bf16 %v1587, %v1618
      %v1626 = vmul.bf16 %v1588, %v1621
      %v1627 = vmul.bf16 %v1589, %v1620
      %v1628 = vmul.bf16 %v1590, %v1618
      %v1629 = vmul.bf16 %v1591, %v1621
      %v1630 = vmul.bf16 %v1592, %v1620
      %1637 = vrot.lane.b32.xlu0 %v1625, 72
      %v1638 = vpop.permute.xlu0 %1637
      %1639 = vrot.lane.b32.xlu0 %v1626, 72
      %v1640 = vpop.permute.xlu0 %1639
      %1641 = vrot.lane.b32.xlu0 %v1627, 72
      %v1642 = vpop.permute.xlu0 %1641
      %1643 = vrot.lane.b32.xlu0 %v1628, 72
      %v1644 = vpop.permute.xlu0 %1643
      %1645 = vrot.lane.b32.xlu0 %v1629, 72
      %v1646 = vpop.permute.xlu0 %1645
      %1647 = vrot.lane.b32.xlu0 %v1630, 72
      %v1648 = vpop.permute.xlu0 %1647
      %v1649 = vsel %vm423, %v1638, %v1640
      %v1650 = vsel %vm423, %v1640, %v1642
      %v1651 = vsel %vm423, %v1644, %v1646
      %v1652 = vsel %vm423, %v1646, %v1648
      %1657 = vst [vmem:[#allocation4 + $0x260] sm:$0xff] %v1649
      %1658 = vst [vmem:[#allocation4 + $0x268] sm:$0xff] %v1650
      %1659 = vst [vmem:[#allocation4 + $0x270] sm:$0xff] %v1651
      %1660 = vst [vmem:[#allocation4 + $0x278] sm:$0xff] %v1652
      %v1661 = vld [vmem:[#allocation2 + $0x8] sm:$0xff]
      %v1662 = vld [vmem:[#allocation2 + $0x10] sm:$0xff]
      %v1663 = vld [vmem:[#allocation2 + $0x18] sm:$0xff]
      %v1664 = vld [vmem:[#allocation2 + $0x28] sm:$0xff]
      %v1665 = vld [vmem:[#allocation2 + $0x30] sm:$0xff]
      %v1666 = vld [vmem:[#allocation2 + $0x38] sm:$0xff]
      %v1667 = vld [vmem:[%s4] sm:$0x22]
      %v1669 = vunpack.c.l.b16 %v1667
      %v1670 = vunpack.c.h.b16 %v1667
      %v1671 = vpack.c.b16 %v1669, %v1669
      %v1672 = vpack.c.b16 %v1670, %v1670
      %v1674 = vpack.i.b16 %v1671, %v1671
      %v1676 = vlaneseq
      %v1677 = vshrl.u32 %v1676, 7
      %v1678 = vsub.s32 1, %v1677
      %v1679 = vrot.slane %v1674, %v1678
      %v1681 = vpack.i.b16 %v1672, %v1672
      %v1683 = vlaneseq
      %v1684 = vshrl.u32 %v1683, 7
      %v1685 = vsub.s32 1, %v1684
      %v1686 = vrot.slane %v1681, %v1685
      %1689 = vrot.lane.b32.xlu0 %v1679, 57
      %v1690 = vpop.permute.xlu0 %1689
      %1691 = vrot.lane.b32.xlu0 %v1686, 57
      %v1692 = vpop.permute.xlu0 %1691
      %v1693 = vsel %vm468, %v1690, %v1692
      %v1697 = vmul.bf16 %v1661, %v1690
      %v1698 = vmul.bf16 %v1662, %v1693
      %v1699 = vmul.bf16 %v1663, %v1692
      %v1700 = vmul.bf16 %v1664, %v1690
      %v1701 = vmul.bf16 %v1665, %v1693
      %v1702 = vmul.bf16 %v1666, %v1692
      %1709 = vrot.lane.b32.xlu0 %v1697, 71
      %v1710 = vpop.permute.xlu0 %1709
      %1711 = vrot.lane.b32.xlu0 %v1698, 71
      %v1712 = vpop.permute.xlu0 %1711
      %1713 = vrot.lane.b32.xlu0 %v1699, 71
      %v1714 = vpop.permute.xlu0 %1713
      %1715 = vrot.lane.b32.xlu0 %v1700, 71
      %v1716 = vpop.permute.xlu0 %1715
      %1717 = vrot.lane.b32.xlu0 %v1701, 71
      %v1718 = vpop.permute.xlu0 %1717
      %1719 = vrot.lane.b32.xlu0 %v1702, 71
      %v1720 = vpop.permute.xlu0 %1719
      %v1721 = vsel %vm497, %v1710, %v1712
      %v1722 = vsel %vm497, %v1712, %v1714
      %v1723 = vsel %vm497, %v1716, %v1718
      %v1724 = vsel %vm497, %v1718, %v1720
      %1729 = vst [vmem:[#allocation4 + $0x280] sm:$0xff] %v1721
      %1730 = vst [vmem:[#allocation4 + $0x288] sm:$0xff] %v1722
      %1731 = vst [vmem:[#allocation4 + $0x290] sm:$0xff] %v1723
      %1732 = vst [vmem:[#allocation4 + $0x298] sm:$0xff] %v1724
      %v1733 = vld [vmem:[#allocation2 + $0x8] sm:$0xff]
      %v1734 = vld [vmem:[#allocation2 + $0x10] sm:$0xff]
      %v1735 = vld [vmem:[#allocation2 + $0x18] sm:$0xff]
      %v1736 = vld [vmem:[#allocation2 + $0x28] sm:$0xff]
      %v1737 = vld [vmem:[#allocation2 + $0x30] sm:$0xff]
      %v1738 = vld [vmem:[#allocation2 + $0x38] sm:$0xff]
      %v1739 = vld [vmem:[%s4] sm:$0x22]
      %v1741 = vunpack.c.l.b16 %v1739
      %v1742 = vunpack.c.h.b16 %v1739
      %v1743 = vpack.c.b16 %v1741, %v1741
      %v1744 = vpack.c.b16 %v1742, %v1742
      %v1746 = vshrl.u32 %v1743, 16
      %v1747 = vpack.i.b16 %v1746, %v1746
      %v1749 = vlaneseq
      %v1750 = vshrl.u32 %v1749, 7
      %v1751 = vsub.s32 1, %v1750
      %v1752 = vrot.slane %v1747, %v1751
      %v1754 = vshrl.u32 %v1744, 16
      %v1755 = vpack.i.b16 %v1754, %v1754
      %v1757 = vlaneseq
      %v1758 = vshrl.u32 %v1757, 7
      %v1759 = vsub.s32 1, %v1758
      %v1760 = vrot.slane %v1755, %v1759
      %1763 = vrot.lane.b32.xlu0 %v1752, 63
      %v1764 = vpop.permute.xlu0 %1763
      %1765 = vrot.lane.b32.xlu0 %v1760, 63
      %v1766 = vpop.permute.xlu0 %1765
      %v1767 = vsel %vm544, %v1764, %v1766
      %v1771 = vmul.bf16 %v1733, %v1764
      %v1772 = vmul.bf16 %v1734, %v1767
      %v1773 = vmul.bf16 %v1735, %v1766
      %v1774 = vmul.bf16 %v1736, %v1764
      %v1775 = vmul.bf16 %v1737, %v1767
      %v1776 = vmul.bf16 %v1738, %v1766
      %1783 = vrot.lane.b32.xlu0 %v1771, 65
      %v1784 = vpop.permute.xlu0 %1783
      %1785 = vrot.lane.b32.xlu0 %v1772, 65
      %v1786 = vpop.permute.xlu0 %1785
      %1787 = vrot.lane.b32.xlu0 %v1773, 65
      %v1788 = vpop.permute.xlu0 %1787
      %1789 = vrot.lane.b32.xlu0 %v1774, 65
      %v1790 = vpop.permute.xlu0 %1789
      %1791 = vrot.lane.b32.xlu0 %v1775, 65
      %v1792 = vpop.permute.xlu0 %1791
      %1793 = vrot.lane.b32.xlu0 %v1776, 65
      %v1794 = vpop.permute.xlu0 %1793
      %v1795 = vsel %vm573, %v1784, %v1786
      %v1796 = vsel %vm573, %v1786, %v1788
      %v1797 = vsel %vm573, %v1790, %v1792
      %v1798 = vsel %vm573, %v1792, %v1794
      %1803 = vst [vmem:[#allocation4 + $0x2a0] sm:$0xff] %v1795
      %1804 = vst [vmem:[#allocation4 + $0x2a8] sm:$0xff] %v1796
      %1805 = vst [vmem:[#allocation4 + $0x2b0] sm:$0xff] %v1797
      %1806 = vst [vmem:[#allocation4 + $0x2b8] sm:$0xff] %v1798
      %v1807 = vld [vmem:[#allocation2 + $0x8] sm:$0xff]
      %v1808 = vld [vmem:[#allocation2 + $0x10] sm:$0xff]
      %v1809 = vld [vmem:[#allocation2 + $0x18] sm:$0xff]
      %v1810 = vld [vmem:[#allocation2 + $0x28] sm:$0xff]
      %v1811 = vld [vmem:[#allocation2 + $0x30] sm:$0xff]
      %v1812 = vld [vmem:[#allocation2 + $0x38] sm:$0xff]
      %1819 = vrot.lane.b32.xlu0 %v1807, 64
      %v1820 = vpop.permute.xlu0 %1819
      %1821 = vrot.lane.b32.xlu0 %v1808, 64
      %v1822 = vpop.permute.xlu0 %1821
      %1823 = vrot.lane.b32.xlu0 %v1809, 64
      %v1824 = vpop.permute.xlu0 %1823
      %1825 = vrot.lane.b32.xlu0 %v1810, 64
      %v1826 = vpop.permute.xlu0 %1825
      %1827 = vrot.lane.b32.xlu0 %v1811, 64
      %v1828 = vpop.permute.xlu0 %1827
      %1829 = vrot.lane.b32.xlu0 %v1812, 64
      %v1830 = vpop.permute.xlu0 %1829
      %v1831 = vsel %vm610, %v1820, %v1822
      %v1832 = vsel %vm610, %v1822, %v1824
      %v1833 = vsel %vm610, %v1826, %v1828
      %v1834 = vsel %vm610, %v1828, %v1830
      %1839 = vst [vmem:[#allocation4 + $0x2c0] sm:$0xff] %v1831
      %1840 = vst [vmem:[#allocation4 + $0x2c8] sm:$0xff] %v1832
      %1841 = vst [vmem:[#allocation4 + $0x2d0] sm:$0xff] %v1833
      %1842 = vst [vmem:[#allocation4 + $0x2d8] sm:$0xff] %v1834
      %v1843 = vld [vmem:[#allocation2 + $0x8] sm:$0xff]
      %v1844 = vld [vmem:[#allocation2 + $0x10] sm:$0xff]
      %v1845 = vld [vmem:[#allocation2 + $0x18] sm:$0xff]
      %v1846 = vld [vmem:[#allocation2 + $0x28] sm:$0xff]
      %v1847 = vld [vmem:[#allocation2 + $0x30] sm:$0xff]
      %v1848 = vld [vmem:[#allocation2 + $0x38] sm:$0xff]
      %v1849 = vld [vmem:[%s4] sm:$0x44]
      %v1851 = vunpack.c.l.b16 %v1849
      %v1852 = vunpack.c.h.b16 %v1849
      %v1853 = vpack.c.b16 %v1851, %v1851
      %v1854 = vpack.c.b16 %v1852, %v1852
      %v1856 = vshrl.u32 %v1853, 16
      %v1857 = vpack.i.b16 %v1856, %v1856
      %v1859 = vlaneseq
      %v1860 = vshrl.u32 %v1859, 7
      %v1861 = vsub.s32 2, %v1860
      %v1862 = vrot.slane %v1857, %v1861
      %v1864 = vshrl.u32 %v1854, 16
      %v1865 = vpack.i.b16 %v1864, %v1864
      %v1867 = vlaneseq
      %v1868 = vshrl.u32 %v1867, 7
      %v1869 = vsub.s32 2, %v1868
      %v1870 = vrot.slane %v1865, %v1869
      %1873 = vrot.lane.b32.xlu0 %v1862, 65
      %v1874 = vpop.permute.xlu0 %1873
      %1875 = vrot.lane.b32.xlu0 %v1870, 65
      %v1876 = vpop.permute.xlu0 %1875
      %v1877 = vsel %vm573, %v1874, %v1876
      %v1881 = vmul.bf16 %v1843, %v1874
      %v1882 = vmul.bf16 %v1844, %v1877
      %v1883 = vmul.bf16 %v1845, %v1876
      %v1884 = vmul.bf16 %v1846, %v1874
      %v1885 = vmul.bf16 %v1847, %v1877
      %v1886 = vmul.bf16 %v1848, %v1876
      %1893 = vrot.lane.b32.xlu0 %v1881, 63
      %v1894 = vpop.permute.xlu0 %1893
      %1895 = vrot.lane.b32.xlu0 %v1882, 63
      %v1896 = vpop.permute.xlu0 %1895
      %1897 = vrot.lane.b32.xlu0 %v1883, 63
      %v1898 = vpop.permute.xlu0 %1897
      %1899 = vrot.lane.b32.xlu0 %v1884, 63
      %v1900 = vpop.permute.xlu0 %1899
      %1901 = vrot.lane.b32.xlu0 %v1885, 63
      %v1902 = vpop.permute.xlu0 %1901
      %1903 = vrot.lane.b32.xlu0 %v1886, 63
      %v1904 = vpop.permute.xlu0 %1903
      %v1905 = vsel %vm544, %v1894, %v1896
      %v1906 = vsel %vm544, %v1896, %v1898
      %v1907 = vsel %vm544, %v1900, %v1902
      %v1908 = vsel %vm544, %v1902, %v1904
      %1913 = vst [vmem:[#allocation4 + $0x2e0] sm:$0xff] %v1905
      %1914 = vst [vmem:[#allocation4 + $0x2e8] sm:$0xff] %v1906
      %1915 = vst [vmem:[#allocation4 + $0x2f0] sm:$0xff] %v1907
      %1916 = vst [vmem:[#allocation4 + $0x2f8] sm:$0xff] %v1908
      %v1917 = vld [vmem:[#allocation2 + $0x8] sm:$0xff]
      %v1918 = vld [vmem:[#allocation2 + $0x10] sm:$0xff]
      %v1919 = vld [vmem:[#allocation2 + $0x18] sm:$0xff]
      %v1920 = vld [vmem:[#allocation2 + $0x28] sm:$0xff]
      %v1921 = vld [vmem:[#allocation2 + $0x30] sm:$0xff]
      %v1922 = vld [vmem:[#allocation2 + $0x38] sm:$0xff]
      %v1923 = vld [vmem:[%s4] sm:$0x88]
      %v1925 = vunpack.c.l.b16 %v1923
      %v1926 = vunpack.c.h.b16 %v1923
      %v1927 = vpack.c.b16 %v1925, %v1925
      %v1928 = vpack.c.b16 %v1926, %v1926
      %v1930 = vpack.i.b16 %v1927, %v1927
      %v1932 = vlaneseq
      %v1933 = vshrl.u32 %v1932, 7
      %v1934 = vsub.s32 3, %v1933
      %v1935 = vrot.slane %v1930, %v1934
      %v1937 = vpack.i.b16 %v1928, %v1928
      %v1939 = vlaneseq
      %v1940 = vshrl.u32 %v1939, 7
      %v1941 = vsub.s32 3, %v1940
      %v1942 = vrot.slane %v1937, %v1941
      %1945 = vrot.lane.b32.xlu0 %v1935, 71
      %v1946 = vpop.permute.xlu0 %1945
      %1947 = vrot.lane.b32.xlu0 %v1942, 71
      %v1948 = vpop.permute.xlu0 %1947
      %v1949 = vsel %vm497, %v1946, %v1948
      %v1953 = vmul.bf16 %v1917, %v1946
      %v1954 = vmul.bf16 %v1918, %v1949
      %v1955 = vmul.bf16 %v1919, %v1948
      %v1956 = vmul.bf16 %v1920, %v1946
      %v1957 = vmul.bf16 %v1921, %v1949
      %v1958 = vmul.bf16 %v1922, %v1948
      %1965 = vrot.lane.b32.xlu0 %v1953, 57
      %v1966 = vpop.permute.xlu0 %1965
      %1967 = vrot.lane.b32.xlu0 %v1954, 57
      %v1968 = vpop.permute.xlu0 %1967
      %1969 = vrot.lane.b32.xlu0 %v1955, 57
      %v1970 = vpop.permute.xlu0 %1969
      %1971 = vrot.lane.b32.xlu0 %v1956, 57
      %v1972 = vpop.permute.xlu0 %1971
      %1973 = vrot.lane.b32.xlu0 %v1957, 57
      %v1974 = vpop.permute.xlu0 %1973
      %1975 = vrot.lane.b32.xlu0 %v1958, 57
      %v1976 = vpop.permute.xlu0 %1975
      %v1977 = vsel %vm468, %v1966, %v1968
      %v1978 = vsel %vm468, %v1968, %v1970
      %v1979 = vsel %vm468, %v1972, %v1974
      %v1980 = vsel %vm468, %v1974, %v1976
      %1985 = vst [vmem:[#allocation4 + $0x300] sm:$0xff] %v1977
      %1986 = vst [vmem:[#allocation4 + $0x308] sm:$0xff] %v1978
      %1987 = vst [vmem:[#allocation4 + $0x310] sm:$0xff] %v1979
      %1988 = vst [vmem:[#allocation4 + $0x318] sm:$0xff] %v1980
      %v1989 = vld [vmem:[#allocation2 + $0x8] sm:$0xff]
      %v1990 = vld [vmem:[#allocation2 + $0x10] sm:$0xff]
      %v1991 = vld [vmem:[#allocation2 + $0x18] sm:$0xff]
      %v1992 = vld [vmem:[#allocation2 + $0x28] sm:$0xff]
      %v1993 = vld [vmem:[#allocation2 + $0x30] sm:$0xff]
      %v1994 = vld [vmem:[#allocation2 + $0x38] sm:$0xff]
      %v1995 = vld [vmem:[%s4] sm:$0x88]
      %v1997 = vunpack.c.l.b16 %v1995
      %v1998 = vunpack.c.h.b16 %v1995
      %v1999 = vpack.c.b16 %v1997, %v1997
      %v2000 = vpack.c.b16 %v1998, %v1998
      %v2002 = vshrl.u32 %v1999, 16
      %v2003 = vpack.i.b16 %v2002, %v2002
      %v2005 = vlaneseq
      %v2006 = vshrl.u32 %v2005, 7
      %v2007 = vsub.s32 3, %v2006
      %v2008 = vrot.slane %v2003, %v2007
      %v2010 = vshrl.u32 %v2000, 16
      %v2011 = vpack.i.b16 %v2010, %v2010
      %v2013 = vlaneseq
      %v2014 = vshrl.u32 %v2013, 7
      %v2015 = vsub.s32 3, %v2014
      %v2016 = vrot.slane %v2011, %v2015
      %2019 = vrot.lane.b32.xlu0 %v2008, 72
      %v2020 = vpop.permute.xlu0 %2019
      %2021 = vrot.lane.b32.xlu0 %v2016, 72
      %v2022 = vpop.permute.xlu0 %2021
      %v2023 = vsel %vm423, %v2020, %v2022
      %v2027 = vmul.bf16 %v1989, %v2020
      %v2028 = vmul.bf16 %v1990, %v2023
      %v2029 = vmul.bf16 %v1991, %v2022
      %v2030 = vmul.bf16 %v1992, %v2020
      %v2031 = vmul.bf16 %v1993, %v2023
      %v2032 = vmul.bf16 %v1994, %v2022
      %2039 = vrot.lane.b32.xlu0 %v2027, 56
      %v2040 = vpop.permute.xlu0 %2039
      %2041 = vrot.lane.b32.xlu0 %v2028, 56
      %v2042 = vpop.permute.xlu0 %2041
      %2043 = vrot.lane.b32.xlu0 %v2029, 56
      %v2044 = vpop.permute.xlu0 %2043
      %2045 = vrot.lane.b32.xlu0 %v2030, 56
      %v2046 = vpop.permute.xlu0 %2045
      %2047 = vrot.lane.b32.xlu0 %v2031, 56
      %v2048 = vpop.permute.xlu0 %2047
      %2049 = vrot.lane.b32.xlu0 %v2032, 56
      %v2050 = vpop.permute.xlu0 %2049
      %v2051 = vsel %vm394, %v2040, %v2042
      %v2052 = vsel %vm394, %v2042, %v2044
      %v2053 = vsel %vm394, %v2046, %v2048
      %v2054 = vsel %vm394, %v2048, %v2050
      %2059 = vst [vmem:[#allocation4 + $0x320] sm:$0xff] %v2051
      %2060 = vst [vmem:[#allocation4 + $0x328] sm:$0xff] %v2052
      %2061 = vst [vmem:[#allocation4 + $0x330] sm:$0xff] %v2053
      %2062 = vst [vmem:[#allocation4 + $0x338] sm:$0xff] %v2054
      %v2063 = vld [vmem:[#allocation2 + $0x8] sm:$0xff]
      %v2064 = vld [vmem:[#allocation2 + $0x10] sm:$0xff]
      %v2065 = vld [vmem:[#allocation2 + $0x18] sm:$0xff]
      %v2066 = vld [vmem:[#allocation2 + $0x28] sm:$0xff]
      %v2067 = vld [vmem:[#allocation2 + $0x30] sm:$0xff]
      %v2068 = vld [vmem:[#allocation2 + $0x38] sm:$0xff]
      %v2069 = vld [vmem:[%s4 + $0x8] sm:$0x11]
      %v2071 = vunpack.c.l.b16 %v2069
      %v2072 = vunpack.c.h.b16 %v2069
      %v2073 = vpack.c.b16 %v2071, %v2071
      %v2074 = vpack.c.b16 %v2072, %v2072
      %v2076 = vpack.i.b16 %v2073, %v2073
      %v2078 = vlaneseq
      %v2079 = vshrl.u32 %v2078, 7
      %v2080 = vsub.s32 0, %v2079
      %v2081 = vrot.slane %v2076, %v2080
      %v2083 = vpack.i.b16 %v2074, %v2074
      %v2085 = vlaneseq
      %v2086 = vshrl.u32 %v2085, 7
      %v2087 = vsub.s32 0, %v2086
      %v2088 = vrot.slane %v2083, %v2087
      %2091 = vrot.lane.b32.xlu0 %v2081, 73
      %v2092 = vpop.permute.xlu0 %2091
      %2093 = vrot.lane.b32.xlu0 %v2088, 73
      %v2094 = vpop.permute.xlu0 %2093
      %v2095 = vsel %vm347, %v2092, %v2094
      %v2099 = vmul.bf16 %v2063, %v2092
      %v2100 = vmul.bf16 %v2064, %v2095
      %v2101 = vmul.bf16 %v2065, %v2094
      %v2102 = vmul.bf16 %v2066, %v2092
      %v2103 = vmul.bf16 %v2067, %v2095
      %v2104 = vmul.bf16 %v2068, %v2094
      %2111 = vrot.lane.b32.xlu0 %v2099, 55
      %v2112 = vpop.permute.xlu0 %2111
      %2113 = vrot.lane.b32.xlu0 %v2100, 55
      %v2114 = vpop.permute.xlu0 %2113
      %2115 = vrot.lane.b32.xlu0 %v2101, 55
      %v2116 = vpop.permute.xlu0 %2115
      %2117 = vrot.lane.b32.xlu0 %v2102, 55
      %v2118 = vpop.permute.xlu0 %2117
      %2119 = vrot.lane.b32.xlu0 %v2103, 55
      %v2120 = vpop.permute.xlu0 %2119
      %2121 = vrot.lane.b32.xlu0 %v2104, 55
      %v2122 = vpop.permute.xlu0 %2121
      %v2123 = vsel %vm318, %v2112, %v2114
      %v2124 = vsel %vm318, %v2114, %v2116
      %v2125 = vsel %vm318, %v2118, %v2120
      %v2126 = vsel %vm318, %v2120, %v2122
      %2131 = vst [vmem:[#allocation4 + $0x340] sm:$0xff] %v2123
      %2132 = vst [vmem:[#allocation4 + $0x348] sm:$0xff] %v2124
      %2133 = vst [vmem:[#allocation4 + $0x350] sm:$0xff] %v2125
      %2134 = vst [vmem:[#allocation4 + $0x358] sm:$0xff] %v2126
      %v2135 = vld [vmem:[%s1] sm:$0xf]
      %v2136 = vld [vmem:[%s1 + $0x4] sm:$0xf]
      %v2137 = vld [vmem:[%s1 + $0x8] sm:$0xf]
      %v2138 = vld [vmem:[%s1 + $0xc] sm:$0xf]
      %v2139 = vld [vmem:[%s1 + $0x10] sm:$0xf]
      %v2140 = vld [vmem:[%s1 + $0x14] sm:$0xf]
      %v2141 = vld [vmem:[%s1 + $0x18] sm:$0xf]
      %v2142 = vld [vmem:[%s1 + $0x1c] sm:$0xf]
      %v2143 = vld [vmem:[%s1 + $0x20] sm:$0xf]
      %v2144 = vld [vmem:[%s1 + $0x24] sm:$0xf]
      %v2145 = vld [vmem:[%s1 + $0x28] sm:$0xf]
      %v2146 = vld [vmem:[%s1 + $0x2c] sm:$0xf]
      %v2147 = vld [vmem:[%s1 + $0x30] sm:$0xf]
      %v2148 = vld [vmem:[%s1 + $0x34] sm:$0xf]
      %v2149 = vld [vmem:[%s1 + $0x38] sm:$0xf]
      %v2150 = vld [vmem:[%s1 + $0x3c] sm:$0xf]
      %v2151 = vld [vmem:[%s251] sm:$0xff]
      %v2152 = vld [vmem:[%s251 + $0x8] sm:$0xff]
      %v2153 = vld [vmem:[%s251 + $0x10] sm:$0xff]
      %v2154 = vld [vmem:[%s251 + $0x18] sm:$0xff]
      %v2155 = vld [vmem:[%s251 + $0x20] sm:$0xff]
      %v2156 = vld [vmem:[%s251 + $0x28] sm:$0xff]
      %v2157 = vld [vmem:[%s251 + $0x30] sm:$0xff]
      %v2158 = vld [vmem:[%s251 + $0x38] sm:$0xff]
      %v2159 = vld [vmem:[%s251 + $0x40] sm:$0xff]
      %v2160 = vld [vmem:[%s251 + $0x48] sm:$0xff]
      %v2161 = vld [vmem:[%s251 + $0x50] sm:$0xff]
      %v2162 = vld [vmem:[%s251 + $0x58] sm:$0xff]
      %v2163 = vld [vmem:[%s251 + $0x60] sm:$0xff]
      %v2164 = vld [vmem:[%s251 + $0x68] sm:$0xff]
      %v2165 = vld [vmem:[%s251 + $0x70] sm:$0xff]
      %v2166 = vld [vmem:[%s251 + $0x78] sm:$0xff]
      %v2167 = vld [vmem:[%s2] sm:$0xff]
      %v2168 = vld [vmem:[%s2 + $0x8] sm:$0xff]
      %v2169 = vld [vmem:[%s2 + $0x10] sm:$0xff]
      %v2170 = vld [vmem:[%s2 + $0x18] sm:$0xf]
      %v2171 = vld [vmem:[%s2 + $0x1c] sm:$0xff]
      %v2172 = vld [vmem:[%s2 + $0x24] sm:$0xff]
      %v2173 = vld [vmem:[%s2 + $0x2c] sm:$0xff]
      %v2174 = vld [vmem:[%s2 + $0x34] sm:$0xf]
      %v2175 = vld [vmem:[%s2 + $0x38] sm:$0xff]
      %v2176 = vld [vmem:[%s2 + $0x40] sm:$0xff]
      %v2177 = vld [vmem:[%s2 + $0x48] sm:$0xff]
      %v2178 = vld [vmem:[%s2 + $0x50] sm:$0xf]
      %v2179 = vld [vmem:[%s2 + $0x54] sm:$0xff]
      %v2180 = vld [vmem:[%s2 + $0x5c] sm:$0xff]
      %v2181 = vld [vmem:[%s2 + $0x64] sm:$0xff]
      %v2182 = vld [vmem:[%s2 + $0x6c] sm:$0xf]
      %v2183 = vld [vmem:[%s2 + $0x70] sm:$0xff]
      %v2184 = vld [vmem:[%s2 + $0x78] sm:$0xff]
      %v2185 = vld [vmem:[%s2 + $0x80] sm:$0xff]
      %v2186 = vld [vmem:[%s2 + $0x88] sm:$0xf]
      %v2187 = vld [vmem:[%s2 + $0x8c] sm:$0xff]
      %v2188 = vld [vmem:[%s2 + $0x94] sm:$0xff]
      %v2189 = vld [vmem:[%s2 + $0x9c] sm:$0xff]
      %v2190 = vld [vmem:[%s2 + $0xa4] sm:$0xf]
      %v2191 = vld [vmem:[%s2 + $0xa8] sm:$0xff]
      %v2192 = vld [vmem:[%s2 + $0xb0] sm:$0xff]
      %v2193 = vld [vmem:[%s2 + $0xb8] sm:$0xff]
      %v2194 = vld [vmem:[%s2 + $0xc0] sm:$0xf]
      %v2195 = vld [vmem:[%s2 + $0xc4] sm:$0xff]
      %v2196 = vld [vmem:[%s2 + $0xcc] sm:$0xff]
      %v2197 = vld [vmem:[%s2 + $0xd4] sm:$0xff]
      %v2198 = vld [vmem:[%s2 + $0xdc] sm:$0xf]
      %v2199 = vld [vmem:[%s2 + $0xe0] sm:$0xff]
      %v2200 = vld [vmem:[%s2 + $0xe8] sm:$0xff]
      %v2201 = vld [vmem:[%s2 + $0xf0] sm:$0xff]
      %v2202 = vld [vmem:[%s2 + $0xf8] sm:$0xf]
      %v2203 = vld [vmem:[%s2 + $0xfc] sm:$0xff]
      %v2204 = vld [vmem:[%s2 + $0x104] sm:$0xff]
      %v2205 = vld [vmem:[%s2 + $0x10c] sm:$0xff]
      %v2206 = vld [vmem:[%s2 + $0x114] sm:$0xf]
      %v2207 = vld [vmem:[%s2 + $0x118] sm:$0xff]
      %v2208 = vld [vmem:[%s2 + $0x120] sm:$0xff]
      %v2209 = vld [vmem:[%s2 + $0x128] sm:$0xff]
      %v2210 = vld [vmem:[%s2 + $0x130] sm:$0xf]
      %v2211 = vld [vmem:[%s2 + $0x134] sm:$0xff]
      %v2212 = vld [vmem:[%s2 + $0x13c] sm:$0xff]
      %v2213 = vld [vmem:[%s2 + $0x144] sm:$0xff]
      %v2214 = vld [vmem:[%s2 + $0x14c] sm:$0xf]
      %v2215 = vld [vmem:[%s2 + $0x150] sm:$0xff]
      %v2216 = vld [vmem:[%s2 + $0x158] sm:$0xff]
      %v2217 = vld [vmem:[%s2 + $0x160] sm:$0xff]
      %v2218 = vld [vmem:[%s2 + $0x168] sm:$0xf]
      %v2219 = vld [vmem:[%s2 + $0x16c] sm:$0xff]
      %v2220 = vld [vmem:[%s2 + $0x174] sm:$0xff]
      %v2221 = vld [vmem:[%s2 + $0x17c] sm:$0xff]
      %v2222 = vld [vmem:[%s2 + $0x184] sm:$0xf]
      %v2223 = vld [vmem:[%s2 + $0x188] sm:$0xff]
      %v2224 = vld [vmem:[%s2 + $0x190] sm:$0xff]
      %v2225 = vld [vmem:[%s2 + $0x198] sm:$0xff]
      %v2226 = vld [vmem:[%s2 + $0x1a0] sm:$0xf]
      %v2227 = vld [vmem:[%s2 + $0x1a4] sm:$0xff]
      %v2228 = vld [vmem:[%s2 + $0x1ac] sm:$0xff]
      %v2229 = vld [vmem:[%s2 + $0x1b4] sm:$0xff]
      %v2230 = vld [vmem:[%s2 + $0x1bc] sm:$0xf]
      %v2231 = vld [vmem:[#allocation4] sm:$0xff]
      %v2232 = vld [vmem:[#allocation4 + $0x8] sm:$0xff]
      %v2233 = vld [vmem:[#allocation4 + $0x10] sm:$0xff]
      %v2234 = vld [vmem:[#allocation4 + $0x18] sm:$0xff]
      %v2235 = vld [vmem:[#allocation4 + $0x20] sm:$0xff]
      %v2236 = vld [vmem:[#allocation4 + $0x28] sm:$0xff]
      %v2237 = vld [vmem:[#allocation4 + $0x30] sm:$0xff]
      %v2238 = vld [vmem:[#allocation4 + $0x38] sm:$0xff]
      %v2239 = vld [vmem:[#allocation4 + $0x40] sm:$0xff]
      %v2240 = vld [vmem:[#allocation4 + $0x48] sm:$0xff]
      %v2241 = vld [vmem:[#allocation4 + $0x50] sm:$0xff]
      %v2242 = vld [vmem:[#allocation4 + $0x58] sm:$0xff]
      %v2243 = vld [vmem:[#allocation4 + $0x60] sm:$0xff]
      %v2244 = vld [vmem:[#allocation4 + $0x68] sm:$0xff]
      %v2245 = vld [vmem:[#allocation4 + $0x70] sm:$0xff]
      %v2246 = vld [vmem:[#allocation4 + $0x78] sm:$0xff]
      %v2247 = vld [vmem:[#allocation4 + $0x80] sm:$0xff]
      %v2248 = vld [vmem:[#allocation4 + $0x88] sm:$0xff]
      %v2249 = vld [vmem:[#allocation4 + $0x90] sm:$0xff]
      %v2250 = vld [vmem:[#allocation4 + $0x98] sm:$0xff]
      %v2251 = vld [vmem:[#allocation4 + $0xa0] sm:$0xff]
      %v2252 = vld [vmem:[#allocation4 + $0xa8] sm:$0xff]
      %v2253 = vld [vmem:[#allocation4 + $0xb0] sm:$0xff]
      %v2254 = vld [vmem:[#allocation4 + $0xb8] sm:$0xff]
      %v2255 = vld [vmem:[#allocation4 + $0xc0] sm:$0xff]
      %v2256 = vld [vmem:[#allocation4 + $0xc8] sm:$0xff]
      %v2257 = vld [vmem:[#allocation4 + $0xd0] sm:$0xff]
      %v2258 = vld [vmem:[#allocation4 + $0xd8] sm:$0xff]
      %v2259 = vld [vmem:[#allocation4 + $0xe0] sm:$0xff]
      %v2260 = vld [vmem:[#allocation4 + $0xe8] sm:$0xff]
      %v2261 = vld [vmem:[#allocation4 + $0xf0] sm:$0xff]
      %v2262 = vld [vmem:[#allocation4 + $0xf8] sm:$0xff]
      %v2263 = vld [vmem:[#allocation4 + $0x100] sm:$0xff]
      %v2264 = vld [vmem:[#allocation4 + $0x108] sm:$0xff]
      %v2265 = vld [vmem:[#allocation4 + $0x110] sm:$0xff]
      %v2266 = vld [vmem:[#allocation4 + $0x118] sm:$0xff]
      %v2267 = vld [vmem:[#allocation4 + $0x120] sm:$0xff]
      %v2268 = vld [vmem:[#allocation4 + $0x128] sm:$0xff]
      %v2269 = vld [vmem:[#allocation4 + $0x130] sm:$0xff]
      %v2270 = vld [vmem:[#allocation4 + $0x138] sm:$0xff]
      %v2271 = vld [vmem:[#allocation4 + $0x140] sm:$0xff]
      %v2272 = vld [vmem:[#allocation4 + $0x148] sm:$0xff]
      %v2273 = vld [vmem:[#allocation4 + $0x150] sm:$0xff]
      %v2274 = vld [vmem:[#allocation4 + $0x158] sm:$0xff]
      %v2275 = vld [vmem:[#allocation4 + $0x160] sm:$0xff]
      %v2276 = vld [vmem:[#allocation4 + $0x168] sm:$0xff]
      %v2277 = vld [vmem:[#allocation4 + $0x170] sm:$0xff]
      %v2278 = vld [vmem:[#allocation4 + $0x178] sm:$0xff]
      %v2279 = vld [vmem:[#allocation4 + $0x180] sm:$0xff]
      %v2280 = vld [vmem:[#allocation4 + $0x188] sm:$0xff]
      %v2281 = vld [vmem:[#allocation4 + $0x190] sm:$0xff]
      %v2282 = vld [vmem:[#allocation4 + $0x198] sm:$0xff]
      %v2283 = vld [vmem:[#allocation4 + $0x1a0] sm:$0xff]
      %v2284 = vld [vmem:[#allocation4 + $0x1a8] sm:$0xff]
      %v2285 = vld [vmem:[#allocation4 + $0x1b0] sm:$0xff]
      %v2286 = vld [vmem:[#allocation4 + $0x1b8] sm:$0xff]
      %v2287 = vld [vmem:[#allocation4 + $0x1c0] sm:$0xff]
      %v2288 = vld [vmem:[#allocation4 + $0x1c8] sm:$0xff]
      %v2289 = vld [vmem:[#allocation4 + $0x1d0] sm:$0xff]
      %v2290 = vld [vmem:[#allocation4 + $0x1d8] sm:$0xff]
      %v2291 = vld [vmem:[#allocation4 + $0x1e0] sm:$0xff]
      %v2292 = vld [vmem:[#allocation4 + $0x1e8] sm:$0xff]
      %v2293 = vld [vmem:[#allocation4 + $0x1f0] sm:$0xff]
      %v2294 = vld [vmem:[#allocation4 + $0x1f8] sm:$0xff]
      %v2295 = vld [vmem:[#allocation4 + $0x200] sm:$0xff]
      %v2296 = vld [vmem:[#allocation4 + $0x208] sm:$0xff]
      %v2297 = vld [vmem:[#allocation4 + $0x210] sm:$0xff]
      %v2298 = vld [vmem:[#allocation4 + $0x218] sm:$0xff]
      %v2299 = vld [vmem:[#allocation4 + $0x220] sm:$0xff]
      %v2300 = vld [vmem:[#allocation4 + $0x228] sm:$0xff]
      %v2301 = vld [vmem:[#allocation4 + $0x230] sm:$0xff]
      %v2302 = vld [vmem:[#allocation4 + $0x238] sm:$0xff]
      %v2303 = vld [vmem:[#allocation4 + $0x240] sm:$0xff]
      %v2304 = vld [vmem:[#allocation4 + $0x248] sm:$0xff]
      %v2305 = vld [vmem:[#allocation4 + $0x250] sm:$0xff]
      %v2306 = vld [vmem:[#allocation4 + $0x258] sm:$0xff]
      %v2307 = vld [vmem:[#allocation4 + $0x260] sm:$0xff]
      %v2308 = vld [vmem:[#allocation4 + $0x268] sm:$0xff]
      %v2309 = vld [vmem:[#allocation4 + $0x270] sm:$0xff]
      %v2310 = vld [vmem:[#allocation4 + $0x278] sm:$0xff]
      %v2311 = vld [vmem:[#allocation4 + $0x280] sm:$0xff]
      %v2312 = vld [vmem:[#allocation4 + $0x288] sm:$0xff]
      %v2313 = vld [vmem:[#allocation4 + $0x290] sm:$0xff]
      %v2314 = vld [vmem:[#allocation4 + $0x298] sm:$0xff]
      %v2315 = vld [vmem:[#allocation4 + $0x2a0] sm:$0xff]
      %v2316 = vld [vmem:[#allocation4 + $0x2a8] sm:$0xff]
      %v2317 = vld [vmem:[#allocation4 + $0x2b0] sm:$0xff]
      %v2318 = vld [vmem:[#allocation4 + $0x2b8] sm:$0xff]
      %v2319 = vld [vmem:[#allocation4 + $0x2c0] sm:$0xff]
      %v2320 = vld [vmem:[#allocation4 + $0x2c8] sm:$0xff]
      %v2321 = vld [vmem:[#allocation4 + $0x2d0] sm:$0xff]
      %v2322 = vld [vmem:[#allocation4 + $0x2d8] sm:$0xff]
      %v2323 = vld [vmem:[#allocation4 + $0x2e0] sm:$0xff]
      %v2324 = vld [vmem:[#allocation4 + $0x2e8] sm:$0xff]
      %v2325 = vld [vmem:[#allocation4 + $0x2f0] sm:$0xff]
      %v2326 = vld [vmem:[#allocation4 + $0x2f8] sm:$0xff]
      %v2327 = vld [vmem:[#allocation4 + $0x300] sm:$0xff]
      %v2328 = vld [vmem:[#allocation4 + $0x308] sm:$0xff]
      %v2329 = vld [vmem:[#allocation4 + $0x310] sm:$0xff]
      %v2330 = vld [vmem:[#allocation4 + $0x318] sm:$0xff]
      %v2331 = vld [vmem:[#allocation4 + $0x320] sm:$0xff]
      %v2332 = vld [vmem:[#allocation4 + $0x328] sm:$0xff]
      %v2333 = vld [vmem:[#allocation4 + $0x330] sm:$0xff]
      %v2334 = vld [vmem:[#allocation4 + $0x338] sm:$0xff]
      %v2335 = vld [vmem:[#allocation4 + $0x340] sm:$0xff]
      %v2336 = vld [vmem:[#allocation4 + $0x348] sm:$0xff]
      %v2337 = vld [vmem:[#allocation4 + $0x350] sm:$0xff]
      %v2338 = vld [vmem:[#allocation4 + $0x358] sm:$0xff]
      %v2339 = vld [vmem:[#allocation4 + $0x360] sm:$0xff]
      %v2340 = vld [vmem:[#allocation4 + $0x368] sm:$0xff]
      %v2341 = vld [vmem:[#allocation4 + $0x370] sm:$0xff]
      %v2342 = vld [vmem:[#allocation4 + $0x378] sm:$0xff]
      %v2407 = vunpack.c.l.b16 %v2167
      %v2408 = vunpack.c.h.b16 %v2167
      %v2409 = vunpack.c.l.b16 %v2168
      %v2410 = vunpack.c.h.b16 %v2168
      %v2411 = vunpack.c.l.b16 %v2169
      %v2412 = vunpack.c.h.b16 %v2169
      %v2413 = vunpack.c.l.b16 %v2170
      %v2414 = vunpack.c.l.b16 %v2171
      %v2415 = vunpack.c.h.b16 %v2171
      %v2416 = vunpack.c.l.b16 %v2172
      %v2417 = vunpack.c.h.b16 %v2172
      %v2418 = vunpack.c.l.b16 %v2173
      %v2419 = vunpack.c.h.b16 %v2173
      %v2420 = vunpack.c.l.b16 %v2174
      %v2421 = vunpack.c.l.b16 %v2175
      %v2422 = vunpack.c.h.b16 %v2175
      %v2423 = vunpack.c.l.b16 %v2176
      %v2424 = vunpack.c.h.b16 %v2176
      %v2425 = vunpack.c.l.b16 %v2177
      %v2426 = vunpack.c.h.b16 %v2177
      %v2427 = vunpack.c.l.b16 %v2178
      %v2428 = vunpack.c.l.b16 %v2179
      %v2429 = vunpack.c.h.b16 %v2179
      %v2430 = vunpack.c.l.b16 %v2180
      %v2431 = vunpack.c.h.b16 %v2180
      %v2432 = vunpack.c.l.b16 %v2181
      %v2433 = vunpack.c.h.b16 %v2181
      %v2434 = vunpack.c.l.b16 %v2182
      %v2435 = vunpack.c.l.b16 %v2183
      %v2436 = vunpack.c.h.b16 %v2183
      %v2437 = vunpack.c.l.b16 %v2184
      %v2438 = vunpack.c.h.b16 %v2184
      %v2439 = vunpack.c.l.b16 %v2185
      %v2440 = vunpack.c.h.b16 %v2185
      %v2441 = vunpack.c.l.b16 %v2186
      %v2442 = vunpack.c.l.b16 %v2187
      %v2443 = vunpack.c.h.b16 %v2187
      %v2444 = vunpack.c.l.b16 %v2188
      %v2445 = vunpack.c.h.b16 %v2188
      %v2446 = vunpack.c.l.b16 %v2189
      %v2447 = vunpack.c.h.b16 %v2189
      %v2448 = vunpack.c.l.b16 %v2190
      %v2449 = vunpack.c.l.b16 %v2191
      %v2450 = vunpack.c.h.b16 %v2191
      %v2451 = vunpack.c.l.b16 %v2192
      %v2452 = vunpack.c.h.b16 %v2192
      %v2453 = vunpack.c.l.b16 %v2193
      %v2454 = vunpack.c.h.b16 %v2193
      %v2455 = vunpack.c.l.b16 %v2194
      %v2456 = vunpack.c.l.b16 %v2195
      %v2457 = vunpack.c.h.b16 %v2195
      %v2458 = vunpack.c.l.b16 %v2196
      %v2459 = vunpack.c.h.b16 %v2196
      %v2460 = vunpack.c.l.b16 %v2197
      %v2461 = vunpack.c.h.b16 %v2197
      %v2462 = vunpack.c.l.b16 %v2198
      %v2463 = vunpack.c.l.b16 %v2199
      %v2464 = vunpack.c.h.b16 %v2199
      %v2465 = vunpack.c.l.b16 %v2200
      %v2466 = vunpack.c.h.b16 %v2200
      %v2467 = vunpack.c.l.b16 %v2201
      %v2468 = vunpack.c.h.b16 %v2201
      %v2469 = vunpack.c.l.b16 %v2202
      %v2470 = vunpack.c.l.b16 %v2203
      %v2471 = vunpack.c.h.b16 %v2203
      %v2472 = vunpack.c.l.b16 %v2204
      %v2473 = vunpack.c.h.b16 %v2204
      %v2474 = vunpack.c.l.b16 %v2205
      %v2475 = vunpack.c.h.b16 %v2205
      %v2476 = vunpack.c.l.b16 %v2206
      %v2477 = vunpack.c.l.b16 %v2207
      %v2478 = vunpack.c.h.b16 %v2207
      %v2479 = vunpack.c.l.b16 %v2208
      %v2480 = vunpack.c.h.b16 %v2208
      %v2481 = vunpack.c.l.b16 %v2209
      %v2482 = vunpack.c.h.b16 %v2209
      %v2483 = vunpack.c.l.b16 %v2210
      %v2484 = vunpack.c.l.b16 %v2211
      %v2485 = vunpack.c.h.b16 %v2211
      %v2486 = vunpack.c.l.b16 %v2212
      %v2487 = vunpack.c.h.b16 %v2212
      %v2488 = vunpack.c.l.b16 %v2213
      %v2489 = vunpack.c.h.b16 %v2213
      %v2490 = vunpack.c.l.b16 %v2214
      %v2491 = vunpack.c.l.b16 %v2215
      %v2492 = vunpack.c.h.b16 %v2215
      %v2493 = vunpack.c.l.b16 %v2216
      %v2494 = vunpack.c.h.b16 %v2216
      %v2495 = vunpack.c.l.b16 %v2217
      %v2496 = vunpack.c.h.b16 %v2217
      %v2497 = vunpack.c.l.b16 %v2218
      %v2498 = vunpack.c.l.b16 %v2219
      %v2499 = vunpack.c.h.b16 %v2219
      %v2500 = vunpack.c.l.b16 %v2220
      %v2501 = vunpack.c.h.b16 %v2220
      %v2502 = vunpack.c.l.b16 %v2221
      %v2503 = vunpack.c.h.b16 %v2221
      %v2504 = vunpack.c.l.b16 %v2222
      %v2505 = vunpack.c.l.b16 %v2223
      %v2506 = vunpack.c.h.b16 %v2223
      %v2507 = vunpack.c.l.b16 %v2224
      %v2508 = vunpack.c.h.b16 %v2224
      %v2509 = vunpack.c.l.b16 %v2225
      %v2510 = vunpack.c.h.b16 %v2225
      %v2511 = vunpack.c.l.b16 %v2226
      %v2512 = vunpack.c.l.b16 %v2227
      %v2513 = vunpack.c.h.b16 %v2227
      %v2514 = vunpack.c.l.b16 %v2228
      %v2515 = vunpack.c.h.b16 %v2228
      %v2516 = vunpack.c.l.b16 %v2229
      %v2517 = vunpack.c.h.b16 %v2229
      %v2518 = vunpack.c.l.b16 %v2230
      %v2519 = vpack.c.b16 %v2414, %v2407
      %v2520 = vpack.c.b16 %v2415, %v2408
      %v2521 = vpack.c.b16 %v2416, %v2409
      %v2522 = vpack.c.b16 %v2417, %v2410
      %v2523 = vpack.c.b16 %v2418, %v2411
      %v2524 = vpack.c.b16 %v2419, %v2412
      %v2525 = vpack.c.b16 %v2420, %v2413
      %v2526 = vpack.c.b16 %v2428, %v2421
      %v2527 = vpack.c.b16 %v2429, %v2422
      %v2528 = vpack.c.b16 %v2430, %v2423
      %v2529 = vpack.c.b16 %v2431, %v2424
      %v2530 = vpack.c.b16 %v2432, %v2425
      %v2531 = vpack.c.b16 %v2433, %v2426
      %v2532 = vpack.c.b16 %v2434, %v2427
      %v2533 = vpack.c.b16 %v2442, %v2435
      %v2534 = vpack.c.b16 %v2443, %v2436
      %v2535 = vpack.c.b16 %v2444, %v2437
      %v2536 = vpack.c.b16 %v2445, %v2438
      %v2537 = vpack.c.b16 %v2446, %v2439
      %v2538 = vpack.c.b16 %v2447, %v2440
      %v2539 = vpack.c.b16 %v2448, %v2441
      %v2540 = vpack.c.b16 %v2456, %v2449
      %v2541 = vpack.c.b16 %v2457, %v2450
      %v2542 = vpack.c.b16 %v2458, %v2451
      %v2543 = vpack.c.b16 %v2459, %v2452
      %v2544 = vpack.c.b16 %v2460, %v2453
      %v2545 = vpack.c.b16 %v2461, %v2454
      %v2546 = vpack.c.b16 %v2462, %v2455
      %v2547 = vpack.c.b16 %v2470, %v2463
      %v2548 = vpack.c.b16 %v2471, %v2464
      %v2549 = vpack.c.b16 %v2472, %v2465
      %v2550 = vpack.c.b16 %v2473, %v2466
      %v2551 = vpack.c.b16 %v2474, %v2467
      %v2552 = vpack.c.b16 %v2475, %v2468
      %v2553 = vpack.c.b16 %v2476, %v2469
      %v2554 = vpack.c.b16 %v2484, %v2477
      %v2555 = vpack.c.b16 %v2485, %v2478
      %v2556 = vpack.c.b16 %v2486, %v2479
      %v2557 = vpack.c.b16 %v2487, %v2480
      %v2558 = vpack.c.b16 %v2488, %v2481
      %v2559 = vpack.c.b16 %v2489, %v2482
      %v2560 = vpack.c.b16 %v2490, %v2483
      %v2561 = vpack.c.b16 %v2498, %v2491
      %v2562 = vpack.c.b16 %v2499, %v2492
      %v2563 = vpack.c.b16 %v2500, %v2493
      %v2564 = vpack.c.b16 %v2501, %v2494
      %v2565 = vpack.c.b16 %v2502, %v2495
      %v2566 = vpack.c.b16 %v2503, %v2496
      %v2567 = vpack.c.b16 %v2504, %v2497
      %v2568 = vpack.c.b16 %v2512, %v2505
      %v2569 = vpack.c.b16 %v2513, %v2506
      %v2570 = vpack.c.b16 %v2514, %v2507
      %v2571 = vpack.c.b16 %v2515, %v2508
      %v2572 = vpack.c.b16 %v2516, %v2509
      %v2573 = vpack.c.b16 %v2517, %v2510
      %v2574 = vpack.c.b16 %v2518, %v2511
      %2631 = vmatprep.subr.bf16.mxu0 %v2232
      %2632 = vmatpush1.bf16.msra.mxu0 %v2231
      %2633 = vmatprep.subr.bf16.mxu0 %v2234
      %2634 = vmatpush1.bf16.msra.mxu0 %v2233
      %2635 = vmatprep.subr.bf16.mxu0 %v2236
      %2636 = vmatpush1.bf16.msra.mxu0 %v2235
      %2637 = vmatprep.subr.bf16.mxu0 %v2238
      %2638 = vmatpush1.bf16.msra.mxu0 %v2237
      %2639 = vmatprep.subr.bf16.mxu0 %v2240
      %2640 = vmatpush1.bf16.msra.mxu0 %v2239
      %2641 = vmatprep.subr.bf16.mxu0 %v2242
      %2642 = vmatpush1.bf16.msra.mxu0 %v2241
      %2643 = vmatprep.subr.bf16.mxu0 %v2244
      %2644 = vmatpush1.bf16.msra.mxu0 %v2243
      %2645 = vmatprep.subr.bf16.mxu0 %v2246
      %2646 = vmatpush1.bf16.msra.mxu0 %v2245
      %2647 = vmatprep.subr.bf16.mxu0 %v2248
      %2648 = vmatpush1.bf16.msra.mxu0 %v2247
      %2649 = vmatprep.subr.bf16.mxu0 %v2250
      %2650 = vmatpush1.bf16.msra.mxu0 %v2249
      %2651 = vmatprep.subr.bf16.mxu0 %v2252
      %2652 = vmatpush1.bf16.msra.mxu0 %v2251
      %2653 = vmatprep.subr.bf16.mxu0 %v2254
      %2654 = vmatpush1.bf16.msra.mxu0 %v2253
      %2655 = vmatprep.subr.bf16.mxu0 %v2256
      %2656 = vmatpush1.bf16.msra.mxu0 %v2255
      %2657 = vmatprep.subr.bf16.mxu0 %v2258
      %2658 = vmatpush1.bf16.msra.mxu0 %v2257
      %2659 = vmatprep.subr.bf16.mxu0 %v2260
      %2660 = vmatpush1.bf16.msra.mxu0 %v2259
      %2661 = vmatprep.subr.bf16.mxu0 %v2262
      %2662 = vmatpush1.bf16.msra.mxu0 %v2261
      %2663 = vmatprep.mubr.bf16.mxu0 %v2520
      %2664 = vmatmul.mubr.bf16.gmra.mrb[0].mxu0 %v2519
      %v2665 = vpop.f32.mrb[0].mxu0
      %v2666 = vadd.f32 0.0, %v2665
      %v2667 = vpop.f32.mrb[0].mxu0
      %v2668 = vadd.f32 0.0, %v2667
      %v2669 = vpop.f32.mrb[0].mxu0
      %v2670 = vadd.f32 0.0, %v2669
      %v2671 = vpop.f32.mrb[0].mxu0
      %v2672 = vadd.f32 0.0, %v2671
      %2673 = vmatprep.mubr.bf16.mxu0 %v2527
      %2674 = vmatmul.mubr.bf16.gmra.mrb[0].mxu0 %v2526
      %v2675 = vpop.f32.mrb[0].mxu0
      %v2676 = vadd.f32 0.0, %v2675
      %v2677 = vpop.f32.mrb[0].mxu0
      %v2678 = vadd.f32 0.0, %v2677
      %v2679 = vpop.f32.mrb[0].mxu0
      %v2680 = vadd.f32 0.0, %v2679
      %v2681 = vpop.f32.mrb[0].mxu0
      %v2682 = vadd.f32 0.0, %v2681
      %2683 = vmatprep.mubr.bf16.mxu0 %v2534
      %2684 = vmatmul.mubr.bf16.gmra.mrb[0].mxu0 %v2533
      %v2685 = vpop.f32.mrb[0].mxu0
      %v2686 = vadd.f32 0.0, %v2685
      %v2687 = vpop.f32.mrb[0].mxu0
      %v2688 = vadd.f32 0.0, %v2687
      %v2689 = vpop.f32.mrb[0].mxu0
      %v2690 = vadd.f32 0.0, %v2689
      %v2691 = vpop.f32.mrb[0].mxu0
      %v2692 = vadd.f32 0.0, %v2691
      %2693 = vmatprep.mubr.bf16.mxu0 %v2541
      %2694 = vmatmul.mubr.bf16.gmra.mrb[0].mxu0 %v2540
      %v2695 = vpop.f32.mrb[0].mxu0
      %v2696 = vadd.f32 0.0, %v2695
      %v2697 = vpop.f32.mrb[0].mxu0
      %v2698 = vadd.f32 0.0, %v2697
      %v2699 = vpop.f32.mrb[0].mxu0
      %v2700 = vadd.f32 0.0, %v2699
      %v2701 = vpop.f32.mrb[0].mxu0
      %v2702 = vadd.f32 0.0, %v2701
      %2703 = vmatprep.mubr.bf16.mxu0 %v2548
      %2704 = vmatmul.mubr.bf16.gmra.mrb[0].mxu0 %v2547
      %v2705 = vpop.f32.mrb[0].mxu0
      %v2706 = vadd.f32 0.0, %v2705
      %v2707 = vpop.f32.mrb[0].mxu0
      %v2708 = vadd.f32 0.0, %v2707
      %v2709 = vpop.f32.mrb[0].mxu0
      %v2710 = vadd.f32 0.0, %v2709
      %v2711 = vpop.f32.mrb[0].mxu0
      %v2712 = vadd.f32 0.0, %v2711
      %2713 = vmatprep.mubr.bf16.mxu0 %v2555
      %2714 = vmatmul.mubr.bf16.gmra.mrb[0].mxu0 %v2554
      %v2715 = vpop.f32.mrb[0].mxu0
      %v2716 = vadd.f32 0.0, %v2715
      %v2717 = vpop.f32.mrb[0].mxu0
      %v2718 = vadd.f32 0.0, %v2717
      %v2719 = vpop.f32.mrb[0].mxu0
      %v2720 = vadd.f32 0.0, %v2719
      %v2721 = vpop.f32.mrb[0].mxu0
      %v2722 = vadd.f32 0.0, %v2721
      %2723 = vmatprep.mubr.bf16.mxu0 %v2562
      %2724 = vmatmul.mubr.bf16.gmra.mrb[0].mxu0 %v2561
      %v2725 = vpop.f32.mrb[0].mxu0
      %v2726 = vadd.f32 0.0, %v2725
      %v2727 = vpop.f32.mrb[0].mxu0
      %v2728 = vadd.f32 0.0, %v2727
      %v2729 = vpop.f32.mrb[0].mxu0
      %v2730 = vadd.f32 0.0, %v2729
      %v2731 = vpop.f32.mrb[0].mxu0
      %v2732 = vadd.f32 0.0, %v2731
      %2733 = vmatprep.mubr.bf16.mxu0 %v2569
      %2734 = vmatmul.mubr.bf16.gmra.mrb[0].mxu0 %v2568
      %v2735 = vpop.f32.mrb[0].mxu0
      %v2736 = vadd.f32 0.0, %v2735
      %v2737 = vpop.f32.mrb[0].mxu0
      %v2738 = vadd.f32 0.0, %v2737
      %v2739 = vpop.f32.mrb[0].mxu0
      %v2740 = vadd.f32 0.0, %v2739
      %v2741 = vpop.f32.mrb[0].mxu0
      %v2742 = vadd.f32 0.0, %v2741
      %2743 = vdwg.mxu0
      %2744 = vmatprep.subr.bf16.mxu0 %v2264
      %2745 = vmatpush1.bf16.msra.mxu0 %v2263
      %2746 = vmatprep.subr.bf16.mxu0 %v2266
      %2747 = vmatpush1.bf16.msra.mxu0 %v2265
      %2748 = vmatprep.subr.bf16.mxu0 %v2268
      %2749 = vmatpush1.bf16.msra.mxu0 %v2267
      %2750 = vmatprep.subr.bf16.mxu0 %v2270
      %2751 = vmatpush1.bf16.msra.mxu0 %v2269
      %2752 = vmatprep.subr.bf16.mxu0 %v2272
      %2753 = vmatpush1.bf16.msra.mxu0 %v2271
      %2754 = vmatprep.subr.bf16.mxu0 %v2274
      %2755 = vmatpush1.bf16.msra.mxu0 %v2273
      %2756 = vmatprep.subr.bf16.mxu0 %v2276
      %2757 = vmatpush1.bf16.msra.mxu0 %v2275
      %2758 = vmatprep.subr.bf16.mxu0 %v2278
      %2759 = vmatpush1.bf16.msra.mxu0 %v2277
      %2760 = vmatprep.subr.bf16.mxu0 %v2280
      %2761 = vmatpush1.bf16.msra.mxu0 %v2279
      %2762 = vmatprep.subr.bf16.mxu0 %v2282
      %2763 = vmatpush1.bf16.msra.mxu0 %v2281
      %2764 = vmatprep.subr.bf16.mxu0 %v2284
      %2765 = vmatpush1.bf16.msra.mxu0 %v2283
      %2766 = vmatprep.subr.bf16.mxu0 %v2286
      %2767 = vmatpush1.bf16.msra.mxu0 %v2285
      %2768 = vmatprep.subr.bf16.mxu0 %v2288
      %2769 = vmatpush1.bf16.msra.mxu0 %v2287
      %2770 = vmatprep.subr.bf16.mxu0 %v2290
      %2771 = vmatpush1.bf16.msra.mxu0 %v2289
      %2772 = vmatprep.subr.bf16.mxu0 %v2292
      %2773 = vmatpush1.bf16.msra.mxu0 %v2291
      %2774 = vmatprep.subr.bf16.mxu0 %v2294
      %2775 = vmatpush1.bf16.msra.mxu0 %v2293
      %2776 = vmatprep.mubr.bf16.mxu0 %v2522
      %2777 = vmatmul.mubr.bf16.gmra.mrb[0].mxu0 %v2521
      %v2778 = vpop.f32.mrb[0].mxu0
      %v2779 = vadd.f32 %v2666, %v2778
      %v2780 = vpop.f32.mrb[0].mxu0
      %v2781 = vadd.f32 %v2668, %v2780
      %v2782 = vpop.f32.mrb[0].mxu0
      %v2783 = vadd.f32 %v2670, %v2782
      %v2784 = vpop.f32.mrb[0].mxu0
      %v2785 = vadd.f32 %v2672, %v2784
      %2786 = vmatprep.mubr.bf16.mxu0 %v2529
      %2787 = vmatmul.mubr.bf16.gmra.mrb[0].mxu0 %v2528
      %v2788 = vpop.f32.mrb[0].mxu0
      %v2789 = vadd.f32 %v2676, %v2788
      %v2790 = vpop.f32.mrb[0].mxu0
      %v2791 = vadd.f32 %v2678, %v2790
      %v2792 = vpop.f32.mrb[0].mxu0
      %v2793 = vadd.f32 %v2680, %v2792
      %v2794 = vpop.f32.mrb[0].mxu0
      %v2795 = vadd.f32 %v2682, %v2794
      %2796 = vmatprep.mubr.bf16.mxu0 %v2536
      %2797 = vmatmul.mubr.bf16.gmra.mrb[0].mxu0 %v2535
      %v2798 = vpop.f32.mrb[0].mxu0
      %v2799 = vadd.f32 %v2686, %v2798
      %v2800 = vpop.f32.mrb[0].mxu0
      %v2801 = vadd.f32 %v2688, %v2800
      %v2802 = vpop.f32.mrb[0].mxu0
      %v2803 = vadd.f32 %v2690, %v2802
      %v2804 = vpop.f32.mrb[0].mxu0
      %v2805 = vadd.f32 %v2692, %v2804
      %2806 = vmatprep.mubr.bf16.mxu0 %v2543
      %2807 = vmatmul.mubr.bf16.gmra.mrb[0].mxu0 %v2542
      %v2808 = vpop.f32.mrb[0].mxu0
      %v2809 = vadd.f32 %v2696, %v2808
      %v2810 = vpop.f32.mrb[0].mxu0
      %v2811 = vadd.f32 %v2698, %v2810
      %v2812 = vpop.f32.mrb[0].mxu0
      %v2813 = vadd.f32 %v2700, %v2812
      %v2814 = vpop.f32.mrb[0].mxu0
      %v2815 = vadd.f32 %v2702, %v2814
      %2816 = vmatprep.mubr.bf16.mxu0 %v2550
      %2817 = vmatmul.mubr.bf16.gmra.mrb[0].mxu0 %v2549
      %v2818 = vpop.f32.mrb[0].mxu0
      %v2819 = vadd.f32 %v2706, %v2818
      %v2820 = vpop.f32.mrb[0].mxu0
      %v2821 = vadd.f32 %v2708, %v2820
      %v2822 = vpop.f32.mrb[0].mxu0
      %v2823 = vadd.f32 %v2710, %v2822
      %v2824 = vpop.f32.mrb[0].mxu0
      %v2825 = vadd.f32 %v2712, %v2824
      %2826 = vmatprep.mubr.bf16.mxu0 %v2557
      %2827 = vmatmul.mubr.bf16.gmra.mrb[0].mxu0 %v2556
      %v2828 = vpop.f32.mrb[0].mxu0
      %v2829 = vadd.f32 %v2716, %v2828
      %v2830 = vpop.f32.mrb[0].mxu0
      %v2831 = vadd.f32 %v2718, %v2830
      %v2832 = vpop.f32.mrb[0].mxu0
      %v2833 = vadd.f32 %v2720, %v2832
      %v2834 = vpop.f32.mrb[0].mxu0
      %v2835 = vadd.f32 %v2722, %v2834
      %2836 = vmatprep.mubr.bf16.mxu0 %v2564
      %2837 = vmatmul.mubr.bf16.gmra.mrb[0].mxu0 %v2563
      %v2838 = vpop.f32.mrb[0].mxu0
      %v2839 = vadd.f32 %v2726, %v2838
      %v2840 = vpop.f32.mrb[0].mxu0
      %v2841 = vadd.f32 %v2728, %v2840
      %v2842 = vpop.f32.mrb[0].mxu0
      %v2843 = vadd.f32 %v2730, %v2842
      %v2844 = vpop.f32.mrb[0].mxu0
      %v2845 = vadd.f32 %v2732, %v2844
      %2846 = vmatprep.mubr.bf16.mxu0 %v2571
      %2847 = vmatmul.mubr.bf16.gmra.mrb[0].mxu0 %v2570
      %v2848 = vpop.f32.mrb[0].mxu0
      %v2849 = vadd.f32 %v2736, %v2848
      %v2850 = vpop.f32.mrb[0].mxu0
      %v2851 = vadd.f32 %v2738, %v2850
      %v2852 = vpop.f32.mrb[0].mxu0
      %v2853 = vadd.f32 %v2740, %v2852
      %v2854 = vpop.f32.mrb[0].mxu0
      %v2855 = vadd.f32 %v2742, %v2854
      %2856 = vdwg.mxu0
      %2857 = vmatprep.subr.bf16.mxu0 %v2296
      %2858 = vmatpush1.bf16.msra.mxu0 %v2295
      %2859 = vmatprep.subr.bf16.mxu0 %v2298
      %2860 = vmatpush1.bf16.msra.mxu0 %v2297
      %2861 = vmatprep.subr.bf16.mxu0 %v2300
      %2862 = vmatpush1.bf16.msra.mxu0 %v2299
      %2863 = vmatprep.subr.bf16.mxu0 %v2302
      %2864 = vmatpush1.bf16.msra.mxu0 %v2301
      %2865 = vmatprep.subr.bf16.mxu0 %v2304
      %2866 = vmatpush1.bf16.msra.mxu0 %v2303
      %2867 = vmatprep.subr.bf16.mxu0 %v2306
      %2868 = vmatpush1.bf16.msra.mxu0 %v2305
      %2869 = vmatprep.subr.bf16.mxu0 %v2308
      %2870 = vmatpush1.bf16.msra.mxu0 %v2307
      %2871 = vmatprep.subr.bf16.mxu0 %v2310
      %2872 = vmatpush1.bf16.msra.mxu0 %v2309
      %2873 = vmatprep.subr.bf16.mxu0 %v2312
      %2874 = vmatpush1.bf16.msra.mxu0 %v2311
      %2875 = vmatprep.subr.bf16.mxu0 %v2314
      %2876 = vmatpush1.bf16.msra.mxu0 %v2313
      %2877 = vmatprep.subr.bf16.mxu0 %v2316
      %2878 = vmatpush1.bf16.msra.mxu0 %v2315
      %2879 = vmatprep.subr.bf16.mxu0 %v2318
      %2880 = vmatpush1.bf16.msra.mxu0 %v2317
      %2881 = vmatprep.subr.bf16.mxu0 %v2320
      %2882 = vmatpush1.bf16.msra.mxu0 %v2319
      %2883 = vmatprep.subr.bf16.mxu0 %v2322
      %2884 = vmatpush1.bf16.msra.mxu0 %v2321
      %2885 = vmatprep.subr.bf16.mxu0 %v2324
      %2886 = vmatpush1.bf16.msra.mxu0 %v2323
      %2887 = vmatprep.subr.bf16.mxu0 %v2326
      %2888 = vmatpush1.bf16.msra.mxu0 %v2325
      %2889 = vmatprep.mubr.bf16.mxu0 %v2524
      %2890 = vmatmul.mubr.bf16.gmra.mrb[0].mxu0 %v2523
      %v2891 = vpop.f32.mrb[0].mxu0
      %v2892 = vadd.f32 %v2779, %v2891
      %v2893 = vpop.f32.mrb[0].mxu0
      %v2894 = vadd.f32 %v2781, %v2893
      %v2895 = vpop.f32.mrb[0].mxu0
      %v2896 = vadd.f32 %v2783, %v2895
      %v2897 = vpop.f32.mrb[0].mxu0
      %v2898 = vadd.f32 %v2785, %v2897
      %2899 = vmatprep.mubr.bf16.mxu0 %v2531
      %2900 = vmatmul.mubr.bf16.gmra.mrb[0].mxu0 %v2530
      %v2901 = vpop.f32.mrb[0].mxu0
      %v2902 = vadd.f32 %v2789, %v2901
      %v2903 = vpop.f32.mrb[0].mxu0
      %v2904 = vadd.f32 %v2791, %v2903
      %v2905 = vpop.f32.mrb[0].mxu0
      %v2906 = vadd.f32 %v2793, %v2905
      %v2907 = vpop.f32.mrb[0].mxu0
      %v2908 = vadd.f32 %v2795, %v2907
      %2909 = vmatprep.mubr.bf16.mxu0 %v2538
      %2910 = vmatmul.mubr.bf16.gmra.mrb[0].mxu0 %v2537
      %v2911 = vpop.f32.mrb[0].mxu0
      %v2912 = vadd.f32 %v2799, %v2911
      %v2913 = vpop.f32.mrb[0].mxu0
      %v2914 = vadd.f32 %v2801, %v2913
      %v2915 = vpop.f32.mrb[0].mxu0
      %v2916 = vadd.f32 %v2803, %v2915
      %v2917 = vpop.f32.mrb[0].mxu0
      %v2918 = vadd.f32 %v2805, %v2917
      %2919 = vmatprep.mubr.bf16.mxu0 %v2545
      %2920 = vmatmul.mubr.bf16.gmra.mrb[0].mxu0 %v2544
      %v2921 = vpop.f32.mrb[0].mxu0
      %v2922 = vadd.f32 %v2809, %v2921
      %v2923 = vpop.f32.mrb[0].mxu0
      %v2924 = vadd.f32 %v2811, %v2923
      %v2925 = vpop.f32.mrb[0].mxu0
      %v2926 = vadd.f32 %v2813, %v2925
      %v2927 = vpop.f32.mrb[0].mxu0
      %v2928 = vadd.f32 %v2815, %v2927
      %2929 = vmatprep.mubr.bf16.mxu0 %v2552
      %2930 = vmatmul.mubr.bf16.gmra.mrb[0].mxu0 %v2551
      %v2931 = vpop.f32.mrb[0].mxu0
      %v2932 = vadd.f32 %v2819, %v2931
      %v2933 = vpop.f32.mrb[0].mxu0
      %v2934 = vadd.f32 %v2821, %v2933
      %v2935 = vpop.f32.mrb[0].mxu0
      %v2936 = vadd.f32 %v2823, %v2935
      %v2937 = vpop.f32.mrb[0].mxu0
      %v2938 = vadd.f32 %v2825, %v2937
      %2939 = vmatprep.mubr.bf16.mxu0 %v2559
      %2940 = vmatmul.mubr.bf16.gmra.mrb[0].mxu0 %v2558
      %v2941 = vpop.f32.mrb[0].mxu0
      %v2942 = vadd.f32 %v2829, %v2941
      %v2943 = vpop.f32.mrb[0].mxu0
      %v2944 = vadd.f32 %v2831, %v2943
      %v2945 = vpop.f32.mrb[0].mxu0
      %v2946 = vadd.f32 %v2833, %v2945
      %v2947 = vpop.f32.mrb[0].mxu0
      %v2948 = vadd.f32 %v2835, %v2947
      %2949 = vmatprep.mubr.bf16.mxu0 %v2566
      %2950 = vmatmul.mubr.bf16.gmra.mrb[0].mxu0 %v2565
      %v2951 = vpop.f32.mrb[0].mxu0
      %v2952 = vadd.f32 %v2839, %v2951
      %v2953 = vpop.f32.mrb[0].mxu0
      %v2954 = vadd.f32 %v2841, %v2953
      %v2955 = vpop.f32.mrb[0].mxu0
      %v2956 = vadd.f32 %v2843, %v2955
      %v2957 = vpop.f32.mrb[0].mxu0
      %v2958 = vadd.f32 %v2845, %v2957
      %2959 = vmatprep.mubr.bf16.mxu0 %v2573
      %2960 = vmatmul.mubr.bf16.gmra.mrb[0].mxu0 %v2572
      %v2961 = vpop.f32.mrb[0].mxu0
      %v2962 = vadd.f32 %v2849, %v2961
      %v2963 = vpop.f32.mrb[0].mxu0
      %v2964 = vadd.f32 %v2851, %v2963
      %v2965 = vpop.f32.mrb[0].mxu0
      %v2966 = vadd.f32 %v2853, %v2965
      %v2967 = vpop.f32.mrb[0].mxu0
      %v2968 = vadd.f32 %v2855, %v2967
      %2969 = vdwg.mxu0
      %2970 = vmatprep.subr.bf16.mxu0 %v2328
      %2971 = vmatpush1.bf16.msra.mxu0 %v2327
      %2972 = vmatprep.subr.bf16.mxu0 %v2330
      %2973 = vmatpush1.bf16.msra.mxu0 %v2329
      %2974 = vmatprep.subr.bf16.mxu0 %v2332
      %2975 = vmatpush1.bf16.msra.mxu0 %v2331
      %2976 = vmatprep.subr.bf16.mxu0 %v2334
      %2977 = vmatpush1.bf16.msra.mxu0 %v2333
      %2978 = vmatprep.subr.bf16.mxu0 %v2336
      %2979 = vmatpush1.bf16.msra.mxu0 %v2335
      %2980 = vmatprep.subr.bf16.mxu0 %v2338
      %2981 = vmatpush1.bf16.msra.mxu0 %v2337
      %2982 = vmatprep.subr.bf16.mxu0 %v2340
      %2983 = vmatpush1.bf16.msra.mxu0 %v2339
      %2984 = vmatprep.subr.bf16.mxu0 %v2342
      %2985 = vmatpush1.bf16.msra.mxu0 %v2341
      %2986 = vmatprep.subr.bf16.mxu0 0
      %2987 = vmatpush1.bf16.msra.mxu0 0
      %2988 = vmatprep.subr.bf16.mxu0 0
      %2989 = vmatpush1.bf16.msra.mxu0 0
      %2990 = vmatprep.subr.bf16.mxu0 0
      %2991 = vmatpush1.bf16.msra.mxu0 0
      %2992 = vmatprep.subr.bf16.mxu0 0
      %2993 = vmatpush1.bf16.msra.mxu0 0
      %2994 = vmatprep.subr.bf16.mxu0 0
      %2995 = vmatpush1.bf16.msra.mxu0 0
      %2996 = vmatprep.subr.bf16.mxu0 0
      %2997 = vmatpush1.bf16.msra.mxu0 0
      %2998 = vmatprep.subr.bf16.mxu0 0
      %2999 = vmatpush1.bf16.msra.mxu0 0
      %3000 = vmatprep.subr.bf16.mxu0 0
      %3001 = vmatpush1.bf16.msra.mxu0 0
      %3002 = vmatprep.mubr.bf16.mxu0 0
      %3003 = vmatmul.mubr.bf16.gmra.mrb[0].mxu0 %v2525
      %v3004 = vpop.f32.mrb[0].mxu0
      %v3005 = vadd.f32 %v2892, %v3004
      %v3006 = vpop.f32.mrb[0].mxu0
      %v3007 = vadd.f32 %v2894, %v3006
      %v3008 = vpop.f32.mrb[0].mxu0
      %v3009 = vadd.f32 %v2896, %v3008
      %v3010 = vpop.f32.mrb[0].mxu0
      %v3011 = vadd.f32 %v2898, %v3010
      %3012 = vmatprep.mubr.bf16.mxu0 0
      %3013 = vmatmul.mubr.bf16.gmra.mrb[0].mxu0 %v2532
      %v3014 = vpop.f32.mrb[0].mxu0
      %v3015 = vadd.f32 %v2902, %v3014
      %v3016 = vpop.f32.mrb[0].mxu0
      %v3017 = vadd.f32 %v2904, %v3016
      %v3018 = vpop.f32.mrb[0].mxu0
      %v3019 = vadd.f32 %v2906, %v3018
      %v3020 = vpop.f32.mrb[0].mxu0
      %v3021 = vadd.f32 %v2908, %v3020
      %3022 = vmatprep.mubr.bf16.mxu0 0
      %3023 = vmatmul.mubr.bf16.gmra.mrb[0].mxu0 %v2539
      %v3024 = vpop.f32.mrb[0].mxu0
      %v3025 = vadd.f32 %v2912, %v3024
      %v3026 = vpop.f32.mrb[0].mxu0
      %v3027 = vadd.f32 %v2914, %v3026
      %v3028 = vpop.f32.mrb[0].mxu0
      %v3029 = vadd.f32 %v2916, %v3028
      %v3030 = vpop.f32.mrb[0].mxu0
      %v3031 = vadd.f32 %v2918, %v3030
      %3032 = vmatprep.mubr.bf16.mxu0 0
      %3033 = vmatmul.mubr.bf16.gmra.mrb[0].mxu0 %v2546
      %v3034 = vpop.f32.mrb[0].mxu0
      %v3035 = vadd.f32 %v2922, %v3034
      %v3036 = vpop.f32.mrb[0].mxu0
      %v3037 = vadd.f32 %v2924, %v3036
      %v3038 = vpop.f32.mrb[0].mxu0
      %v3039 = vadd.f32 %v2926, %v3038
      %v3040 = vpop.f32.mrb[0].mxu0
      %v3041 = vadd.f32 %v2928, %v3040
      %3042 = vmatprep.mubr.bf16.mxu0 0
      %3043 = vmatmul.mubr.bf16.gmra.mrb[0].mxu0 %v2553
      %v3044 = vpop.f32.mrb[0].mxu0
      %v3045 = vadd.f32 %v2932, %v3044
      %v3046 = vpop.f32.mrb[0].mxu0
      %v3047 = vadd.f32 %v2934, %v3046
      %v3048 = vpop.f32.mrb[0].mxu0
      %v3049 = vadd.f32 %v2936, %v3048
      %v3050 = vpop.f32.mrb[0].mxu0
      %v3051 = vadd.f32 %v2938, %v3050
      %3052 = vmatprep.mubr.bf16.mxu0 0
      %3053 = vmatmul.mubr.bf16.gmra.mrb[0].mxu0 %v2560
      %v3054 = vpop.f32.mrb[0].mxu0
      %v3055 = vadd.f32 %v2942, %v3054
      %v3056 = vpop.f32.mrb[0].mxu0
      %v3057 = vadd.f32 %v2944, %v3056
      %v3058 = vpop.f32.mrb[0].mxu0
      %v3059 = vadd.f32 %v2946, %v3058
      %v3060 = vpop.f32.mrb[0].mxu0
      %v3061 = vadd.f32 %v2948, %v3060
      %3062 = vmatprep.mubr.bf16.mxu0 0
      %3063 = vmatmul.mubr.bf16.gmra.mrb[0].mxu0 %v2567
      %v3064 = vpop.f32.mrb[0].mxu0
      %v3065 = vadd.f32 %v2952, %v3064
      %v3066 = vpop.f32.mrb[0].mxu0
      %v3067 = vadd.f32 %v2954, %v3066
      %v3068 = vpop.f32.mrb[0].mxu0
      %v3069 = vadd.f32 %v2956, %v3068
      %v3070 = vpop.f32.mrb[0].mxu0
      %v3071 = vadd.f32 %v2958, %v3070
      %3072 = vmatprep.mubr.bf16.mxu0 0
      %3073 = vmatmul.mubr.bf16.gmra.mrb[0].mxu0 %v2574
      %v3074 = vpop.f32.mrb[0].mxu0
      %v3075 = vadd.f32 %v2962, %v3074
      %v3076 = vpop.f32.mrb[0].mxu0
      %v3077 = vadd.f32 %v2964, %v3076
      %v3078 = vpop.f32.mrb[0].mxu0
      %v3079 = vadd.f32 %v2966, %v3078
      %v3080 = vpop.f32.mrb[0].mxu0
      %v3081 = vadd.f32 %v2968, %v3080
      %3082 = vdwg.mxu0
      %v3099 = vunpack.c.l.b16 %v2135
      %v3100 = vunpack.c.l.b16 %v2136
      %v3101 = vunpack.c.l.b16 %v2137
      %v3102 = vunpack.c.l.b16 %v2138
      %v3103 = vunpack.c.l.b16 %v2139
      %v3104 = vunpack.c.l.b16 %v2140
      %v3105 = vunpack.c.l.b16 %v2141
      %v3106 = vunpack.c.l.b16 %v2142
      %v3107 = vunpack.c.l.b16 %v2143
      %v3108 = vunpack.c.l.b16 %v2144
      %v3109 = vunpack.c.l.b16 %v2145
      %v3110 = vunpack.c.l.b16 %v2146
      %v3111 = vunpack.c.l.b16 %v2147
      %v3112 = vunpack.c.l.b16 %v2148
      %v3113 = vunpack.c.l.b16 %v2149
      %v3114 = vunpack.c.l.b16 %v2150
      %v3115 = vpack.c.b16 %v3100, %v3099
      %v3116 = vpack.c.b16 %v3102, %v3101
      %v3117 = vpack.c.b16 %v3104, %v3103
      %v3118 = vpack.c.b16 %v3106, %v3105
      %v3119 = vpack.c.b16 %v3108, %v3107
      %v3120 = vpack.c.b16 %v3110, %v3109
      %v3121 = vpack.c.b16 %v3112, %v3111
      %v3122 = vpack.c.b16 %v3114, %v3113
      %v3147 = vunpack.c.l.b16 %v2151
      %v3148 = vunpack.c.h.b16 %v2151
      %v3149 = vunpack.c.l.b16 %v2152
      %v3150 = vunpack.c.h.b16 %v2152
      %v3151 = vunpack.c.l.b16 %v2153
      %v3152 = vunpack.c.h.b16 %v2153
      %v3153 = vunpack.c.l.b16 %v2154
      %v3154 = vunpack.c.h.b16 %v2154
      %v3155 = vunpack.c.l.b16 %v2155
      %v3156 = vunpack.c.h.b16 %v2155
      %v3157 = vunpack.c.l.b16 %v2156
      %v3158 = vunpack.c.h.b16 %v2156
      %v3159 = vunpack.c.l.b16 %v2157
      %v3160 = vunpack.c.h.b16 %v2157
      %v3161 = vunpack.c.l.b16 %v2158
      %v3162 = vunpack.c.h.b16 %v2158
      %v3163 = vunpack.c.l.b16 %v2159
      %v3164 = vunpack.c.h.b16 %v2159
      %v3165 = vunpack.c.l.b16 %v2160
      %v3166 = vunpack.c.h.b16 %v2160
      %v3167 = vunpack.c.l.b16 %v2161
      %v3168 = vunpack.c.h.b16 %v2161
      %v3169 = vunpack.c.l.b16 %v2162
      %v3170 = vunpack.c.h.b16 %v2162
      %v3171 = vunpack.c.l.b16 %v2163
      %v3172 = vunpack.c.h.b16 %v2163
      %v3173 = vunpack.c.l.b16 %v2164
      %v3174 = vunpack.c.h.b16 %v2164
      %v3175 = vunpack.c.l.b16 %v2165
      %v3176 = vunpack.c.h.b16 %v2165
      %v3177 = vunpack.c.l.b16 %v2166
      %v3178 = vunpack.c.h.b16 %v2166
      %v3179 = vpack.c.b16 %v3149, %v3147
      %v3180 = vpack.c.b16 %v3150, %v3148
      %v3181 = vpack.c.b16 %v3153, %v3151
      %v3182 = vpack.c.b16 %v3154, %v3152
      %v3183 = vpack.c.b16 %v3157, %v3155
      %v3184 = vpack.c.b16 %v3158, %v3156
      %v3185 = vpack.c.b16 %v3161, %v3159
      %v3186 = vpack.c.b16 %v3162, %v3160
      %v3187 = vpack.c.b16 %v3165, %v3163
      %v3188 = vpack.c.b16 %v3166, %v3164
      %v3189 = vpack.c.b16 %v3169, %v3167
      %v3190 = vpack.c.b16 %v3170, %v3168
      %v3191 = vpack.c.b16 %v3173, %v3171
      %v3192 = vpack.c.b16 %v3174, %v3172
      %v3193 = vpack.c.b16 %v3177, %v3175
      %v3194 = vpack.c.b16 %v3178, %v3176
      %3211 = vmatprep.subr.bf16.mxu0 %v3180
      %3212 = vmatpush1.bf16.msra.mxu0 %v3179
      %3213 = vmatprep.subr.bf16.mxu0 %v3182
      %3214 = vmatpush1.bf16.msra.mxu0 %v3181
      %3215 = vmatprep.subr.bf16.mxu0 %v3184
      %3216 = vmatpush1.bf16.msra.mxu0 %v3183
      %3217 = vmatprep.subr.bf16.mxu0 %v3186
      %3218 = vmatpush1.bf16.msra.mxu0 %v3185
      %3219 = vmatprep.subr.bf16.mxu0 %v3188
      %3220 = vmatpush1.bf16.msra.mxu0 %v3187
      %3221 = vmatprep.subr.bf16.mxu0 %v3190
      %3222 = vmatpush1.bf16.msra.mxu0 %v3189
      %3223 = vmatprep.subr.bf16.mxu0 %v3192
      %3224 = vmatpush1.bf16.msra.mxu0 %v3191
      %3225 = vmatprep.subr.bf16.mxu0 %v3194
      %3226 = vmatpush1.bf16.msra.mxu0 %v3193
      %3227 = vmatprep.subr.bf16.mxu0 0
      %3228 = vmatpush1.bf16.msra.mxu0 0
      %3229 = vmatprep.subr.bf16.mxu0 0
      %3230 = vmatpush1.bf16.msra.mxu0 0
      %3231 = vmatprep.subr.bf16.mxu0 0
      %3232 = vmatpush1.bf16.msra.mxu0 0
      %3233 = vmatprep.subr.bf16.mxu0 0
      %3234 = vmatpush1.bf16.msra.mxu0 0
      %3235 = vmatprep.subr.bf16.mxu0 0
      %3236 = vmatpush1.bf16.msra.mxu0 0
      %3237 = vmatprep.subr.bf16.mxu0 0
      %3238 = vmatpush1.bf16.msra.mxu0 0
      %3239 = vmatprep.subr.bf16.mxu0 0
      %3240 = vmatpush1.bf16.msra.mxu0 0
      %3241 = vmatprep.subr.bf16.mxu0 0
      %3242 = vmatpush1.bf16.msra.mxu0 0
      %3243 = vmatprep.mubr.bf16.mxu0 0
      %3244 = vmatmul.mubr.bf16.gmra.mrb[0].mxu0 %v3115
      %v3245 = vpop.f32.mrb[0].mxu0
      %v3246 = vadd.f32 %v3005, %v3245
      %v3247 = vpop.f32.mrb[0].mxu0
      %v3248 = vadd.f32 %v3007, %v3247
      %v3249 = vpop.f32.mrb[0].mxu0
      %v3250 = vadd.f32 %v3009, %v3249
      %v3251 = vpop.f32.mrb[0].mxu0
      %v3252 = vadd.f32 %v3011, %v3251
      %3253 = vmatprep.mubr.bf16.mxu0 0
      %3254 = vmatmul.mubr.bf16.gmra.mrb[0].mxu0 %v3116
      %v3255 = vpop.f32.mrb[0].mxu0
      %v3256 = vadd.f32 %v3015, %v3255
      %v3257 = vpop.f32.mrb[0].mxu0
      %v3258 = vadd.f32 %v3017, %v3257
      %v3259 = vpop.f32.mrb[0].mxu0
      %v3260 = vadd.f32 %v3019, %v3259
      %v3261 = vpop.f32.mrb[0].mxu0
      %v3262 = vadd.f32 %v3021, %v3261
      %3263 = vmatprep.mubr.bf16.mxu0 0
      %3264 = vmatmul.mubr.bf16.gmra.mrb[0].mxu0 %v3117
      %v3265 = vpop.f32.mrb[0].mxu0
      %v3266 = vadd.f32 %v3025, %v3265
      %v3267 = vpop.f32.mrb[0].mxu0
      %v3268 = vadd.f32 %v3027, %v3267
      %v3269 = vpop.f32.mrb[0].mxu0
      %v3270 = vadd.f32 %v3029, %v3269
      %v3271 = vpop.f32.mrb[0].mxu0
      %v3272 = vadd.f32 %v3031, %v3271
      %3273 = vmatprep.mubr.bf16.mxu0 0
      %3274 = vmatmul.mubr.bf16.gmra.mrb[0].mxu0 %v3118
      %v3275 = vpop.f32.mrb[0].mxu0
      %v3276 = vadd.f32 %v3035, %v3275
      %v3277 = vpop.f32.mrb[0].mxu0
      %v3278 = vadd.f32 %v3037, %v3277
      %v3279 = vpop.f32.mrb[0].mxu0
      %v3280 = vadd.f32 %v3039, %v3279
      %v3281 = vpop.f32.mrb[0].mxu0
      %v3282 = vadd.f32 %v3041, %v3281
      %3283 = vmatprep.mubr.bf16.mxu0 0
      %3284 = vmatmul.mubr.bf16.gmra.mrb[0].mxu0 %v3119
      %v3285 = vpop.f32.mrb[0].mxu0
      %v3286 = vadd.f32 %v3045, %v3285
      %v3287 = vpop.f32.mrb[0].mxu0
      %v3288 = vadd.f32 %v3047, %v3287
      %v3289 = vpop.f32.mrb[0].mxu0
      %v3290 = vadd.f32 %v3049, %v3289
      %v3291 = vpop.f32.mrb[0].mxu0
      %v3292 = vadd.f32 %v3051, %v3291
      %3293 = vmatprep.mubr.bf16.mxu0 0
      %3294 = vmatmul.mubr.bf16.gmra.mrb[0].mxu0 %v3120
      %v3295 = vpop.f32.mrb[0].mxu0
      %v3296 = vadd.f32 %v3055, %v3295
      %v3297 = vpop.f32.mrb[0].mxu0
      %v3298 = vadd.f32 %v3057, %v3297
      %v3299 = vpop.f32.mrb[0].mxu0
      %v3300 = vadd.f32 %v3059, %v3299
      %v3301 = vpop.f32.mrb[0].mxu0
      %v3302 = vadd.f32 %v3061, %v3301
      %3303 = vmatprep.mubr.bf16.mxu0 0
      %3304 = vmatmul.mubr.bf16.gmra.mrb[0].mxu0 %v3121
      %v3305 = vpop.f32.mrb[0].mxu0
      %v3306 = vadd.f32 %v3065, %v3305
      %v3307 = vpop.f32.mrb[0].mxu0
      %v3308 = vadd.f32 %v3067, %v3307
      %v3309 = vpop.f32.mrb[0].mxu0
      %v3310 = vadd.f32 %v3069, %v3309
      %v3311 = vpop.f32.mrb[0].mxu0
      %v3312 = vadd.f32 %v3071, %v3311
      %3313 = vmatprep.mubr.bf16.mxu0 0
      %3314 = vmatmul.mubr.bf16.gmra.mrb[0].mxu0 %v3122
      %v3315 = vpop.f32.mrb[0].mxu0
      %v3316 = vadd.f32 %v3075, %v3315
      %v3317 = vpop.f32.mrb[0].mxu0
      %v3318 = vadd.f32 %v3077, %v3317
      %v3319 = vpop.f32.mrb[0].mxu0
      %v3320 = vadd.f32 %v3079, %v3319
      %v3321 = vpop.f32.mrb[0].mxu0
      %v3322 = vadd.f32 %v3081, %v3321
      %3323 = vdwg.mxu0
      %v3324 = vld [vmem:[%s3] sm:$0xff]
      %v3325 = vld [vmem:[%s3 + $0x8] sm:$0xff]
      %v3326 = vld [vmem:[%s3 + $0x10] sm:$0xff]
      %v3327 = vld [vmem:[%s3 + $0x18] sm:$0xff]
      %v3328 = vld [vmem:[%s3 + $0x20] sm:$0xff]
      %v3329 = vld [vmem:[%s3 + $0x28] sm:$0xff]
      %v3330 = vld [vmem:[%s3 + $0x30] sm:$0xff]
      %v3331 = vld [vmem:[%s3 + $0x38] sm:$0xff]
      %v3332 = vld [vmem:[%s3 + $0x40] sm:$0xff]
      %v3333 = vld [vmem:[%s3 + $0x48] sm:$0xff]
      %v3334 = vld [vmem:[%s3 + $0x50] sm:$0xff]
      %v3335 = vld [vmem:[%s3 + $0x58] sm:$0xff]
      %v3336 = vld [vmem:[%s3 + $0x60] sm:$0xff]
      %v3337 = vld [vmem:[%s3 + $0x68] sm:$0xff]
      %v3338 = vld [vmem:[%s3 + $0x70] sm:$0xff]
      %v3339 = vld [vmem:[%s3 + $0x78] sm:$0xff]
      %3341 = vset.pattern.permute.xlu0 0
      %3342 = vperm.xlu0 %3341, %v3324
      %v3343 = vpop.permute.xlu0 %3342
      %3346 = vset.pattern.permute.xlu0 0
      %3347 = vperm.xlu0 %3346, %v3325
      %v3348 = vpop.permute.xlu0 %3347
      %3351 = vset.pattern.permute.xlu0 0
      %3352 = vperm.xlu0 %3351, %v3326
      %v3353 = vpop.permute.xlu0 %3352
      %3356 = vset.pattern.permute.xlu0 0
      %3357 = vperm.xlu0 %3356, %v3327
      %v3358 = vpop.permute.xlu0 %3357
      %3361 = vset.pattern.permute.xlu0 0
      %3362 = vperm.xlu0 %3361, %v3328
      %v3363 = vpop.permute.xlu0 %3362
      %3366 = vset.pattern.permute.xlu0 0
      %3367 = vperm.xlu0 %3366, %v3329
      %v3368 = vpop.permute.xlu0 %3367
      %3371 = vset.pattern.permute.xlu0 0
      %3372 = vperm.xlu0 %3371, %v3330
      %v3373 = vpop.permute.xlu0 %3372
      %3376 = vset.pattern.permute.xlu0 0
      %3377 = vperm.xlu0 %3376, %v3331
      %v3378 = vpop.permute.xlu0 %3377
      %3381 = vset.pattern.permute.xlu0 0
      %3382 = vperm.xlu0 %3381, %v3332
      %v3383 = vpop.permute.xlu0 %3382
      %3386 = vset.pattern.permute.xlu0 0
      %3387 = vperm.xlu0 %3386, %v3333
      %v3388 = vpop.permute.xlu0 %3387
      %3391 = vset.pattern.permute.xlu0 0
      %3392 = vperm.xlu0 %3391, %v3334
      %v3393 = vpop.permute.xlu0 %3392
      %3396 = vset.pattern.permute.xlu0 0
      %3397 = vperm.xlu0 %3396, %v3335
      %v3398 = vpop.permute.xlu0 %3397
      %3401 = vset.pattern.permute.xlu0 0
      %3402 = vperm.xlu0 %3401, %v3336
      %v3403 = vpop.permute.xlu0 %3402
      %3406 = vset.pattern.permute.xlu0 0
      %3407 = vperm.xlu0 %3406, %v3337
      %v3408 = vpop.permute.xlu0 %3407
      %3411 = vset.pattern.permute.xlu0 0
      %3412 = vperm.xlu0 %3411, %v3338
      %v3413 = vpop.permute.xlu0 %3412
      %3416 = vset.pattern.permute.xlu0 0
      %3417 = vperm.xlu0 %3416, %v3339
      %v3418 = vpop.permute.xlu0 %3417
      %v3420 = vadd.f32 %v3246, %v3343
      %v3421 = vadd.f32 %v3248, %v3343
      %v3422 = vadd.f32 %v3250, %v3348
      %v3423 = vadd.f32 %v3252, %v3348
      %v3424 = vadd.f32 %v3256, %v3353
      %v3425 = vadd.f32 %v3258, %v3353
      %v3426 = vadd.f32 %v3260, %v3358
      %v3427 = vadd.f32 %v3262, %v3358
      %v3428 = vadd.f32 %v3266, %v3363
      %v3429 = vadd.f32 %v3268, %v3363
      %v3430 = vadd.f32 %v3270, %v3368
      %v3431 = vadd.f32 %v3272, %v3368
      %v3432 = vadd.f32 %v3276, %v3373
      %v3433 = vadd.f32 %v3278, %v3373
      %v3434 = vadd.f32 %v3280, %v3378
      %v3435 = vadd.f32 %v3282, %v3378
      %v3436 = vadd.f32 %v3286, %v3383
      %v3437 = vadd.f32 %v3288, %v3383
      %v3438 = vadd.f32 %v3290, %v3388
      %v3439 = vadd.f32 %v3292, %v3388
      %v3440 = vadd.f32 %v3296, %v3393
      %v3441 = vadd.f32 %v3298, %v3393
      %v3442 = vadd.f32 %v3300, %v3398
      %v3443 = vadd.f32 %v3302, %v3398
      %v3444 = vadd.f32 %v3306, %v3403
      %v3445 = vadd.f32 %v3308, %v3403
      %v3446 = vadd.f32 %v3310, %v3408
      %v3447 = vadd.f32 %v3312, %v3408
      %v3448 = vadd.f32 %v3316, %v3413
      %v3449 = vadd.f32 %v3318, %v3413
      %v3450 = vadd.f32 %v3320, %v3418
      %v3451 = vadd.f32 %v3322, %v3418
      %v3452 = vxor.u32 %v3420, 2147483648
      %v3453 = vxor.u32 %v3421, 2147483648
      %v3454 = vxor.u32 %v3422, 2147483648
      %v3455 = vxor.u32 %v3423, 2147483648
      %v3456 = vxor.u32 %v3424, 2147483648
      %v3457 = vxor.u32 %v3425, 2147483648
      %v3458 = vxor.u32 %v3426, 2147483648
      %v3459 = vxor.u32 %v3427, 2147483648
      %v3460 = vxor.u32 %v3428, 2147483648
      %v3461 = vxor.u32 %v3429, 2147483648
      %v3462 = vxor.u32 %v3430, 2147483648
      %v3463 = vxor.u32 %v3431, 2147483648
      %v3464 = vxor.u32 %v3432, 2147483648
      %v3465 = vxor.u32 %v3433, 2147483648
      %v3466 = vxor.u32 %v3434, 2147483648
      %v3467 = vxor.u32 %v3435, 2147483648
      %v3468 = vxor.u32 %v3436, 2147483648
      %v3469 = vxor.u32 %v3437, 2147483648
      %v3470 = vxor.u32 %v3438, 2147483648
      %v3471 = vxor.u32 %v3439, 2147483648
      %v3472 = vxor.u32 %v3440, 2147483648
      %v3473 = vxor.u32 %v3441, 2147483648
      %v3474 = vxor.u32 %v3442, 2147483648
      %v3475 = vxor.u32 %v3443, 2147483648
      %v3476 = vmul.f32 %v3452, 1.442695
      %v3477 = vpow.pop %v3476
      %v3478 = vmul.f32 %v3453, 1.442695
      %v3479 = vpow.pop %v3478
      %v3480 = vmul.f32 %v3454, 1.442695
      %v3481 = vpow.pop %v3480
      %v3482 = vmul.f32 %v3455, 1.442695
      %v3483 = vpow.pop %v3482
      %v3484 = vmul.f32 %v3456, 1.442695
      %v3485 = vpow.pop %v3484
      %v3486 = vmul.f32 %v3457, 1.442695
      %v3487 = vpow.pop %v3486
      %v3488 = vmul.f32 %v3458, 1.442695
      %v3489 = vpow.pop %v3488
      %v3490 = vmul.f32 %v3459, 1.442695
      %v3491 = vpow.pop %v3490
      %v3492 = vmul.f32 %v3460, 1.442695
      %v3493 = vpow.pop %v3492
      %v3494 = vmul.f32 %v3461, 1.442695
      %v3495 = vpow.pop %v3494
      %v3496 = vmul.f32 %v3462, 1.442695
      %v3497 = vpow.pop %v3496
      %v3498 = vmul.f32 %v3463, 1.442695
      %v3499 = vpow.pop %v3498
      %v3500 = vmul.f32 %v3464, 1.442695
      %v3501 = vpow.pop %v3500
      %v3502 = vmul.f32 %v3465, 1.442695
      %v3503 = vpow.pop %v3502
      %v3504 = vmul.f32 %v3466, 1.442695
      %v3505 = vpow.pop %v3504
      %v3506 = vmul.f32 %v3467, 1.442695
      %v3507 = vpow.pop %v3506
      %v3508 = vmul.f32 %v3468, 1.442695
      %v3509 = vpow.pop %v3508
      %v3510 = vmul.f32 %v3469, 1.442695
      %v3511 = vpow.pop %v3510
      %v3512 = vmul.f32 %v3470, 1.442695
      %v3513 = vpow.pop %v3512
      %v3514 = vmul.f32 %v3471, 1.442695
      %v3515 = vpow.pop %v3514
      %v3516 = vmul.f32 %v3472, 1.442695
      %v3517 = vpow.pop %v3516
      %v3518 = vmul.f32 %v3473, 1.442695
      %v3519 = vpow.pop %v3518
      %v3520 = vmul.f32 %v3474, 1.442695
      %v3521 = vpow.pop %v3520
      %v3522 = vmul.f32 %v3475, 1.442695
      %v3523 = vpow.pop %v3522
      %v3524 = vadd.f32 %v3477, 1.0
      %v3525 = vadd.f32 %v3479, 1.0
      %v3526 = vadd.f32 %v3481, 1.0
      %v3527 = vadd.f32 %v3483, 1.0
      %v3528 = vadd.f32 %v3485, 1.0
      %v3529 = vadd.f32 %v3487, 1.0
      %v3530 = vadd.f32 %v3489, 1.0
      %v3531 = vadd.f32 %v3491, 1.0
      %v3532 = vadd.f32 %v3493, 1.0
      %v3533 = vadd.f32 %v3495, 1.0
      %v3534 = vadd.f32 %v3497, 1.0
      %v3535 = vadd.f32 %v3499, 1.0
      %v3536 = vadd.f32 %v3501, 1.0
      %v3537 = vadd.f32 %v3503, 1.0
      %v3538 = vadd.f32 %v3505, 1.0
      %v3539 = vadd.f32 %v3507, 1.0
      %v3540 = vadd.f32 %v3509, 1.0
      %v3541 = vadd.f32 %v3511, 1.0
      %v3542 = vadd.f32 %v3513, 1.0
      %v3543 = vadd.f32 %v3515, 1.0
      %v3544 = vadd.f32 %v3517, 1.0
      %v3545 = vadd.f32 %v3519, 1.0
      %v3546 = vadd.f32 %v3521, 1.0
      %v3547 = vadd.f32 %v3523, 1.0
      %v3548 = vrcp.pop %v3524
      %v3549 = vmul.f32 1.0, %v3548
      %v3550 = vrcp.pop %v3525
      %v3551 = vmul.f32 1.0, %v3550
      %v3552 = vrcp.pop %v3526
      %v3553 = vmul.f32 1.0, %v3552
      %v3554 = vrcp.pop %v3527
      %v3555 = vmul.f32 1.0, %v3554
      %v3556 = vrcp.pop %v3528
      %v3557 = vmul.f32 1.0, %v3556
      %v3558 = vrcp.pop %v3529
      %v3559 = vmul.f32 1.0, %v3558
      %v3560 = vrcp.pop %v3530
      %v3561 = vmul.f32 1.0, %v3560
      %v3562 = vrcp.pop %v3531
      %v3563 = vmul.f32 1.0, %v3562
      %v3564 = vrcp.pop %v3532
      %v3565 = vmul.f32 1.0, %v3564
      %v3566 = vrcp.pop %v3533
      %v3567 = vmul.f32 1.0, %v3566
      %v3568 = vrcp.pop %v3534
      %v3569 = vmul.f32 1.0, %v3568
      %v3570 = vrcp.pop %v3535
      %v3571 = vmul.f32 1.0, %v3570
      %v3572 = vrcp.pop %v3536
      %v3573 = vmul.f32 1.0, %v3572
      %v3574 = vrcp.pop %v3537
      %v3575 = vmul.f32 1.0, %v3574
      %v3576 = vrcp.pop %v3538
      %v3577 = vmul.f32 1.0, %v3576
      %v3578 = vrcp.pop %v3539
      %v3579 = vmul.f32 1.0, %v3578
      %v3580 = vrcp.pop %v3540
      %v3581 = vmul.f32 1.0, %v3580
      %v3582 = vrcp.pop %v3541
      %v3583 = vmul.f32 1.0, %v3582
      %v3584 = vrcp.pop %v3542
      %v3585 = vmul.f32 1.0, %v3584
      %v3586 = vrcp.pop %v3543
      %v3587 = vmul.f32 1.0, %v3586
      %v3588 = vrcp.pop %v3544
      %v3589 = vmul.f32 1.0, %v3588
      %v3590 = vrcp.pop %v3545
      %v3591 = vmul.f32 1.0, %v3590
      %v3592 = vrcp.pop %v3546
      %v3593 = vmul.f32 1.0, %v3592
      %v3594 = vrcp.pop %v3547
      %v3595 = vmul.f32 1.0, %v3594
      %v3596 = vtanh.pop %v3444
      %v3597 = vtanh.pop %v3445
      %v3598 = vtanh.pop %v3446
      %v3599 = vtanh.pop %v3447
      %v3600 = vtanh.pop %v3448
      %v3601 = vtanh.pop %v3449
      %v3602 = vtanh.pop %v3450
      %v3603 = vtanh.pop %v3451
      %v3604 = vld [vmem:[#allocation3] sm:$0xff]
      %v3605 = vld [vmem:[#allocation3 + $0x8] sm:$0xff]
      %v3606 = vld [vmem:[#allocation3 + $0x10] sm:$0xff]
      %v3607 = vld [vmem:[#allocation3 + $0x18] sm:$0xff]
      %v3608 = vld [vmem:[#allocation3 + $0x20] sm:$0xff]
      %v3609 = vld [vmem:[#allocation3 + $0x28] sm:$0xff]
      %v3610 = vld [vmem:[#allocation3 + $0x30] sm:$0xff]
      %v3611 = vld [vmem:[#allocation3 + $0x38] sm:$0xff]
      %v3612 = vmul.f32 %v3604, %v3565
      %v3613 = vmul.f32 %v3605, %v3567
      %v3614 = vmul.f32 %v3606, %v3569
      %v3615 = vmul.f32 %v3607, %v3571
      %v3616 = vmul.f32 %v3608, %v3573
      %v3617 = vmul.f32 %v3609, %v3575
      %v3618 = vmul.f32 %v3610, %v3577
      %v3619 = vmul.f32 %v3611, %v3579
      %v3620 = vmul.f32 %v3549, %v3596
      %v3621 = vmul.f32 %v3551, %v3597
      %v3622 = vmul.f32 %v3553, %v3598
      %v3623 = vmul.f32 %v3555, %v3599
      %v3624 = vmul.f32 %v3557, %v3600
      %v3625 = vmul.f32 %v3559, %v3601
      %v3626 = vmul.f32 %v3561, %v3602
      %v3627 = vmul.f32 %v3563, %v3603
      %v3628 = vadd.f32 %v3612, %v3620
      %v3629 = vadd.f32 %v3613, %v3621
      %v3630 = vadd.f32 %v3614, %v3622
      %v3631 = vadd.f32 %v3615, %v3623
      %v3632 = vadd.f32 %v3616, %v3624
      %v3633 = vadd.f32 %v3617, %v3625
      %v3634 = vadd.f32 %v3618, %v3626
      %v3635 = vadd.f32 %v3619, %v3627
      %v3636 = vtanh.pop %v3628
      %v3637 = vtanh.pop %v3629
      %v3638 = vtanh.pop %v3630
      %v3639 = vtanh.pop %v3631
      %v3640 = vtanh.pop %v3632
      %v3641 = vtanh.pop %v3633
      %v3642 = vtanh.pop %v3634
      %v3643 = vtanh.pop %v3635
      %v3644 = vmul.f32 %v3581, %v3636
      %v3645 = vmul.f32 %v3583, %v3637
      %v3646 = vmul.f32 %v3585, %v3638
      %v3647 = vmul.f32 %v3587, %v3639
      %v3648 = vmul.f32 %v3589, %v3640
      %v3649 = vmul.f32 %v3591, %v3641
      %v3650 = vmul.f32 %v3593, %v3642
      %v3651 = vmul.f32 %v3595, %v3643
      %3652 = vst [vmem:[#allocation3] sm:$0xff] %v3628
      %3653 = vst [vmem:[#allocation3 + $0x8] sm:$0xff] %v3629
      %3654 = vst [vmem:[#allocation3 + $0x10] sm:$0xff] %v3630
      %3655 = vst [vmem:[#allocation3 + $0x18] sm:$0xff] %v3631
      %3656 = vst [vmem:[#allocation3 + $0x20] sm:$0xff] %v3632
      %3657 = vst [vmem:[#allocation3 + $0x28] sm:$0xff] %v3633
      %3658 = vst [vmem:[#allocation3 + $0x30] sm:$0xff] %v3634
      %3659 = vst [vmem:[#allocation3 + $0x38] sm:$0xff] %v3635
      %3660 = vst [vmem:[%s260] sm:$0xff] %v3644
      %3661 = vst [vmem:[%s260 + $0x8] sm:$0xff] %v3645
      %3662 = vst [vmem:[%s260 + $0x10] sm:$0xff] %v3646
      %3663 = vst [vmem:[%s260 + $0x18] sm:$0xff] %v3647
      %3664 = vst [vmem:[%s260 + $0x20] sm:$0xff] %v3648
      %3665 = vst [vmem:[%s260 + $0x28] sm:$0xff] %v3649
      %3666 = vst [vmem:[%s260 + $0x30] sm:$0xff] %v3650
      %3667 = vst [vmem:[%s260 + $0x38] sm:$0xff] %v3651
      %v3668 = vpack.c.bf16 %v3646, %v3644
      %v3669 = vpack.c.bf16 %v3647, %v3645
      %v3670 = vpack.c.bf16 %v3650, %v3648
      %v3671 = vpack.c.bf16 %v3651, %v3649
      %3672 = vst [vmem:[#allocation2 + $0x8] sm:$0xff] %v3668
      %3673 = vst [vmem:[#allocation2 + $0x10] sm:$0xff] %v3669
      %3674 = vst [vmem:[#allocation2 + $0x28] sm:$0xff] %v3670
      %3675 = vst [vmem:[#allocation2 + $0x30] sm:$0xff] %v3671
      %p3676 = scmp.lt.s32.totalorder %s20, 1
      %s3677 = scalar_select %p3676, %s20, 1
      %p3678 = scmp.lt.s32.totalorder %s21, 3
      %s3679 = scalar_select %p3678, %s21, 3
      %s3680 = smul.addr %s3679, 8
      %s3681 = smul.addr %s3677, 32
      %s3682 = sadd.s32 %s3680, %s3681
      %s3683 = smul.addr %s3682, 8
      %s3684 = scalar_lea.vmem %s5, %s3683
      // Predicated region
      $region45: #{_clstm_forward_impl.1} parent=39 // pred_check
        %p3685 = pneg %p160
      $region46: #{_clstm_forward_impl.1} parent=39 // pred_check_branch
        %3687 = sbr.rel (%p3685) target = $region48
      $region47: #{_clstm_forward_impl.1} parent=39 // pred_region
        _
      $region48: #{_clstm_forward_impl.1} parent=39 // pred_fallthru
        _
    $region40: #{_clstm_forward_impl.1} parent=5 // pred_fallthru
      _
    %p3688 = scmp.le.s32.totalorder 2, %s11
    // Predicated region
    $region49: #{_clstm_forward_impl.1} parent=5 // pred_check
      %p3689 = pneg %p3688
    $region50: #{_clstm_forward_impl.1} parent=5 // pred_check_branch
      %3691 = sbr.rel (%p3689) target = $region52
    $region51: #{_clstm_forward_impl.1} parent=5 // pred_region
      %s3692 = ssub.s32 %s11, 2
      // Predicated region
      $region53: #{_clstm_forward_impl.1} parent=51 // pred_check
        %p3693 = pneg %p166
      $region54: #{_clstm_forward_impl.1} parent=51 // pred_check_branch
        %3695 = sbr.rel (%p3693) target = $region56
      $region55: #{_clstm_forward_impl.1} parent=51 // pred_region
        %p3696 = scmp.lt.s32.totalorder %s22, 1
        %s3697 = scalar_select %p3696, %s22, 1
        %p3698 = scmp.lt.s32.totalorder %s23, 3
        %s3699 = scalar_select %p3698, %s23, 3
        %s3700 = smul.addr %s3699, 8
        %s3701 = smul.addr %s3697, 32
        %s3702 = sadd.s32 %s3700, %s3701
        %s3703 = smul.addr %s3702, 8
        %s3704 = scalar_lea.vmem %s5, %s3703
      $region56: #{_clstm_forward_impl.1} parent=51 // pred_fallthru
        _
    $region52: #{_clstm_forward_impl.1} parent=5 // pred_fallthru
      _
  $region6: #{_clstm_forward_impl.1} parent=0 // loop_footer
    %s15 = sadd.s32 1, %s11
  $region7: #{_clstm_forward_impl.1} parent=0 // loop_footer_branch
    %10 = sbr.rel target = $region3
  $region8: #{_clstm_forward_impl.1} parent=0 // loop_exit
    _

</llo_original>
